<compile_context>
chip_gen: v7x
topology: tpu7x:2x2x1
jax: 0.10.0
libtpu: 0.0.40
codegen_flags: <defaults>
</compile_context>

<pallas_src>
import math

import jax
import jax.numpy as jnp
from jax.experimental import pallas as pl
from jax.experimental.pallas import tpu as pltpu

LN_EPS = 1e-5  # nn.LayerNorm default


# --------------------------- fused forward kernel ---------------------------

def _make_fused_kernel(B, T, C, H, MLP, P, L):
    Dh = C // H
    scale = 1.0 / math.sqrt(Dh)
    inv_sqrt2 = 1.0 / math.sqrt(2.0)

    def _ln(x, g, b):
        mu = jnp.mean(x, axis=-1, keepdims=True)
        xc = x - mu
        var = jnp.mean(xc * xc, axis=-1, keepdims=True)
        return xc * jax.lax.rsqrt(var + LN_EPS) * g + b

    def kernel(x_ref, wemb_ref, embb_ref, wqkvp_ref, vec_ref,
               w1_ref, w2_ref, wh_ref, bh_ref, o_ref, flat_ref):
        # ---- embedding + positional bias on the full (B*T, C) slab ----
        x = (jnp.dot(x_ref[...], wemb_ref[...],
                     preferred_element_type=jnp.float32) + embb_ref[...])

        # ---- transformer blocks, statically unrolled over layers ----
        for l in range(L):
            wqkvp = wqkvp_ref[l]                 # (C, 4C) = [Wq | Wk | Wv | Wproj]
            vec = vec_ref[l]                     # (3, 4C) packed small vectors
            bqkv = vec[0:1, 0:3 * C]
            bp = vec[0:1, 3 * C:4 * C]
            ln1_g = vec[1:2, 0:C]
            ln1_b = vec[1:2, C:2 * C]
            ln2_g = vec[1:2, 2 * C:3 * C]
            ln2_b = vec[1:2, 3 * C:4 * C]
            b1 = vec[2:3, 0:MLP]
            b2 = vec[2:3, MLP:MLP + C]

            # -- attention sub-block (pre-LN), QKV fused into one matmul --
            xn = _ln(x, ln1_g, ln1_b)
            qkv = jnp.dot(xn, wqkvp[:, 0:3 * C],
                          preferred_element_type=jnp.float32) + bqkv     # (BT, 3C)

            y_parts = []
            for b in range(B):                   # static unroll, B small
                r0 = b * T
                heads = []
                for h in range(H):               # static unroll, H small
                    q = qkv[r0:r0 + T, h * Dh:(h + 1) * Dh]
                    k = qkv[r0:r0 + T, C + h * Dh:C + (h + 1) * Dh]
                    v = qkv[r0:r0 + T, 2 * C + h * Dh:2 * C + (h + 1) * Dh]
                    att = jnp.einsum('td,sd->ts', q, k,
                                     preferred_element_type=jnp.float32) * scale
                    att = att - jnp.max(att, axis=-1, keepdims=True)
                    e = jnp.exp(att)
                    p = e * pl.reciprocal(jnp.sum(e, axis=-1, keepdims=True),
                                          approx=True)
                    heads.append(jnp.dot(p, v,
                                         preferred_element_type=jnp.float32))
                y_parts.append(jnp.concatenate(heads, axis=-1))           # (T, C)
            y = jnp.concatenate(y_parts, axis=0)                          # (BT, C)
            x = x + jnp.dot(y, wqkvp[:, 3 * C:4 * C],
                            preferred_element_type=jnp.float32) + bp

            # -- feed-forward sub-block (pre-LN, exact-erf GELU) --
            xn2 = _ln(x, ln2_g, ln2_b)
            h1 = jnp.dot(xn2, w1_ref[l],
                         preferred_element_type=jnp.float32) + b1
            h1 = 0.5 * h1 * (1.0 + jax.lax.erf(h1 * inv_sqrt2))
            x = x + jnp.dot(h1, w2_ref[l],
                            preferred_element_type=jnp.float32) + b2

        # ---- linear head: flatten (B,T,C)->(B,T*C) via scratch, ONE K=T*C dot ----
        for b in range(B):
            for t in range(T):
                flat_ref[b:b + 1, t * C:(t + 1) * C] = x[b * T + t:b * T + t + 1, :]
        o_ref[...] = (jnp.dot(flat_ref[...], wh_ref[...],
                              preferred_element_type=jnp.float32) + bh_ref[...])

    return kernel


def forward(x, kp, n_head):
    """x: (B, T, 5); kp: output of prepare_params(); returns (B, period)."""
    B, T, F = x.shape
    L, C, _ = kp['wqkvp'].shape
    MLP = kp['w1'].shape[2]
    P = kp['b_head'].shape[1]
    assert kp['emb_bias_full'].shape[0] == B * T, "prepare_params batch mismatch"
    kernel = _make_fused_kernel(B, T, C, n_head, MLP, P, L)

    # No grid: every operand is whole-array VMEM resident (total < 1 MiB), one
    # DMA per operand per call, one grid step total.  For much larger batches
    # a leading batch grid axis marked "parallel" would re-enable megacore.
    out = pl.pallas_call(
        kernel,
        out_shape=jax.ShapeDtypeStruct((B, P), jnp.float32),
        scratch_shapes=[pltpu.VMEM((B, T * C), jnp.float32)],  # head flatten buffer
    )(x.reshape(B * T, F), kp['w_emb_t'], kp['emb_bias_full'],
      kp['wqkvp'], kp['vecs'], kp['w1'], kp['w2'],
      kp['w_head_t'], kp['b_head'])
    return out


# ------------------------- params (synthetic init) -------------------------

def init_params(key, n_embed, n_head, n_layers, n_lags, mlp_dim, period):
    C, T = n_embed, n_lags
    keys = jax.random.split(key, 4 + n_layers)

    def lin(k, fan_in, fan_out):
        kw, kb = jax.random.split(k)
        w = jax.random.normal(kw, (fan_out, fan_in), jnp.float32) * 0.02
        b = jax.random.normal(kb, (fan_out,), jnp.float32) * 0.02
        return w, b

    w_emb, b_emb = lin(keys[0], 5, C)
    pos = jax.random.normal(keys[1], (1, T, C), jnp.float32)
    w_head, b_head = lin(keys[2], C * T, period)

    layers = []
    for li in range(n_layers):
        lk = jax.random.split(keys[4 + li], 8)
        wq, bq = lin(lk[0], C, C)
        wk, bk = lin(lk[1], C, C)
        wv, bv = lin(lk[2], C, C)
        wp, bp = lin(lk[3], C, C)
        w1, b1 = lin(lk[4], C, mlp_dim)
        w2, b2 = lin(lk[5], mlp_dim, C)
        ln1_g = 1.0 + 0.1 * jax.random.normal(lk[6], (C,), jnp.float32)
        ln1_b = 0.1 * jax.random.normal(jax.random.fold_in(lk[6], 1), (C,), jnp.float32)
        ln2_g = 1.0 + 0.1 * jax.random.normal(lk[7], (C,), jnp.float32)
        ln2_b = 0.1 * jax.random.normal(jax.random.fold_in(lk[7], 1), (C,), jnp.float32)
        layers.append(dict(wq=wq, bq=bq, wk=wk, bk=bk, wv=wv, bv=bv,
                           wp=wp, bp=bp, w1=w1, b1=b1, w2=w2, b2=b2,
                           ln1_g=ln1_g, ln1_b=ln1_b, ln2_g=ln2_g, ln2_b=ln2_b))
    return dict(w_emb=w_emb, b_emb=b_emb, pos=pos,
                w_head=w_head, b_head=b_head, layers=layers)


def prepare_params(params, n_head, batch_size):
    """One-time re-layout of torch-style weights into kernel layout.

    Done ONCE outside forward(): all matmul weights row-major (in, out);
    Q/K/V/proj fused into a lane-dense (L, C, 4C) slab; all small per-layer
    vectors packed into a (L, 3, 4C) slab; head weight flattened to (T*C, P);
    positional+embedding bias pre-tiled over the batch.
    """
    C = params['w_emb'].shape[0]
    layers = params['layers']
    MLP = layers[0]['w1'].shape[0]
    VEC_W = 4 * C
    assert MLP + C <= VEC_W, "small-vector packing assumes mlp_dim + C <= 4*C"

    emb_bias = params['b_emb'][None, :] + params['pos'][0]          # (T, C)

    def pad_row(v):
        return jnp.pad(v, (0, VEC_W - v.shape[0]))

    wqkvp = jnp.stack([jnp.concatenate(
        [lp['wq'].T, lp['wk'].T, lp['wv'].T, lp['wp'].T], axis=1)
        for lp in layers])                                           # (L, C, 4C)
    vecs = jnp.stack([jnp.stack([
        pad_row(jnp.concatenate([lp['bq'], lp['bk'], lp['bv'], lp['bp']])),
        pad_row(jnp.concatenate([lp['ln1_g'], lp['ln1_b'], lp['ln2_g'], lp['ln2_b']])),
        pad_row(jnp.concatenate([lp['b1'], lp['b2']])),
    ]) for lp in layers])                                            # (L, 3, 4C)

    return dict(
        w_emb_t=params['w_emb'].T,                                   # (5, C)
        emb_bias_full=jnp.tile(emb_bias, (batch_size, 1)),           # (B*T, C)
        wqkvp=wqkvp,
        vecs=vecs,
        w1=jnp.stack([lp['w1'].T for lp in layers]),                 # (L, C, MLP)
        w2=jnp.stack([lp['w2'].T for lp in layers]),                 # (L, MLP, C)
        w_head_t=params['w_head'].T,                                 # (T*C, P)
        b_head=params['b_head'][None, :],                            # (1, P)
    )


# -------------------------- pure-JAX reference --------------------------

def _ln_ref(x, g, b):
    mu = jnp.mean(x, axis=-1, keepdims=True)
    var = jnp.mean((x - mu) ** 2, axis=-1, keepdims=True)
    return (x - mu) / jnp.sqrt(var + LN_EPS) * g + b


def ref_forward(x, params, n_head):
    C = params['w_emb'].shape[0]
    h = x @ params['w_emb'].T + params['b_emb'] + params['pos']
    B, T, _ = h.shape
    H, Dh = n_head, C // n_head
    for lp in params['layers']:
        xn = _ln_ref(h, lp['ln1_g'], lp['ln1_b'])
        q = (xn @ lp['wq'].T + lp['bq']).reshape(B, T, H, Dh).transpose(0, 2, 1, 3)
        k = (xn @ lp['wk'].T + lp['bk']).reshape(B, T, H, Dh).transpose(0, 2, 1, 3)
        v = (xn @ lp['wv'].T + lp['bv']).reshape(B, T, H, Dh).transpose(0, 2, 1, 3)
        att = jnp.einsum('bhtd,bhsd->bhts', q, k) * (1.0 / math.sqrt(Dh))
        att = jax.nn.softmax(att, axis=-1)
        y = jnp.einsum('bhts,bhsd->bhtd', att, v).transpose(0, 2, 1, 3).reshape(B, T, C)
        h = h + (y @ lp['wp'].T + lp['bp'])
        xn2 = _ln_ref(h, lp['ln2_g'], lp['ln2_b'])
        f = xn2 @ lp['w1'].T + lp['b1']
        f = 0.5 * f * (1.0 + jax.scipy.special.erf(f / math.sqrt(2.0)))
        h = h + (f @ lp['w2'].T + lp['b2'])
    return h.reshape(B, -1) @ params['w_head'].T + params['b_head']


if __name__ == "__main__":
    # config: n_embed=32, n_head=4, n_layers=2, n_lags=8, mlp_dim=64, period=16
    B, T, C, H, L, MLP, P = 2, 8, 32, 4, 2, 64, 16
    key = jax.random.PRNGKey(0)
    kx, kparam = jax.random.split(key)
    x = jax.random.normal(kx, (B, T, 5), jnp.float32)
    params = init_params(kparam, C, H, L, T, MLP, P)

    kernel_params = prepare_params(params, H, B)   # layout prep hoisted out of forward

    out = jax.block_until_ready(forward(x, kernel_params, H))
    ref = ref_forward(x, params, H)

    assert out.shape == (B, P)
    # tolerance 1e-3: approx (EUP) reciprocal in softmax + reassociated matmuls
    if not bool(jnp.allclose(out, ref, atol=1e-3, rtol=1e-3)):
        raise AssertionError("Pallas output does not match JAX reference")
    print("KERNEL_OK")
</pallas_src>

<mosaic_0001>
module attributes {stable_mosaic.version = 11 : i64} {
  func.func @kernel(%arg0: memref<16x5xf32, #tpu.memory_space<vmem>>, %arg1: memref<5x32xf32, #tpu.memory_space<vmem>>, %arg2: memref<16x32xf32, #tpu.memory_space<vmem>>, %arg3: memref<2x32x128xf32, #tpu.memory_space<vmem>>, %arg4: memref<2x3x128xf32, #tpu.memory_space<vmem>>, %arg5: memref<2x32x64xf32, #tpu.memory_space<vmem>>, %arg6: memref<2x64x32xf32, #tpu.memory_space<vmem>>, %arg7: memref<256x16xf32, #tpu.memory_space<vmem>>, %arg8: memref<1x16xf32, #tpu.memory_space<vmem>>, %arg9: memref<2x16xf32, #tpu.memory_space<vmem>>, %arg10: memref<2x256xf32, #tpu.memory_space<vmem>>) attributes {dimension_semantics = [], scalar_prefetch = 0 : i64, scratch_operands = 1 : i64, tpu.core_type = #tpu.core_type<tc>} {
    %c0 = arith.constant 0 : index
    %c0_0 = arith.constant 0 : index
    %0 = vector.load %arg0[%c0, %c0_0] : memref<16x5xf32, #tpu.memory_space<vmem>>, vector<16x5xf32>
    %c0_1 = arith.constant 0 : index
    %c0_2 = arith.constant 0 : index
    %1 = vector.load %arg1[%c0_1, %c0_2] : memref<5x32xf32, #tpu.memory_space<vmem>>, vector<5x32xf32>
    %cst = arith.constant dense<0.000000e+00> : vector<16x32xf32>
    %2 = tpu.matmul %0, %1, %cst {dimension_numbers = #tpu.dot_dimension_numbers<[1], [0], [0], [1], [0, 0, 1, 1], [], []>} : vector<16x5xf32>, vector<5x32xf32>, vector<16x32xf32> -> vector<16x32xf32>
    %c0_3 = arith.constant 0 : index
    %c0_4 = arith.constant 0 : index
    %3 = vector.load %arg2[%c0_3, %c0_4] : memref<16x32xf32, #tpu.memory_space<vmem>>, vector<16x32xf32>
    %4 = arith.addf %2, %3 : vector<16x32xf32>
    %c0_5 = arith.constant 0 : index
    %c0_6 = arith.constant 0 : index
    %c0_7 = arith.constant 0 : index
    %5 = vector.load %arg3[%c0_5, %c0_6, %c0_7] : memref<2x32x128xf32, #tpu.memory_space<vmem>>, vector<1x32x128xf32>
    %6 = vector.shape_cast %5 : vector<1x32x128xf32> to vector<32x128xf32>
    %c0_8 = arith.constant 0 : index
    %c0_9 = arith.constant 0 : index
    %c0_10 = arith.constant 0 : index
    %7 = vector.load %arg4[%c0_8, %c0_9, %c0_10] : memref<2x3x128xf32, #tpu.memory_space<vmem>>, vector<1x3x128xf32>
    %8 = vector.shape_cast %7 : vector<1x3x128xf32> to vector<3x128xf32>
    %9 = vector.extract_strided_slice %8 {offsets = [0, 0], sizes = [1, 96], strides = [1, 1]} : vector<3x128xf32> to vector<1x96xf32>
    %10 = vector.extract_strided_slice %8 {offsets = [0, 96], sizes = [1, 32], strides = [1, 1]} : vector<3x128xf32> to vector<1x32xf32>
    %11 = vector.extract_strided_slice %8 {offsets = [1, 0], sizes = [1, 32], strides = [1, 1]} : vector<3x128xf32> to vector<1x32xf32>
    %12 = vector.extract_strided_slice %8 {offsets = [1, 32], sizes = [1, 32], strides = [1, 1]} : vector<3x128xf32> to vector<1x32xf32>
    %13 = vector.extract_strided_slice %8 {offsets = [1, 64], sizes = [1, 32], strides = [1, 1]} : vector<3x128xf32> to vector<1x32xf32>
    %14 = vector.extract_strided_slice %8 {offsets = [1, 96], sizes = [1, 32], strides = [1, 1]} : vector<3x128xf32> to vector<1x32xf32>
    %15 = vector.extract_strided_slice %8 {offsets = [2, 0], sizes = [1, 64], strides = [1, 1]} : vector<3x128xf32> to vector<1x64xf32>
    %16 = vector.extract_strided_slice %8 {offsets = [2, 64], sizes = [1, 32], strides = [1, 1]} : vector<3x128xf32> to vector<1x32xf32>
    %cst_11 = arith.constant dense<0.000000e+00> : vector<16xf32>
    %17 = vector.multi_reduction <add>, %4, %cst_11 [1] : vector<16x32xf32> to vector<16xf32>
    %18 = vector.shape_cast %17 : vector<16xf32> to vector<16x1xf32>
    %cst_12 = arith.constant 3.200000e+01 : f32
    %19 = vector.broadcast %cst_12 : f32 to vector<16x1xf32>
    %20 = arith.divf %18, %19 : vector<16x1xf32>
    %21 = vector.broadcast %20 : vector<16x1xf32> to vector<16x32xf32>
    %22 = arith.subf %4, %21 : vector<16x32xf32>
    %23 = arith.mulf %22, %22 : vector<16x32xf32>
    %cst_13 = arith.constant dense<0.000000e+00> : vector<16xf32>
    %24 = vector.multi_reduction <add>, %23, %cst_13 [1] : vector<16x32xf32> to vector<16xf32>
    %25 = vector.shape_cast %24 : vector<16xf32> to vector<16x1xf32>
    %cst_14 = arith.constant 3.200000e+01 : f32
    %26 = vector.broadcast %cst_14 : f32 to vector<16x1xf32>
    %27 = arith.divf %25, %26 : vector<16x1xf32>
    %cst_15 = arith.constant 9.99999974E-6 : f32
    %28 = vector.broadcast %cst_15 : f32 to vector<16x1xf32>
    %29 = arith.addf %27, %28 : vector<16x1xf32>
    %30 = math.rsqrt %29 : vector<16x1xf32>
    %31 = vector.broadcast %30 : vector<16x1xf32> to vector<16x32xf32>
    %32 = arith.mulf %22, %31 : vector<16x32xf32>
    %33 = vector.broadcast %11 : vector<1x32xf32> to vector<16x32xf32>
    %34 = arith.mulf %32, %33 : vector<16x32xf32>
    %35 = vector.broadcast %12 : vector<1x32xf32> to vector<16x32xf32>
    %36 = arith.addf %34, %35 : vector<16x32xf32>
    %37 = vector.extract_strided_slice %6 {offsets = [0, 0], sizes = [32, 96], strides = [1, 1]} : vector<32x128xf32> to vector<32x96xf32>
    %cst_16 = arith.constant dense<0.000000e+00> : vector<16x96xf32>
    %38 = tpu.matmul %36, %37, %cst_16 {dimension_numbers = #tpu.dot_dimension_numbers<[1], [0], [0], [1], [0, 0, 1, 1], [], []>} : vector<16x32xf32>, vector<32x96xf32>, vector<16x96xf32> -> vector<16x96xf32>
    %39 = vector.broadcast %9 : vector<1x96xf32> to vector<16x96xf32>
    %40 = arith.addf %38, %39 : vector<16x96xf32>
    %41 = vector.extract_strided_slice %40 {offsets = [0, 0], sizes = [8, 8], strides = [1, 1]} : vector<16x96xf32> to vector<8x8xf32>
    %42 = vector.extract_strided_slice %40 {offsets = [0, 32], sizes = [8, 8], strides = [1, 1]} : vector<16x96xf32> to vector<8x8xf32>
    %43 = vector.extract_strided_slice %40 {offsets = [0, 64], sizes = [8, 8], strides = [1, 1]} : vector<16x96xf32> to vector<8x8xf32>
    "tpu.trace_start"() <{level = 10 : i32, message = "td,sd->ts"}> : () -> ()
    %cst_17 = arith.constant dense<0.000000e+00> : vector<8x8xf32>
    %44 = tpu.matmul %41, %42, %cst_17 {dimension_numbers = #tpu.dot_dimension_numbers<[1], [1], [0], [0], [0, 0, 1, 0], [], []>} : vector<8x8xf32>, vector<8x8xf32>, vector<8x8xf32> -> vector<8x8xf32>
    "tpu.trace_stop"() : () -> ()
    %cst_18 = arith.constant 0.353553385 : f32
    %45 = vector.broadcast %cst_18 : f32 to vector<8x8xf32>
    %46 = arith.mulf %44, %45 : vector<8x8xf32>
    %cst_19 = arith.constant dense<0xFF800000> : vector<8xf32>
    %47 = vector.multi_reduction <maximumf>, %46, %cst_19 [1] : vector<8x8xf32> to vector<8xf32>
    %48 = vector.shape_cast %47 : vector<8xf32> to vector<8x1xf32>
    %49 = vector.broadcast %48 : vector<8x1xf32> to vector<8x8xf32>
    %50 = arith.subf %46, %49 : vector<8x8xf32>
    %51 = math.exp %50 : vector<8x8xf32>
    %cst_20 = arith.constant dense<0.000000e+00> : vector<8xf32>
    %52 = vector.multi_reduction <add>, %51, %cst_20 [1] : vector<8x8xf32> to vector<8xf32>
    %53 = vector.shape_cast %52 : vector<8xf32> to vector<8x1xf32>
    %54 = tpu.reciprocal %53 {approx = true} : vector<8x1xf32> -> vector<8x1xf32>
    %55 = vector.broadcast %54 : vector<8x1xf32> to vector<8x8xf32>
    %56 = arith.mulf %51, %55 : vector<8x8xf32>
    %cst_21 = arith.constant dense<0.000000e+00> : vector<8x8xf32>
    %57 = tpu.matmul %56, %43, %cst_21 {dimension_numbers = #tpu.dot_dimension_numbers<[1], [0], [0], [1], [0, 0, 1, 1], [], []>} : vector<8x8xf32>, vector<8x8xf32>, vector<8x8xf32> -> vector<8x8xf32>
    %58 = vector.extract_strided_slice %40 {offsets = [0, 8], sizes = [8, 8], strides = [1, 1]} : vector<16x96xf32> to vector<8x8xf32>
    %59 = vector.extract_strided_slice %40 {offsets = [0, 40], sizes = [8, 8], strides = [1, 1]} : vector<16x96xf32> to vector<8x8xf32>
    %60 = vector.extract_strided_slice %40 {offsets = [0, 72], sizes = [8, 8], strides = [1, 1]} : vector<16x96xf32> to vector<8x8xf32>
    "tpu.trace_start"() <{level = 10 : i32, message = "td,sd->ts"}> : () -> ()
    %cst_22 = arith.constant dense<0.000000e+00> : vector<8x8xf32>
    %61 = tpu.matmul %58, %59, %cst_22 {dimension_numbers = #tpu.dot_dimension_numbers<[1], [1], [0], [0], [0, 0, 1, 0], [], []>} : vector<8x8xf32>, vector<8x8xf32>, vector<8x8xf32> -> vector<8x8xf32>
    "tpu.trace_stop"() : () -> ()
    %cst_23 = arith.constant 0.353553385 : f32
    %62 = vector.broadcast %cst_23 : f32 to vector<8x8xf32>
    %63 = arith.mulf %61, %62 : vector<8x8xf32>
    %cst_24 = arith.constant dense<0xFF800000> : vector<8xf32>
    %64 = vector.multi_reduction <maximumf>, %63, %cst_24 [1] : vector<8x8xf32> to vector<8xf32>
    %65 = vector.shape_cast %64 : vector<8xf32> to vector<8x1xf32>
    %66 = vector.broadcast %65 : vector<8x1xf32> to vector<8x8xf32>
    %67 = arith.subf %63, %66 : vector<8x8xf32>
    %68 = math.exp %67 : vector<8x8xf32>
    %cst_25 = arith.constant dense<0.000000e+00> : vector<8xf32>
    %69 = vector.multi_reduction <add>, %68, %cst_25 [1] : vector<8x8xf32> to vector<8xf32>
    %70 = vector.shape_cast %69 : vector<8xf32> to vector<8x1xf32>
    %71 = tpu.reciprocal %70 {approx = true} : vector<8x1xf32> -> vector<8x1xf32>
    %72 = vector.broadcast %71 : vector<8x1xf32> to vector<8x8xf32>
    %73 = arith.mulf %68, %72 : vector<8x8xf32>
    %cst_26 = arith.constant dense<0.000000e+00> : vector<8x8xf32>
    %74 = tpu.matmul %73, %60, %cst_26 {dimension_numbers = #tpu.dot_dimension_numbers<[1], [0], [0], [1], [0, 0, 1, 1], [], []>} : vector<8x8xf32>, vector<8x8xf32>, vector<8x8xf32> -> vector<8x8xf32>
    %75 = vector.extract_strided_slice %40 {offsets = [0, 16], sizes = [8, 8], strides = [1, 1]} : vector<16x96xf32> to vector<8x8xf32>
    %76 = vector.extract_strided_slice %40 {offsets = [0, 48], sizes = [8, 8], strides = [1, 1]} : vector<16x96xf32> to vector<8x8xf32>
    %77 = vector.extract_strided_slice %40 {offsets = [0, 80], sizes = [8, 8], strides = [1, 1]} : vector<16x96xf32> to vector<8x8xf32>
    "tpu.trace_start"() <{level = 10 : i32, message = "td,sd->ts"}> : () -> ()
    %cst_27 = arith.constant dense<0.000000e+00> : vector<8x8xf32>
    %78 = tpu.matmul %75, %76, %cst_27 {dimension_numbers = #tpu.dot_dimension_numbers<[1], [1], [0], [0], [0, 0, 1, 0], [], []>} : vector<8x8xf32>, vector<8x8xf32>, vector<8x8xf32> -> vector<8x8xf32>
    "tpu.trace_stop"() : () -> ()
    %cst_28 = arith.constant 0.353553385 : f32
    %79 = vector.broadcast %cst_28 : f32 to vector<8x8xf32>
    %80 = arith.mulf %78, %79 : vector<8x8xf32>
    %cst_29 = arith.constant dense<0xFF800000> : vector<8xf32>
    %81 = vector.multi_reduction <maximumf>, %80, %cst_29 [1] : vector<8x8xf32> to vector<8xf32>
    %82 = vector.shape_cast %81 : vector<8xf32> to vector<8x1xf32>
    %83 = vector.broadcast %82 : vector<8x1xf32> to vector<8x8xf32>
    %84 = arith.subf %80, %83 : vector<8x8xf32>
    %85 = math.exp %84 : vector<8x8xf32>
    %cst_30 = arith.constant dense<0.000000e+00> : vector<8xf32>
    %86 = vector.multi_reduction <add>, %85, %cst_30 [1] : vector<8x8xf32> to vector<8xf32>
    %87 = vector.shape_cast %86 : vector<8xf32> to vector<8x1xf32>
    %88 = tpu.reciprocal %87 {approx = true} : vector<8x1xf32> -> vector<8x1xf32>
    %89 = vector.broadcast %88 : vector<8x1xf32> to vector<8x8xf32>
    %90 = arith.mulf %85, %89 : vector<8x8xf32>
    %cst_31 = arith.constant dense<0.000000e+00> : vector<8x8xf32>
    %91 = tpu.matmul %90, %77, %cst_31 {dimension_numbers = #tpu.dot_dimension_numbers<[1], [0], [0], [1], [0, 0, 1, 1], [], []>} : vector<8x8xf32>, vector<8x8xf32>, vector<8x8xf32> -> vector<8x8xf32>
    %92 = vector.extract_strided_slice %40 {offsets = [0, 24], sizes = [8, 8], strides = [1, 1]} : vector<16x96xf32> to vector<8x8xf32>
    %93 = vector.extract_strided_slice %40 {offsets = [0, 56], sizes = [8, 8], strides = [1, 1]} : vector<16x96xf32> to vector<8x8xf32>
    %94 = vector.extract_strided_slice %40 {offsets = [0, 88], sizes = [8, 8], strides = [1, 1]} : vector<16x96xf32> to vector<8x8xf32>
    "tpu.trace_start"() <{level = 10 : i32, message = "td,sd->ts"}> : () -> ()
    %cst_32 = arith.constant dense<0.000000e+00> : vector<8x8xf32>
    %95 = tpu.matmul %92, %93, %cst_32 {dimension_numbers = #tpu.dot_dimension_numbers<[1], [1], [0], [0], [0, 0, 1, 0], [], []>} : vector<8x8xf32>, vector<8x8xf32>, vector<8x8xf32> -> vector<8x8xf32>
    "tpu.trace_stop"() : () -> ()
    %cst_33 = arith.constant 0.353553385 : f32
    %96 = vector.broadcast %cst_33 : f32 to vector<8x8xf32>
    %97 = arith.mulf %95, %96 : vector<8x8xf32>
    %cst_34 = arith.constant dense<0xFF800000> : vector<8xf32>
    %98 = vector.multi_reduction <maximumf>, %97, %cst_34 [1] : vector<8x8xf32> to vector<8xf32>
    %99 = vector.shape_cast %98 : vector<8xf32> to vector<8x1xf32>
    %100 = vector.broadcast %99 : vector<8x1xf32> to vector<8x8xf32>
    %101 = arith.subf %97, %100 : vector<8x8xf32>
    %102 = math.exp %101 : vector<8x8xf32>
    %cst_35 = arith.constant dense<0.000000e+00> : vector<8xf32>
    %103 = vector.multi_reduction <add>, %102, %cst_35 [1] : vector<8x8xf32> to vector<8xf32>
    %104 = vector.shape_cast %103 : vector<8xf32> to vector<8x1xf32>
    %105 = tpu.reciprocal %104 {approx = true} : vector<8x1xf32> -> vector<8x1xf32>
    %106 = vector.broadcast %105 : vector<8x1xf32> to vector<8x8xf32>
    %107 = arith.mulf %102, %106 : vector<8x8xf32>
    %cst_36 = arith.constant dense<0.000000e+00> : vector<8x8xf32>
    %108 = tpu.matmul %107, %94, %cst_36 {dimension_numbers = #tpu.dot_dimension_numbers<[1], [0], [0], [1], [0, 0, 1, 1], [], []>} : vector<8x8xf32>, vector<8x8xf32>, vector<8x8xf32> -> vector<8x8xf32>
    %109 = tpu.concatenate %57, %74, %91, %108 in 1 : vector<8x8xf32>, vector<8x8xf32>, vector<8x8xf32>, vector<8x8xf32> -> vector<8x32xf32>
    %110 = vector.extract_strided_slice %40 {offsets = [8, 0], sizes = [8, 8], strides = [1, 1]} : vector<16x96xf32> to vector<8x8xf32>
    %111 = vector.extract_strided_slice %40 {offsets = [8, 32], sizes = [8, 8], strides = [1, 1]} : vector<16x96xf32> to vector<8x8xf32>
    %112 = vector.extract_strided_slice %40 {offsets = [8, 64], sizes = [8, 8], strides = [1, 1]} : vector<16x96xf32> to vector<8x8xf32>
    "tpu.trace_start"() <{level = 10 : i32, message = "td,sd->ts"}> : () -> ()
    %cst_37 = arith.constant dense<0.000000e+00> : vector<8x8xf32>
    %113 = tpu.matmul %110, %111, %cst_37 {dimension_numbers = #tpu.dot_dimension_numbers<[1], [1], [0], [0], [0, 0, 1, 0], [], []>} : vector<8x8xf32>, vector<8x8xf32>, vector<8x8xf32> -> vector<8x8xf32>
    "tpu.trace_stop"() : () -> ()
    %cst_38 = arith.constant 0.353553385 : f32
    %114 = vector.broadcast %cst_38 : f32 to vector<8x8xf32>
    %115 = arith.mulf %113, %114 : vector<8x8xf32>
    %cst_39 = arith.constant dense<0xFF800000> : vector<8xf32>
    %116 = vector.multi_reduction <maximumf>, %115, %cst_39 [1] : vector<8x8xf32> to vector<8xf32>
    %117 = vector.shape_cast %116 : vector<8xf32> to vector<8x1xf32>
    %118 = vector.broadcast %117 : vector<8x1xf32> to vector<8x8xf32>
    %119 = arith.subf %115, %118 : vector<8x8xf32>
    %120 = math.exp %119 : vector<8x8xf32>
    %cst_40 = arith.constant dense<0.000000e+00> : vector<8xf32>
    %121 = vector.multi_reduction <add>, %120, %cst_40 [1] : vector<8x8xf32> to vector<8xf32>
    %122 = vector.shape_cast %121 : vector<8xf32> to vector<8x1xf32>
    %123 = tpu.reciprocal %122 {approx = true} : vector<8x1xf32> -> vector<8x1xf32>
    %124 = vector.broadcast %123 : vector<8x1xf32> to vector<8x8xf32>
    %125 = arith.mulf %120, %124 : vector<8x8xf32>
    %cst_41 = arith.constant dense<0.000000e+00> : vector<8x8xf32>
    %126 = tpu.matmul %125, %112, %cst_41 {dimension_numbers = #tpu.dot_dimension_numbers<[1], [0], [0], [1], [0, 0, 1, 1], [], []>} : vector<8x8xf32>, vector<8x8xf32>, vector<8x8xf32> -> vector<8x8xf32>
    %127 = vector.extract_strided_slice %40 {offsets = [8, 8], sizes = [8, 8], strides = [1, 1]} : vector<16x96xf32> to vector<8x8xf32>
    %128 = vector.extract_strided_slice %40 {offsets = [8, 40], sizes = [8, 8], strides = [1, 1]} : vector<16x96xf32> to vector<8x8xf32>
    %129 = vector.extract_strided_slice %40 {offsets = [8, 72], sizes = [8, 8], strides = [1, 1]} : vector<16x96xf32> to vector<8x8xf32>
    "tpu.trace_start"() <{level = 10 : i32, message = "td,sd->ts"}> : () -> ()
    %cst_42 = arith.constant dense<0.000000e+00> : vector<8x8xf32>
    %130 = tpu.matmul %127, %128, %cst_42 {dimension_numbers = #tpu.dot_dimension_numbers<[1], [1], [0], [0], [0, 0, 1, 0], [], []>} : vector<8x8xf32>, vector<8x8xf32>, vector<8x8xf32> -> vector<8x8xf32>
    "tpu.trace_stop"() : () -> ()
    %cst_43 = arith.constant 0.353553385 : f32
    %131 = vector.broadcast %cst_43 : f32 to vector<8x8xf32>
    %132 = arith.mulf %130, %131 : vector<8x8xf32>
    %cst_44 = arith.constant dense<0xFF800000> : vector<8xf32>
    %133 = vector.multi_reduction <maximumf>, %132, %cst_44 [1] : vector<8x8xf32> to vector<8xf32>
    %134 = vector.shape_cast %133 : vector<8xf32> to vector<8x1xf32>
    %135 = vector.broadcast %134 : vector<8x1xf32> to vector<8x8xf32>
    %136 = arith.subf %132, %135 : vector<8x8xf32>
    %137 = math.exp %136 : vector<8x8xf32>
    %cst_45 = arith.constant dense<0.000000e+00> : vector<8xf32>
    %138 = vector.multi_reduction <add>, %137, %cst_45 [1] : vector<8x8xf32> to vector<8xf32>
    %139 = vector.shape_cast %138 : vector<8xf32> to vector<8x1xf32>
    %140 = tpu.reciprocal %139 {approx = true} : vector<8x1xf32> -> vector<8x1xf32>
    %141 = vector.broadcast %140 : vector<8x1xf32> to vector<8x8xf32>
    %142 = arith.mulf %137, %141 : vector<8x8xf32>
    %cst_46 = arith.constant dense<0.000000e+00> : vector<8x8xf32>
    %143 = tpu.matmul %142, %129, %cst_46 {dimension_numbers = #tpu.dot_dimension_numbers<[1], [0], [0], [1], [0, 0, 1, 1], [], []>} : vector<8x8xf32>, vector<8x8xf32>, vector<8x8xf32> -> vector<8x8xf32>
    %144 = vector.extract_strided_slice %40 {offsets = [8, 16], sizes = [8, 8], strides = [1, 1]} : vector<16x96xf32> to vector<8x8xf32>
    %145 = vector.extract_strided_slice %40 {offsets = [8, 48], sizes = [8, 8], strides = [1, 1]} : vector<16x96xf32> to vector<8x8xf32>
    %146 = vector.extract_strided_slice %40 {offsets = [8, 80], sizes = [8, 8], strides = [1, 1]} : vector<16x96xf32> to vector<8x8xf32>
    "tpu.trace_start"() <{level = 10 : i32, message = "td,sd->ts"}> : () -> ()
    %cst_47 = arith.constant dense<0.000000e+00> : vector<8x8xf32>
    %147 = tpu.matmul %144, %145, %cst_47 {dimension_numbers = #tpu.dot_dimension_numbers<[1], [1], [0], [0], [0, 0, 1, 0], [], []>} : vector<8x8xf32>, vector<8x8xf32>, vector<8x8xf32> -> vector<8x8xf32>
    "tpu.trace_stop"() : () -> ()
    %cst_48 = arith.constant 0.353553385 : f32
    %148 = vector.broadcast %cst_48 : f32 to vector<8x8xf32>
    %149 = arith.mulf %147, %148 : vector<8x8xf32>
    %cst_49 = arith.constant dense<0xFF800000> : vector<8xf32>
    %150 = vector.multi_reduction <maximumf>, %149, %cst_49 [1] : vector<8x8xf32> to vector<8xf32>
    %151 = vector.shape_cast %150 : vector<8xf32> to vector<8x1xf32>
    %152 = vector.broadcast %151 : vector<8x1xf32> to vector<8x8xf32>
    %153 = arith.subf %149, %152 : vector<8x8xf32>
    %154 = math.exp %153 : vector<8x8xf32>
    %cst_50 = arith.constant dense<0.000000e+00> : vector<8xf32>
    %155 = vector.multi_reduction <add>, %154, %cst_50 [1] : vector<8x8xf32> to vector<8xf32>
    %156 = vector.shape_cast %155 : vector<8xf32> to vector<8x1xf32>
    %157 = tpu.reciprocal %156 {approx = true} : vector<8x1xf32> -> vector<8x1xf32>
    %158 = vector.broadcast %157 : vector<8x1xf32> to vector<8x8xf32>
    %159 = arith.mulf %154, %158 : vector<8x8xf32>
    %cst_51 = arith.constant dense<0.000000e+00> : vector<8x8xf32>
    %160 = tpu.matmul %159, %146, %cst_51 {dimension_numbers = #tpu.dot_dimension_numbers<[1], [0], [0], [1], [0, 0, 1, 1], [], []>} : vector<8x8xf32>, vector<8x8xf32>, vector<8x8xf32> -> vector<8x8xf32>
    %161 = vector.extract_strided_slice %40 {offsets = [8, 24], sizes = [8, 8], strides = [1, 1]} : vector<16x96xf32> to vector<8x8xf32>
    %162 = vector.extract_strided_slice %40 {offsets = [8, 56], sizes = [8, 8], strides = [1, 1]} : vector<16x96xf32> to vector<8x8xf32>
    %163 = vector.extract_strided_slice %40 {offsets = [8, 88], sizes = [8, 8], strides = [1, 1]} : vector<16x96xf32> to vector<8x8xf32>
    "tpu.trace_start"() <{level = 10 : i32, message = "td,sd->ts"}> : () -> ()
    %cst_52 = arith.constant dense<0.000000e+00> : vector<8x8xf32>
    %164 = tpu.matmul %161, %162, %cst_52 {dimension_numbers = #tpu.dot_dimension_numbers<[1], [1], [0], [0], [0, 0, 1, 0], [], []>} : vector<8x8xf32>, vector<8x8xf32>, vector<8x8xf32> -> vector<8x8xf32>
    "tpu.trace_stop"() : () -> ()
    %cst_53 = arith.constant 0.353553385 : f32
    %165 = vector.broadcast %cst_53 : f32 to vector<8x8xf32>
    %166 = arith.mulf %164, %165 : vector<8x8xf32>
    %cst_54 = arith.constant dense<0xFF800000> : vector<8xf32>
    %167 = vector.multi_reduction <maximumf>, %166, %cst_54 [1] : vector<8x8xf32> to vector<8xf32>
    %168 = vector.shape_cast %167 : vector<8xf32> to vector<8x1xf32>
    %169 = vector.broadcast %168 : vector<8x1xf32> to vector<8x8xf32>
    %170 = arith.subf %166, %169 : vector<8x8xf32>
    %171 = math.exp %170 : vector<8x8xf32>
    %cst_55 = arith.constant dense<0.000000e+00> : vector<8xf32>
    %172 = vector.multi_reduction <add>, %171, %cst_55 [1] : vector<8x8xf32> to vector<8xf32>
    %173 = vector.shape_cast %172 : vector<8xf32> to vector<8x1xf32>
    %174 = tpu.reciprocal %173 {approx = true} : vector<8x1xf32> -> vector<8x1xf32>
    %175 = vector.broadcast %174 : vector<8x1xf32> to vector<8x8xf32>
    %176 = arith.mulf %171, %175 : vector<8x8xf32>
    %cst_56 = arith.constant dense<0.000000e+00> : vector<8x8xf32>
    %177 = tpu.matmul %176, %163, %cst_56 {dimension_numbers = #tpu.dot_dimension_numbers<[1], [0], [0], [1], [0, 0, 1, 1], [], []>} : vector<8x8xf32>, vector<8x8xf32>, vector<8x8xf32> -> vector<8x8xf32>
    %178 = tpu.concatenate %126, %143, %160, %177 in 1 : vector<8x8xf32>, vector<8x8xf32>, vector<8x8xf32>, vector<8x8xf32> -> vector<8x32xf32>
    %179 = tpu.concatenate %109, %178 in 0 : vector<8x32xf32>, vector<8x32xf32> -> vector<16x32xf32>
    %180 = vector.extract_strided_slice %6 {offsets = [0, 96], sizes = [32, 32], strides = [1, 1]} : vector<32x128xf32> to vector<32x32xf32>
    %cst_57 = arith.constant dense<0.000000e+00> : vector<16x32xf32>
    %181 = tpu.matmul %179, %180, %cst_57 {dimension_numbers = #tpu.dot_dimension_numbers<[1], [0], [0], [1], [0, 0, 1, 1], [], []>} : vector<16x32xf32>, vector<32x32xf32>, vector<16x32xf32> -> vector<16x32xf32>
    %182 = arith.addf %4, %181 : vector<16x32xf32>
    %183 = vector.broadcast %10 : vector<1x32xf32> to vector<16x32xf32>
    %184 = arith.addf %182, %183 : vector<16x32xf32>
    %cst_58 = arith.constant dense<0.000000e+00> : vector<16xf32>
    %185 = vector.multi_reduction <add>, %184, %cst_58 [1] : vector<16x32xf32> to vector<16xf32>
    %186 = vector.shape_cast %185 : vector<16xf32> to vector<16x1xf32>
    %cst_59 = arith.constant 3.200000e+01 : f32
    %187 = vector.broadcast %cst_59 : f32 to vector<16x1xf32>
    %188 = arith.divf %186, %187 : vector<16x1xf32>
    %189 = vector.broadcast %188 : vector<16x1xf32> to vector<16x32xf32>
    %190 = arith.subf %184, %189 : vector<16x32xf32>
    %191 = arith.mulf %190, %190 : vector<16x32xf32>
    %cst_60 = arith.constant dense<0.000000e+00> : vector<16xf32>
    %192 = vector.multi_reduction <add>, %191, %cst_60 [1] : vector<16x32xf32> to vector<16xf32>
    %193 = vector.shape_cast %192 : vector<16xf32> to vector<16x1xf32>
    %cst_61 = arith.constant 3.200000e+01 : f32
    %194 = vector.broadcast %cst_61 : f32 to vector<16x1xf32>
    %195 = arith.divf %193, %194 : vector<16x1xf32>
    %cst_62 = arith.constant 9.99999974E-6 : f32
    %196 = vector.broadcast %cst_62 : f32 to vector<16x1xf32>
    %197 = arith.addf %195, %196 : vector<16x1xf32>
    %198 = math.rsqrt %197 : vector<16x1xf32>
    %199 = vector.broadcast %198 : vector<16x1xf32> to vector<16x32xf32>
    %200 = arith.mulf %190, %199 : vector<16x32xf32>
    %201 = vector.broadcast %13 : vector<1x32xf32> to vector<16x32xf32>
    %202 = arith.mulf %200, %201 : vector<16x32xf32>
    %203 = vector.broadcast %14 : vector<1x32xf32> to vector<16x32xf32>
    %204 = arith.addf %202, %203 : vector<16x32xf32>
    %c0_63 = arith.constant 0 : index
    %c0_64 = arith.constant 0 : index
    %c0_65 = arith.constant 0 : index
    %205 = vector.load %arg5[%c0_63, %c0_64, %c0_65] : memref<2x32x64xf32, #tpu.memory_space<vmem>>, vector<1x32x64xf32>
    %206 = vector.shape_cast %205 : vector<1x32x64xf32> to vector<32x64xf32>
    %cst_66 = arith.constant dense<0.000000e+00> : vector<16x64xf32>
    %207 = tpu.matmul %204, %206, %cst_66 {dimension_numbers = #tpu.dot_dimension_numbers<[1], [0], [0], [1], [0, 0, 1, 1], [], []>} : vector<16x32xf32>, vector<32x64xf32>, vector<16x64xf32> -> vector<16x64xf32>
    %208 = vector.broadcast %15 : vector<1x64xf32> to vector<16x64xf32>
    %209 = arith.addf %207, %208 : vector<16x64xf32>
    %cst_67 = arith.constant 5.000000e-01 : f32
    %210 = vector.broadcast %cst_67 : f32 to vector<16x64xf32>
    %211 = arith.mulf %210, %209 : vector<16x64xf32>
    %cst_68 = arith.constant 0.707106769 : f32
    %212 = vector.broadcast %cst_68 : f32 to vector<16x64xf32>
    %213 = arith.mulf %209, %212 : vector<16x64xf32>
    %214 = math.erf %213 : vector<16x64xf32>
    %cst_69 = arith.constant 1.000000e+00 : f32
    %215 = vector.broadcast %cst_69 : f32 to vector<16x64xf32>
    %216 = arith.addf %215, %214 : vector<16x64xf32>
    %217 = arith.mulf %211, %216 : vector<16x64xf32>
    %c0_70 = arith.constant 0 : index
    %c0_71 = arith.constant 0 : index
    %c0_72 = arith.constant 0 : index
    %218 = vector.load %arg6[%c0_70, %c0_71, %c0_72] : memref<2x64x32xf32, #tpu.memory_space<vmem>>, vector<1x64x32xf32>
    %219 = vector.shape_cast %218 : vector<1x64x32xf32> to vector<64x32xf32>
    %cst_73 = arith.constant dense<0.000000e+00> : vector<16x32xf32>
    %220 = tpu.matmul %217, %219, %cst_73 {dimension_numbers = #tpu.dot_dimension_numbers<[1], [0], [0], [1], [0, 0, 1, 1], [], []>} : vector<16x64xf32>, vector<64x32xf32>, vector<16x32xf32> -> vector<16x32xf32>
    %221 = arith.addf %184, %220 : vector<16x32xf32>
    %222 = vector.broadcast %16 : vector<1x32xf32> to vector<16x32xf32>
    %223 = arith.addf %221, %222 : vector<16x32xf32>
    %c1 = arith.constant 1 : index
    %c0_74 = arith.constant 0 : index
    %c0_75 = arith.constant 0 : index
    %224 = vector.load %arg3[%c1, %c0_74, %c0_75] : memref<2x32x128xf32, #tpu.memory_space<vmem>>, vector<1x32x128xf32>
    %225 = vector.shape_cast %224 : vector<1x32x128xf32> to vector<32x128xf32>
    %c1_76 = arith.constant 1 : index
    %c0_77 = arith.constant 0 : index
    %c0_78 = arith.constant 0 : index
    %226 = vector.load %arg4[%c1_76, %c0_77, %c0_78] : memref<2x3x128xf32, #tpu.memory_space<vmem>>, vector<1x3x128xf32>
    %227 = vector.shape_cast %226 : vector<1x3x128xf32> to vector<3x128xf32>
    %228 = vector.extract_strided_slice %227 {offsets = [0, 0], sizes = [1, 96], strides = [1, 1]} : vector<3x128xf32> to vector<1x96xf32>
    %229 = vector.extract_strided_slice %227 {offsets = [0, 96], sizes = [1, 32], strides = [1, 1]} : vector<3x128xf32> to vector<1x32xf32>
    %230 = vector.extract_strided_slice %227 {offsets = [1, 0], sizes = [1, 32], strides = [1, 1]} : vector<3x128xf32> to vector<1x32xf32>
    %231 = vector.extract_strided_slice %227 {offsets = [1, 32], sizes = [1, 32], strides = [1, 1]} : vector<3x128xf32> to vector<1x32xf32>
    %232 = vector.extract_strided_slice %227 {offsets = [1, 64], sizes = [1, 32], strides = [1, 1]} : vector<3x128xf32> to vector<1x32xf32>
    %233 = vector.extract_strided_slice %227 {offsets = [1, 96], sizes = [1, 32], strides = [1, 1]} : vector<3x128xf32> to vector<1x32xf32>
    %234 = vector.extract_strided_slice %227 {offsets = [2, 0], sizes = [1, 64], strides = [1, 1]} : vector<3x128xf32> to vector<1x64xf32>
    %235 = vector.extract_strided_slice %227 {offsets = [2, 64], sizes = [1, 32], strides = [1, 1]} : vector<3x128xf32> to vector<1x32xf32>
    %cst_79 = arith.constant dense<0.000000e+00> : vector<16xf32>
    %236 = vector.multi_reduction <add>, %223, %cst_79 [1] : vector<16x32xf32> to vector<16xf32>
    %237 = vector.shape_cast %236 : vector<16xf32> to vector<16x1xf32>
    %cst_80 = arith.constant 3.200000e+01 : f32
    %238 = vector.broadcast %cst_80 : f32 to vector<16x1xf32>
    %239 = arith.divf %237, %238 : vector<16x1xf32>
    %240 = vector.broadcast %239 : vector<16x1xf32> to vector<16x32xf32>
    %241 = arith.subf %223, %240 : vector<16x32xf32>
    %242 = arith.mulf %241, %241 : vector<16x32xf32>
    %cst_81 = arith.constant dense<0.000000e+00> : vector<16xf32>
    %243 = vector.multi_reduction <add>, %242, %cst_81 [1] : vector<16x32xf32> to vector<16xf32>
    %244 = vector.shape_cast %243 : vector<16xf32> to vector<16x1xf32>
    %cst_82 = arith.constant 3.200000e+01 : f32
    %245 = vector.broadcast %cst_82 : f32 to vector<16x1xf32>
    %246 = arith.divf %244, %245 : vector<16x1xf32>
    %cst_83 = arith.constant 9.99999974E-6 : f32
    %247 = vector.broadcast %cst_83 : f32 to vector<16x1xf32>
    %248 = arith.addf %246, %247 : vector<16x1xf32>
    %249 = math.rsqrt %248 : vector<16x1xf32>
    %250 = vector.broadcast %249 : vector<16x1xf32> to vector<16x32xf32>
    %251 = arith.mulf %241, %250 : vector<16x32xf32>
    %252 = vector.broadcast %230 : vector<1x32xf32> to vector<16x32xf32>
    %253 = arith.mulf %251, %252 : vector<16x32xf32>
    %254 = vector.broadcast %231 : vector<1x32xf32> to vector<16x32xf32>
    %255 = arith.addf %253, %254 : vector<16x32xf32>
    %256 = vector.extract_strided_slice %225 {offsets = [0, 0], sizes = [32, 96], strides = [1, 1]} : vector<32x128xf32> to vector<32x96xf32>
    %cst_84 = arith.constant dense<0.000000e+00> : vector<16x96xf32>
    %257 = tpu.matmul %255, %256, %cst_84 {dimension_numbers = #tpu.dot_dimension_numbers<[1], [0], [0], [1], [0, 0, 1, 1], [], []>} : vector<16x32xf32>, vector<32x96xf32>, vector<16x96xf32> -> vector<16x96xf32>
    %258 = vector.broadcast %228 : vector<1x96xf32> to vector<16x96xf32>
    %259 = arith.addf %257, %258 : vector<16x96xf32>
    %260 = vector.extract_strided_slice %259 {offsets = [0, 0], sizes = [8, 8], strides = [1, 1]} : vector<16x96xf32> to vector<8x8xf32>
    %261 = vector.extract_strided_slice %259 {offsets = [0, 32], sizes = [8, 8], strides = [1, 1]} : vector<16x96xf32> to vector<8x8xf32>
    %262 = vector.extract_strided_slice %259 {offsets = [0, 64], sizes = [8, 8], strides = [1, 1]} : vector<16x96xf32> to vector<8x8xf32>
    "tpu.trace_start"() <{level = 10 : i32, message = "td,sd->ts"}> : () -> ()
    %cst_85 = arith.constant dense<0.000000e+00> : vector<8x8xf32>
    %263 = tpu.matmul %260, %261, %cst_85 {dimension_numbers = #tpu.dot_dimension_numbers<[1], [1], [0], [0], [0, 0, 1, 0], [], []>} : vector<8x8xf32>, vector<8x8xf32>, vector<8x8xf32> -> vector<8x8xf32>
    "tpu.trace_stop"() : () -> ()
    %cst_86 = arith.constant 0.353553385 : f32
    %264 = vector.broadcast %cst_86 : f32 to vector<8x8xf32>
    %265 = arith.mulf %263, %264 : vector<8x8xf32>
    %cst_87 = arith.constant dense<0xFF800000> : vector<8xf32>
    %266 = vector.multi_reduction <maximumf>, %265, %cst_87 [1] : vector<8x8xf32> to vector<8xf32>
    %267 = vector.shape_cast %266 : vector<8xf32> to vector<8x1xf32>
    %268 = vector.broadcast %267 : vector<8x1xf32> to vector<8x8xf32>
    %269 = arith.subf %265, %268 : vector<8x8xf32>
    %270 = math.exp %269 : vector<8x8xf32>
    %cst_88 = arith.constant dense<0.000000e+00> : vector<8xf32>
    %271 = vector.multi_reduction <add>, %270, %cst_88 [1] : vector<8x8xf32> to vector<8xf32>
    %272 = vector.shape_cast %271 : vector<8xf32> to vector<8x1xf32>
    %273 = tpu.reciprocal %272 {approx = true} : vector<8x1xf32> -> vector<8x1xf32>
    %274 = vector.broadcast %273 : vector<8x1xf32> to vector<8x8xf32>
    %275 = arith.mulf %270, %274 : vector<8x8xf32>
    %cst_89 = arith.constant dense<0.000000e+00> : vector<8x8xf32>
    %276 = tpu.matmul %275, %262, %cst_89 {dimension_numbers = #tpu.dot_dimension_numbers<[1], [0], [0], [1], [0, 0, 1, 1], [], []>} : vector<8x8xf32>, vector<8x8xf32>, vector<8x8xf32> -> vector<8x8xf32>
    %277 = vector.extract_strided_slice %259 {offsets = [0, 8], sizes = [8, 8], strides = [1, 1]} : vector<16x96xf32> to vector<8x8xf32>
    %278 = vector.extract_strided_slice %259 {offsets = [0, 40], sizes = [8, 8], strides = [1, 1]} : vector<16x96xf32> to vector<8x8xf32>
    %279 = vector.extract_strided_slice %259 {offsets = [0, 72], sizes = [8, 8], strides = [1, 1]} : vector<16x96xf32> to vector<8x8xf32>
    "tpu.trace_start"() <{level = 10 : i32, message = "td,sd->ts"}> : () -> ()
    %cst_90 = arith.constant dense<0.000000e+00> : vector<8x8xf32>
    %280 = tpu.matmul %277, %278, %cst_90 {dimension_numbers = #tpu.dot_dimension_numbers<[1], [1], [0], [0], [0, 0, 1, 0], [], []>} : vector<8x8xf32>, vector<8x8xf32>, vector<8x8xf32> -> vector<8x8xf32>
    "tpu.trace_stop"() : () -> ()
    %cst_91 = arith.constant 0.353553385 : f32
    %281 = vector.broadcast %cst_91 : f32 to vector<8x8xf32>
    %282 = arith.mulf %280, %281 : vector<8x8xf32>
    %cst_92 = arith.constant dense<0xFF800000> : vector<8xf32>
    %283 = vector.multi_reduction <maximumf>, %282, %cst_92 [1] : vector<8x8xf32> to vector<8xf32>
    %284 = vector.shape_cast %283 : vector<8xf32> to vector<8x1xf32>
    %285 = vector.broadcast %284 : vector<8x1xf32> to vector<8x8xf32>
    %286 = arith.subf %282, %285 : vector<8x8xf32>
    %287 = math.exp %286 : vector<8x8xf32>
    %cst_93 = arith.constant dense<0.000000e+00> : vector<8xf32>
    %288 = vector.multi_reduction <add>, %287, %cst_93 [1] : vector<8x8xf32> to vector<8xf32>
    %289 = vector.shape_cast %288 : vector<8xf32> to vector<8x1xf32>
    %290 = tpu.reciprocal %289 {approx = true} : vector<8x1xf32> -> vector<8x1xf32>
    %291 = vector.broadcast %290 : vector<8x1xf32> to vector<8x8xf32>
    %292 = arith.mulf %287, %291 : vector<8x8xf32>
    %cst_94 = arith.constant dense<0.000000e+00> : vector<8x8xf32>
    %293 = tpu.matmul %292, %279, %cst_94 {dimension_numbers = #tpu.dot_dimension_numbers<[1], [0], [0], [1], [0, 0, 1, 1], [], []>} : vector<8x8xf32>, vector<8x8xf32>, vector<8x8xf32> -> vector<8x8xf32>
    %294 = vector.extract_strided_slice %259 {offsets = [0, 16], sizes = [8, 8], strides = [1, 1]} : vector<16x96xf32> to vector<8x8xf32>
    %295 = vector.extract_strided_slice %259 {offsets = [0, 48], sizes = [8, 8], strides = [1, 1]} : vector<16x96xf32> to vector<8x8xf32>
    %296 = vector.extract_strided_slice %259 {offsets = [0, 80], sizes = [8, 8], strides = [1, 1]} : vector<16x96xf32> to vector<8x8xf32>
    "tpu.trace_start"() <{level = 10 : i32, message = "td,sd->ts"}> : () -> ()
    %cst_95 = arith.constant dense<0.000000e+00> : vector<8x8xf32>
    %297 = tpu.matmul %294, %295, %cst_95 {dimension_numbers = #tpu.dot_dimension_numbers<[1], [1], [0], [0], [0, 0, 1, 0], [], []>} : vector<8x8xf32>, vector<8x8xf32>, vector<8x8xf32> -> vector<8x8xf32>
    "tpu.trace_stop"() : () -> ()
    %cst_96 = arith.constant 0.353553385 : f32
    %298 = vector.broadcast %cst_96 : f32 to vector<8x8xf32>
    %299 = arith.mulf %297, %298 : vector<8x8xf32>
    %cst_97 = arith.constant dense<0xFF800000> : vector<8xf32>
    %300 = vector.multi_reduction <maximumf>, %299, %cst_97 [1] : vector<8x8xf32> to vector<8xf32>
    %301 = vector.shape_cast %300 : vector<8xf32> to vector<8x1xf32>
    %302 = vector.broadcast %301 : vector<8x1xf32> to vector<8x8xf32>
    %303 = arith.subf %299, %302 : vector<8x8xf32>
    %304 = math.exp %303 : vector<8x8xf32>
    %cst_98 = arith.constant dense<0.000000e+00> : vector<8xf32>
    %305 = vector.multi_reduction <add>, %304, %cst_98 [1] : vector<8x8xf32> to vector<8xf32>
    %306 = vector.shape_cast %305 : vector<8xf32> to vector<8x1xf32>
    %307 = tpu.reciprocal %306 {approx = true} : vector<8x1xf32> -> vector<8x1xf32>
    %308 = vector.broadcast %307 : vector<8x1xf32> to vector<8x8xf32>
    %309 = arith.mulf %304, %308 : vector<8x8xf32>
    %cst_99 = arith.constant dense<0.000000e+00> : vector<8x8xf32>
    %310 = tpu.matmul %309, %296, %cst_99 {dimension_numbers = #tpu.dot_dimension_numbers<[1], [0], [0], [1], [0, 0, 1, 1], [], []>} : vector<8x8xf32>, vector<8x8xf32>, vector<8x8xf32> -> vector<8x8xf32>
    %311 = vector.extract_strided_slice %259 {offsets = [0, 24], sizes = [8, 8], strides = [1, 1]} : vector<16x96xf32> to vector<8x8xf32>
    %312 = vector.extract_strided_slice %259 {offsets = [0, 56], sizes = [8, 8], strides = [1, 1]} : vector<16x96xf32> to vector<8x8xf32>
    %313 = vector.extract_strided_slice %259 {offsets = [0, 88], sizes = [8, 8], strides = [1, 1]} : vector<16x96xf32> to vector<8x8xf32>
    "tpu.trace_start"() <{level = 10 : i32, message = "td,sd->ts"}> : () -> ()
    %cst_100 = arith.constant dense<0.000000e+00> : vector<8x8xf32>
    %314 = tpu.matmul %311, %312, %cst_100 {dimension_numbers = #tpu.dot_dimension_numbers<[1], [1], [0], [0], [0, 0, 1, 0], [], []>} : vector<8x8xf32>, vector<8x8xf32>, vector<8x8xf32> -> vector<8x8xf32>
    "tpu.trace_stop"() : () -> ()
    %cst_101 = arith.constant 0.353553385 : f32
    %315 = vector.broadcast %cst_101 : f32 to vector<8x8xf32>
    %316 = arith.mulf %314, %315 : vector<8x8xf32>
    %cst_102 = arith.constant dense<0xFF800000> : vector<8xf32>
    %317 = vector.multi_reduction <maximumf>, %316, %cst_102 [1] : vector<8x8xf32> to vector<8xf32>
    %318 = vector.shape_cast %317 : vector<8xf32> to vector<8x1xf32>
    %319 = vector.broadcast %318 : vector<8x1xf32> to vector<8x8xf32>
    %320 = arith.subf %316, %319 : vector<8x8xf32>
    %321 = math.exp %320 : vector<8x8xf32>
    %cst_103 = arith.constant dense<0.000000e+00> : vector<8xf32>
    %322 = vector.multi_reduction <add>, %321, %cst_103 [1] : vector<8x8xf32> to vector<8xf32>
    %323 = vector.shape_cast %322 : vector<8xf32> to vector<8x1xf32>
    %324 = tpu.reciprocal %323 {approx = true} : vector<8x1xf32> -> vector<8x1xf32>
    %325 = vector.broadcast %324 : vector<8x1xf32> to vector<8x8xf32>
    %326 = arith.mulf %321, %325 : vector<8x8xf32>
    %cst_104 = arith.constant dense<0.000000e+00> : vector<8x8xf32>
    %327 = tpu.matmul %326, %313, %cst_104 {dimension_numbers = #tpu.dot_dimension_numbers<[1], [0], [0], [1], [0, 0, 1, 1], [], []>} : vector<8x8xf32>, vector<8x8xf32>, vector<8x8xf32> -> vector<8x8xf32>
    %328 = tpu.concatenate %276, %293, %310, %327 in 1 : vector<8x8xf32>, vector<8x8xf32>, vector<8x8xf32>, vector<8x8xf32> -> vector<8x32xf32>
    %329 = vector.extract_strided_slice %259 {offsets = [8, 0], sizes = [8, 8], strides = [1, 1]} : vector<16x96xf32> to vector<8x8xf32>
    %330 = vector.extract_strided_slice %259 {offsets = [8, 32], sizes = [8, 8], strides = [1, 1]} : vector<16x96xf32> to vector<8x8xf32>
    %331 = vector.extract_strided_slice %259 {offsets = [8, 64], sizes = [8, 8], strides = [1, 1]} : vector<16x96xf32> to vector<8x8xf32>
    "tpu.trace_start"() <{level = 10 : i32, message = "td,sd->ts"}> : () -> ()
    %cst_105 = arith.constant dense<0.000000e+00> : vector<8x8xf32>
    %332 = tpu.matmul %329, %330, %cst_105 {dimension_numbers = #tpu.dot_dimension_numbers<[1], [1], [0], [0], [0, 0, 1, 0], [], []>} : vector<8x8xf32>, vector<8x8xf32>, vector<8x8xf32> -> vector<8x8xf32>
    "tpu.trace_stop"() : () -> ()
    %cst_106 = arith.constant 0.353553385 : f32
    %333 = vector.broadcast %cst_106 : f32 to vector<8x8xf32>
    %334 = arith.mulf %332, %333 : vector<8x8xf32>
    %cst_107 = arith.constant dense<0xFF800000> : vector<8xf32>
    %335 = vector.multi_reduction <maximumf>, %334, %cst_107 [1] : vector<8x8xf32> to vector<8xf32>
    %336 = vector.shape_cast %335 : vector<8xf32> to vector<8x1xf32>
    %337 = vector.broadcast %336 : vector<8x1xf32> to vector<8x8xf32>
    %338 = arith.subf %334, %337 : vector<8x8xf32>
    %339 = math.exp %338 : vector<8x8xf32>
    %cst_108 = arith.constant dense<0.000000e+00> : vector<8xf32>
    %340 = vector.multi_reduction <add>, %339, %cst_108 [1] : vector<8x8xf32> to vector<8xf32>
    %341 = vector.shape_cast %340 : vector<8xf32> to vector<8x1xf32>
    %342 = tpu.reciprocal %341 {approx = true} : vector<8x1xf32> -> vector<8x1xf32>
    %343 = vector.broadcast %342 : vector<8x1xf32> to vector<8x8xf32>
    %344 = arith.mulf %339, %343 : vector<8x8xf32>
    %cst_109 = arith.constant dense<0.000000e+00> : vector<8x8xf32>
    %345 = tpu.matmul %344, %331, %cst_109 {dimension_numbers = #tpu.dot_dimension_numbers<[1], [0], [0], [1], [0, 0, 1, 1], [], []>} : vector<8x8xf32>, vector<8x8xf32>, vector<8x8xf32> -> vector<8x8xf32>
    %346 = vector.extract_strided_slice %259 {offsets = [8, 8], sizes = [8, 8], strides = [1, 1]} : vector<16x96xf32> to vector<8x8xf32>
    %347 = vector.extract_strided_slice %259 {offsets = [8, 40], sizes = [8, 8], strides = [1, 1]} : vector<16x96xf32> to vector<8x8xf32>
    %348 = vector.extract_strided_slice %259 {offsets = [8, 72], sizes = [8, 8], strides = [1, 1]} : vector<16x96xf32> to vector<8x8xf32>
    "tpu.trace_start"() <{level = 10 : i32, message = "td,sd->ts"}> : () -> ()
    %cst_110 = arith.constant dense<0.000000e+00> : vector<8x8xf32>
    %349 = tpu.matmul %346, %347, %cst_110 {dimension_numbers = #tpu.dot_dimension_numbers<[1], [1], [0], [0], [0, 0, 1, 0], [], []>} : vector<8x8xf32>, vector<8x8xf32>, vector<8x8xf32> -> vector<8x8xf32>
    "tpu.trace_stop"() : () -> ()
    %cst_111 = arith.constant 0.353553385 : f32
    %350 = vector.broadcast %cst_111 : f32 to vector<8x8xf32>
    %351 = arith.mulf %349, %350 : vector<8x8xf32>
    %cst_112 = arith.constant dense<0xFF800000> : vector<8xf32>
    %352 = vector.multi_reduction <maximumf>, %351, %cst_112 [1] : vector<8x8xf32> to vector<8xf32>
    %353 = vector.shape_cast %352 : vector<8xf32> to vector<8x1xf32>
    %354 = vector.broadcast %353 : vector<8x1xf32> to vector<8x8xf32>
    %355 = arith.subf %351, %354 : vector<8x8xf32>
    %356 = math.exp %355 : vector<8x8xf32>
    %cst_113 = arith.constant dense<0.000000e+00> : vector<8xf32>
    %357 = vector.multi_reduction <add>, %356, %cst_113 [1] : vector<8x8xf32> to vector<8xf32>
    %358 = vector.shape_cast %357 : vector<8xf32> to vector<8x1xf32>
    %359 = tpu.reciprocal %358 {approx = true} : vector<8x1xf32> -> vector<8x1xf32>
    %360 = vector.broadcast %359 : vector<8x1xf32> to vector<8x8xf32>
    %361 = arith.mulf %356, %360 : vector<8x8xf32>
    %cst_114 = arith.constant dense<0.000000e+00> : vector<8x8xf32>
    %362 = tpu.matmul %361, %348, %cst_114 {dimension_numbers = #tpu.dot_dimension_numbers<[1], [0], [0], [1], [0, 0, 1, 1], [], []>} : vector<8x8xf32>, vector<8x8xf32>, vector<8x8xf32> -> vector<8x8xf32>
    %363 = vector.extract_strided_slice %259 {offsets = [8, 16], sizes = [8, 8], strides = [1, 1]} : vector<16x96xf32> to vector<8x8xf32>
    %364 = vector.extract_strided_slice %259 {offsets = [8, 48], sizes = [8, 8], strides = [1, 1]} : vector<16x96xf32> to vector<8x8xf32>
    %365 = vector.extract_strided_slice %259 {offsets = [8, 80], sizes = [8, 8], strides = [1, 1]} : vector<16x96xf32> to vector<8x8xf32>
    "tpu.trace_start"() <{level = 10 : i32, message = "td,sd->ts"}> : () -> ()
    %cst_115 = arith.constant dense<0.000000e+00> : vector<8x8xf32>
    %366 = tpu.matmul %363, %364, %cst_115 {dimension_numbers = #tpu.dot_dimension_numbers<[1], [1], [0], [0], [0, 0, 1, 0], [], []>} : vector<8x8xf32>, vector<8x8xf32>, vector<8x8xf32> -> vector<8x8xf32>
    "tpu.trace_stop"() : () -> ()
    %cst_116 = arith.constant 0.353553385 : f32
    %367 = vector.broadcast %cst_116 : f32 to vector<8x8xf32>
    %368 = arith.mulf %366, %367 : vector<8x8xf32>
    %cst_117 = arith.constant dense<0xFF800000> : vector<8xf32>
    %369 = vector.multi_reduction <maximumf>, %368, %cst_117 [1] : vector<8x8xf32> to vector<8xf32>
    %370 = vector.shape_cast %369 : vector<8xf32> to vector<8x1xf32>
    %371 = vector.broadcast %370 : vector<8x1xf32> to vector<8x8xf32>
    %372 = arith.subf %368, %371 : vector<8x8xf32>
    %373 = math.exp %372 : vector<8x8xf32>
    %cst_118 = arith.constant dense<0.000000e+00> : vector<8xf32>
    %374 = vector.multi_reduction <add>, %373, %cst_118 [1] : vector<8x8xf32> to vector<8xf32>
    %375 = vector.shape_cast %374 : vector<8xf32> to vector<8x1xf32>
    %376 = tpu.reciprocal %375 {approx = true} : vector<8x1xf32> -> vector<8x1xf32>
    %377 = vector.broadcast %376 : vector<8x1xf32> to vector<8x8xf32>
    %378 = arith.mulf %373, %377 : vector<8x8xf32>
    %cst_119 = arith.constant dense<0.000000e+00> : vector<8x8xf32>
    %379 = tpu.matmul %378, %365, %cst_119 {dimension_numbers = #tpu.dot_dimension_numbers<[1], [0], [0], [1], [0, 0, 1, 1], [], []>} : vector<8x8xf32>, vector<8x8xf32>, vector<8x8xf32> -> vector<8x8xf32>
    %380 = vector.extract_strided_slice %259 {offsets = [8, 24], sizes = [8, 8], strides = [1, 1]} : vector<16x96xf32> to vector<8x8xf32>
    %381 = vector.extract_strided_slice %259 {offsets = [8, 56], sizes = [8, 8], strides = [1, 1]} : vector<16x96xf32> to vector<8x8xf32>
    %382 = vector.extract_strided_slice %259 {offsets = [8, 88], sizes = [8, 8], strides = [1, 1]} : vector<16x96xf32> to vector<8x8xf32>
    "tpu.trace_start"() <{level = 10 : i32, message = "td,sd->ts"}> : () -> ()
    %cst_120 = arith.constant dense<0.000000e+00> : vector<8x8xf32>
    %383 = tpu.matmul %380, %381, %cst_120 {dimension_numbers = #tpu.dot_dimension_numbers<[1], [1], [0], [0], [0, 0, 1, 0], [], []>} : vector<8x8xf32>, vector<8x8xf32>, vector<8x8xf32> -> vector<8x8xf32>
    "tpu.trace_stop"() : () -> ()
    %cst_121 = arith.constant 0.353553385 : f32
    %384 = vector.broadcast %cst_121 : f32 to vector<8x8xf32>
    %385 = arith.mulf %383, %384 : vector<8x8xf32>
    %cst_122 = arith.constant dense<0xFF800000> : vector<8xf32>
    %386 = vector.multi_reduction <maximumf>, %385, %cst_122 [1] : vector<8x8xf32> to vector<8xf32>
    %387 = vector.shape_cast %386 : vector<8xf32> to vector<8x1xf32>
    %388 = vector.broadcast %387 : vector<8x1xf32> to vector<8x8xf32>
    %389 = arith.subf %385, %388 : vector<8x8xf32>
    %390 = math.exp %389 : vector<8x8xf32>
    %cst_123 = arith.constant dense<0.000000e+00> : vector<8xf32>
    %391 = vector.multi_reduction <add>, %390, %cst_123 [1] : vector<8x8xf32> to vector<8xf32>
    %392 = vector.shape_cast %391 : vector<8xf32> to vector<8x1xf32>
    %393 = tpu.reciprocal %392 {approx = true} : vector<8x1xf32> -> vector<8x1xf32>
    %394 = vector.broadcast %393 : vector<8x1xf32> to vector<8x8xf32>
    %395 = arith.mulf %390, %394 : vector<8x8xf32>
    %cst_124 = arith.constant dense<0.000000e+00> : vector<8x8xf32>
    %396 = tpu.matmul %395, %382, %cst_124 {dimension_numbers = #tpu.dot_dimension_numbers<[1], [0], [0], [1], [0, 0, 1, 1], [], []>} : vector<8x8xf32>, vector<8x8xf32>, vector<8x8xf32> -> vector<8x8xf32>
    %397 = tpu.concatenate %345, %362, %379, %396 in 1 : vector<8x8xf32>, vector<8x8xf32>, vector<8x8xf32>, vector<8x8xf32> -> vector<8x32xf32>
    %398 = tpu.concatenate %328, %397 in 0 : vector<8x32xf32>, vector<8x32xf32> -> vector<16x32xf32>
    %399 = vector.extract_strided_slice %225 {offsets = [0, 96], sizes = [32, 32], strides = [1, 1]} : vector<32x128xf32> to vector<32x32xf32>
    %cst_125 = arith.constant dense<0.000000e+00> : vector<16x32xf32>
    %400 = tpu.matmul %398, %399, %cst_125 {dimension_numbers = #tpu.dot_dimension_numbers<[1], [0], [0], [1], [0, 0, 1, 1], [], []>} : vector<16x32xf32>, vector<32x32xf32>, vector<16x32xf32> -> vector<16x32xf32>
    %401 = arith.addf %223, %400 : vector<16x32xf32>
    %402 = vector.broadcast %229 : vector<1x32xf32> to vector<16x32xf32>
    %403 = arith.addf %401, %402 : vector<16x32xf32>
    %cst_126 = arith.constant dense<0.000000e+00> : vector<16xf32>
    %404 = vector.multi_reduction <add>, %403, %cst_126 [1] : vector<16x32xf32> to vector<16xf32>
    %405 = vector.shape_cast %404 : vector<16xf32> to vector<16x1xf32>
    %cst_127 = arith.constant 3.200000e+01 : f32
    %406 = vector.broadcast %cst_127 : f32 to vector<16x1xf32>
    %407 = arith.divf %405, %406 : vector<16x1xf32>
    %408 = vector.broadcast %407 : vector<16x1xf32> to vector<16x32xf32>
    %409 = arith.subf %403, %408 : vector<16x32xf32>
    %410 = arith.mulf %409, %409 : vector<16x32xf32>
    %cst_128 = arith.constant dense<0.000000e+00> : vector<16xf32>
    %411 = vector.multi_reduction <add>, %410, %cst_128 [1] : vector<16x32xf32> to vector<16xf32>
    %412 = vector.shape_cast %411 : vector<16xf32> to vector<16x1xf32>
    %cst_129 = arith.constant 3.200000e+01 : f32
    %413 = vector.broadcast %cst_129 : f32 to vector<16x1xf32>
    %414 = arith.divf %412, %413 : vector<16x1xf32>
    %cst_130 = arith.constant 9.99999974E-6 : f32
    %415 = vector.broadcast %cst_130 : f32 to vector<16x1xf32>
    %416 = arith.addf %414, %415 : vector<16x1xf32>
    %417 = math.rsqrt %416 : vector<16x1xf32>
    %418 = vector.broadcast %417 : vector<16x1xf32> to vector<16x32xf32>
    %419 = arith.mulf %409, %418 : vector<16x32xf32>
    %420 = vector.broadcast %232 : vector<1x32xf32> to vector<16x32xf32>
    %421 = arith.mulf %419, %420 : vector<16x32xf32>
    %422 = vector.broadcast %233 : vector<1x32xf32> to vector<16x32xf32>
    %423 = arith.addf %421, %422 : vector<16x32xf32>
    %c1_131 = arith.constant 1 : index
    %c0_132 = arith.constant 0 : index
    %c0_133 = arith.constant 0 : index
    %424 = vector.load %arg5[%c1_131, %c0_132, %c0_133] : memref<2x32x64xf32, #tpu.memory_space<vmem>>, vector<1x32x64xf32>
    %425 = vector.shape_cast %424 : vector<1x32x64xf32> to vector<32x64xf32>
    %cst_134 = arith.constant dense<0.000000e+00> : vector<16x64xf32>
    %426 = tpu.matmul %423, %425, %cst_134 {dimension_numbers = #tpu.dot_dimension_numbers<[1], [0], [0], [1], [0, 0, 1, 1], [], []>} : vector<16x32xf32>, vector<32x64xf32>, vector<16x64xf32> -> vector<16x64xf32>
    %427 = vector.broadcast %234 : vector<1x64xf32> to vector<16x64xf32>
    %428 = arith.addf %426, %427 : vector<16x64xf32>
    %cst_135 = arith.constant 5.000000e-01 : f32
    %429 = vector.broadcast %cst_135 : f32 to vector<16x64xf32>
    %430 = arith.mulf %429, %428 : vector<16x64xf32>
    %cst_136 = arith.constant 0.707106769 : f32
    %431 = vector.broadcast %cst_136 : f32 to vector<16x64xf32>
    %432 = arith.mulf %428, %431 : vector<16x64xf32>
    %433 = math.erf %432 : vector<16x64xf32>
    %cst_137 = arith.constant 1.000000e+00 : f32
    %434 = vector.broadcast %cst_137 : f32 to vector<16x64xf32>
    %435 = arith.addf %434, %433 : vector<16x64xf32>
    %436 = arith.mulf %430, %435 : vector<16x64xf32>
    %c1_138 = arith.constant 1 : index
    %c0_139 = arith.constant 0 : index
    %c0_140 = arith.constant 0 : index
    %437 = vector.load %arg6[%c1_138, %c0_139, %c0_140] : memref<2x64x32xf32, #tpu.memory_space<vmem>>, vector<1x64x32xf32>
    %438 = vector.shape_cast %437 : vector<1x64x32xf32> to vector<64x32xf32>
    %cst_141 = arith.constant dense<0.000000e+00> : vector<16x32xf32>
    %439 = tpu.matmul %436, %438, %cst_141 {dimension_numbers = #tpu.dot_dimension_numbers<[1], [0], [0], [1], [0, 0, 1, 1], [], []>} : vector<16x64xf32>, vector<64x32xf32>, vector<16x32xf32> -> vector<16x32xf32>
    %440 = arith.addf %403, %439 : vector<16x32xf32>
    %441 = vector.broadcast %235 : vector<1x32xf32> to vector<16x32xf32>
    %442 = arith.addf %440, %441 : vector<16x32xf32>
    %443 = vector.extract_strided_slice %442 {offsets = [0, 0], sizes = [1, 32], strides = [1, 1]} : vector<16x32xf32> to vector<1x32xf32>
    %c0_142 = arith.constant 0 : index
    %c0_143 = arith.constant 0 : index
    %444 = vector.load %arg10[%c0_142, %c0_143] : memref<2x256xf32, #tpu.memory_space<vmem>>, vector<1x32xf32>
    tpu.vector_store %arg10[%c0_142, %c0_143], %443 {strides = array<i32>} : memref<2x256xf32, #tpu.memory_space<vmem>>, vector<1x32xf32>,
    %445 = vector.extract_strided_slice %442 {offsets = [1, 0], sizes = [1, 32], strides = [1, 1]} : vector<16x32xf32> to vector<1x32xf32>
    %c0_144 = arith.constant 0 : index
    %c32 = arith.constant 32 : index
    %446 = vector.load %arg10[%c0_144, %c32] : memref<2x256xf32, #tpu.memory_space<vmem>>, vector<1x32xf32>
    tpu.vector_store %arg10[%c0_144, %c32], %445 {strides = array<i32>} : memref<2x256xf32, #tpu.memory_space<vmem>>, vector<1x32xf32>,
    %447 = vector.extract_strided_slice %442 {offsets = [2, 0], sizes = [1, 32], strides = [1, 1]} : vector<16x32xf32> to vector<1x32xf32>
    %c0_145 = arith.constant 0 : index
    %c64 = arith.constant 64 : index
    %448 = vector.load %arg10[%c0_145, %c64] : memref<2x256xf32, #tpu.memory_space<vmem>>, vector<1x32xf32>
    tpu.vector_store %arg10[%c0_145, %c64], %447 {strides = array<i32>} : memref<2x256xf32, #tpu.memory_space<vmem>>, vector<1x32xf32>,
    %449 = vector.extract_strided_slice %442 {offsets = [3, 0], sizes = [1, 32], strides = [1, 1]} : vector<16x32xf32> to vector<1x32xf32>
    %c0_146 = arith.constant 0 : index
    %c96 = arith.constant 96 : index
    %450 = vector.load %arg10[%c0_146, %c96] : memref<2x256xf32, #tpu.memory_space<vmem>>, vector<1x32xf32>
    tpu.vector_store %arg10[%c0_146, %c96], %449 {strides = array<i32>} : memref<2x256xf32, #tpu.memory_space<vmem>>, vector<1x32xf32>,
    %451 = vector.extract_strided_slice %442 {offsets = [4, 0], sizes = [1, 32], strides = [1, 1]} : vector<16x32xf32> to vector<1x32xf32>
    %c0_147 = arith.constant 0 : index
    %c128 = arith.constant 128 : index
    %452 = vector.load %arg10[%c0_147, %c128] : memref<2x256xf32, #tpu.memory_space<vmem>>, vector<1x32xf32>
    tpu.vector_store %arg10[%c0_147, %c128], %451 {strides = array<i32>} : memref<2x256xf32, #tpu.memory_space<vmem>>, vector<1x32xf32>,
    %453 = vector.extract_strided_slice %442 {offsets = [5, 0], sizes = [1, 32], strides = [1, 1]} : vector<16x32xf32> to vector<1x32xf32>
    %c0_148 = arith.constant 0 : index
    %c160 = arith.constant 160 : index
    %454 = vector.load %arg10[%c0_148, %c160] : memref<2x256xf32, #tpu.memory_space<vmem>>, vector<1x32xf32>
    tpu.vector_store %arg10[%c0_148, %c160], %453 {strides = array<i32>} : memref<2x256xf32, #tpu.memory_space<vmem>>, vector<1x32xf32>,
    %455 = vector.extract_strided_slice %442 {offsets = [6, 0], sizes = [1, 32], strides = [1, 1]} : vector<16x32xf32> to vector<1x32xf32>
    %c0_149 = arith.constant 0 : index
    %c192 = arith.constant 192 : index
    %456 = vector.load %arg10[%c0_149, %c192] : memref<2x256xf32, #tpu.memory_space<vmem>>, vector<1x32xf32>
    tpu.vector_store %arg10[%c0_149, %c192], %455 {strides = array<i32>} : memref<2x256xf32, #tpu.memory_space<vmem>>, vector<1x32xf32>,
    %457 = vector.extract_strided_slice %442 {offsets = [7, 0], sizes = [1, 32], strides = [1, 1]} : vector<16x32xf32> to vector<1x32xf32>
    %c0_150 = arith.constant 0 : index
    %c224 = arith.constant 224 : index
    %458 = vector.load %arg10[%c0_150, %c224] : memref<2x256xf32, #tpu.memory_space<vmem>>, vector<1x32xf32>
    tpu.vector_store %arg10[%c0_150, %c224], %457 {strides = array<i32>} : memref<2x256xf32, #tpu.memory_space<vmem>>, vector<1x32xf32>,
    %459 = vector.extract_strided_slice %442 {offsets = [8, 0], sizes = [1, 32], strides = [1, 1]} : vector<16x32xf32> to vector<1x32xf32>
    %c1_151 = arith.constant 1 : index
    %c0_152 = arith.constant 0 : index
    %460 = vector.load %arg10[%c1_151, %c0_152] : memref<2x256xf32, #tpu.memory_space<vmem>>, vector<1x32xf32>
    tpu.vector_store %arg10[%c1_151, %c0_152], %459 {strides = array<i32>} : memref<2x256xf32, #tpu.memory_space<vmem>>, vector<1x32xf32>,
    %461 = vector.extract_strided_slice %442 {offsets = [9, 0], sizes = [1, 32], strides = [1, 1]} : vector<16x32xf32> to vector<1x32xf32>
    %c1_153 = arith.constant 1 : index
    %c32_154 = arith.constant 32 : index
    %462 = vector.load %arg10[%c1_153, %c32_154] : memref<2x256xf32, #tpu.memory_space<vmem>>, vector<1x32xf32>
    tpu.vector_store %arg10[%c1_153, %c32_154], %461 {strides = array<i32>} : memref<2x256xf32, #tpu.memory_space<vmem>>, vector<1x32xf32>,
    %463 = vector.extract_strided_slice %442 {offsets = [10, 0], sizes = [1, 32], strides = [1, 1]} : vector<16x32xf32> to vector<1x32xf32>
    %c1_155 = arith.constant 1 : index
    %c64_156 = arith.constant 64 : index
    %464 = vector.load %arg10[%c1_155, %c64_156] : memref<2x256xf32, #tpu.memory_space<vmem>>, vector<1x32xf32>
    tpu.vector_store %arg10[%c1_155, %c64_156], %463 {strides = array<i32>} : memref<2x256xf32, #tpu.memory_space<vmem>>, vector<1x32xf32>,
    %465 = vector.extract_strided_slice %442 {offsets = [11, 0], sizes = [1, 32], strides = [1, 1]} : vector<16x32xf32> to vector<1x32xf32>
    %c1_157 = arith.constant 1 : index
    %c96_158 = arith.constant 96 : index
    %466 = vector.load %arg10[%c1_157, %c96_158] : memref<2x256xf32, #tpu.memory_space<vmem>>, vector<1x32xf32>
    tpu.vector_store %arg10[%c1_157, %c96_158], %465 {strides = array<i32>} : memref<2x256xf32, #tpu.memory_space<vmem>>, vector<1x32xf32>,
    %467 = vector.extract_strided_slice %442 {offsets = [12, 0], sizes = [1, 32], strides = [1, 1]} : vector<16x32xf32> to vector<1x32xf32>
    %c1_159 = arith.constant 1 : index
    %c128_160 = arith.constant 128 : index
    %468 = vector.load %arg10[%c1_159, %c128_160] : memref<2x256xf32, #tpu.memory_space<vmem>>, vector<1x32xf32>
    tpu.vector_store %arg10[%c1_159, %c128_160], %467 {strides = array<i32>} : memref<2x256xf32, #tpu.memory_space<vmem>>, vector<1x32xf32>,
    %469 = vector.extract_strided_slice %442 {offsets = [13, 0], sizes = [1, 32], strides = [1, 1]} : vector<16x32xf32> to vector<1x32xf32>
    %c1_161 = arith.constant 1 : index
    %c160_162 = arith.constant 160 : index
    %470 = vector.load %arg10[%c1_161, %c160_162] : memref<2x256xf32, #tpu.memory_space<vmem>>, vector<1x32xf32>
    tpu.vector_store %arg10[%c1_161, %c160_162], %469 {strides = array<i32>} : memref<2x256xf32, #tpu.memory_space<vmem>>, vector<1x32xf32>,
    %471 = vector.extract_strided_slice %442 {offsets = [14, 0], sizes = [1, 32], strides = [1, 1]} : vector<16x32xf32> to vector<1x32xf32>
    %c1_163 = arith.constant 1 : index
    %c192_164 = arith.constant 192 : index
    %472 = vector.load %arg10[%c1_163, %c192_164] : memref<2x256xf32, #tpu.memory_space<vmem>>, vector<1x32xf32>
    tpu.vector_store %arg10[%c1_163, %c192_164], %471 {strides = array<i32>} : memref<2x256xf32, #tpu.memory_space<vmem>>, vector<1x32xf32>,
    %473 = vector.extract_strided_slice %442 {offsets = [15, 0], sizes = [1, 32], strides = [1, 1]} : vector<16x32xf32> to vector<1x32xf32>
    %c1_165 = arith.constant 1 : index
    %c224_166 = arith.constant 224 : index
    %474 = vector.load %arg10[%c1_165, %c224_166] : memref<2x256xf32, #tpu.memory_space<vmem>>, vector<1x32xf32>
    tpu.vector_store %arg10[%c1_165, %c224_166], %473 {strides = array<i32>} : memref<2x256xf32, #tpu.memory_space<vmem>>, vector<1x32xf32>,
    %c0_167 = arith.constant 0 : index
    %c0_168 = arith.constant 0 : index
    %475 = vector.load %arg10[%c0_167, %c0_168] : memref<2x256xf32, #tpu.memory_space<vmem>>, vector<2x256xf32>
    %c0_169 = arith.constant 0 : index
    %c0_170 = arith.constant 0 : index
    %476 = vector.load %arg7[%c0_169, %c0_170] : memref<256x16xf32, #tpu.memory_space<vmem>>, vector<256x16xf32>
    %cst_171 = arith.constant dense<0.000000e+00> : vector<2x16xf32>
    %477 = tpu.matmul %475, %476, %cst_171 {dimension_numbers = #tpu.dot_dimension_numbers<[1], [0], [0], [1], [0, 0, 1, 1], [], []>} : vector<2x256xf32>, vector<256x16xf32>, vector<2x16xf32> -> vector<2x16xf32>
    %c0_172 = arith.constant 0 : index
    %c0_173 = arith.constant 0 : index
    %478 = vector.load %arg8[%c0_172, %c0_173] : memref<1x16xf32, #tpu.memory_space<vmem>>, vector<1x16xf32>
    %479 = vector.broadcast %478 : vector<1x16xf32> to vector<2x16xf32>
    %480 = arith.addf %477, %479 : vector<2x16xf32>
    %c0_174 = arith.constant 0 : index
    %c0_175 = arith.constant 0 : index
    %481 = vector.load %arg9[%c0_174, %c0_175] : memref<2x16xf32, #tpu.memory_space<vmem>>, vector<2x16xf32>
    tpu.vector_store %arg9[%c0_174, %c0_175], %480 {strides = array<i32>} : memref<2x16xf32, #tpu.memory_space<vmem>>, vector<2x16xf32>,
    return
  }
}

</mosaic_0001>

<llo_original>
// kernel: tpu_custom_call.1
$region0: #{tpu_custom_call.1}
  #allocation0 [shape = 'u32[]', space=smem, size = 0x4, offset = 0x4, fixed_abs, tag = 'smem constant byte address 0x4 - core index']
  #allocation1 [shape = 'u32[144,128]{1,0:T(1,128)}', space=vmem, size = 0x12000, scoped, tag = 'internal scratch']
  #allocation2 [shape = 'f32[2,256]{1,0:T(2,128)}', space=vmem, size = 0x800, scoped, tag = 'scratch operand']
  %s0 = inlined_call_operand.vmem [shape: f32[16,5], index: 0, kind: input, shape index: {}]
  %s1 = inlined_call_operand.vmem [shape: f32[5,32], index: 1, kind: input, shape index: {}]
  %s2 = inlined_call_operand.vmem [shape: f32[16,32], index: 2, kind: input, shape index: {}]
  %s3 = inlined_call_operand.vmem [shape: f32[2,32,128], index: 3, kind: input, shape index: {}]
  %s4 = inlined_call_operand.vmem [shape: f32[2,3,128], index: 4, kind: input, shape index: {}]
  %s5 = inlined_call_operand.vmem [shape: f32[2,32,64], index: 5, kind: input, shape index: {}]
  %s6 = inlined_call_operand.vmem [shape: f32[2,64,32], index: 6, kind: input, shape index: {}]
  %s7 = inlined_call_operand.vmem [shape: f32[256,16], index: 7, kind: input, shape index: {}]
  %s8 = inlined_call_operand.vmem [shape: f32[1,16], index: 8, kind: input, shape index: {}]
  %s9 = inlined_call_operand.hbm [shape: f32[2,16], index: 9, kind: output, shape index: {}]
  %s10 = sld [smem:[#allocation0]]
  $region46: #{tpu_custom_call.1} parent=0
    _
  %s12 = ssub.s32 1, %s10
  %s13 = scalar_select 0, %s12, %s10
  $region1: #{tpu_custom_call.1} parent=0
    #allocation3 [shape = 'u8[1024]{0}', space=vmem, size = 0x400, scoped, tag = 'output window, operand 0, single buffered']
    #allocation4 [shape = 's32[1]{0}', space=sflag, size = 0x4, scoped, tag = 'scoped memory for tpu_custom_call.1']
    %14 = vsyncpa [#allocation4], 0
    // Predicated region
    $region2: #{tpu_custom_call.1} parent=1 // pred_check
      _
    $region3: #{tpu_custom_call.1} parent=1 // pred_check_branch
      %16 = sbr.rel (0) target = $region5
    $region4: #{tpu_custom_call.1} parent=1 // pred_region
      _
    $region5: #{tpu_custom_call.1} parent=1 // pred_fallthru
      _
    // Predicated region
    $region6: #{tpu_custom_call.1} parent=1 // pred_check
      _
    $region7: #{tpu_custom_call.1} parent=1 // pred_check_branch
      %18 = sbr.rel (0) target = $region9
    $region8: #{tpu_custom_call.1} parent=1 // pred_region
      _
    $region9: #{tpu_custom_call.1} parent=1 // pred_fallthru
      _
    // Predicated region
    $region10: #{tpu_custom_call.1} parent=1 // pred_check
      _
    $region11: #{tpu_custom_call.1} parent=1 // pred_check_branch
      %20 = sbr.rel (0) target = $region13
    $region12: #{tpu_custom_call.1} parent=1 // pred_region
      _
    $region13: #{tpu_custom_call.1} parent=1 // pred_fallthru
      _
    // Predicated region
    $region14: #{tpu_custom_call.1} parent=1 // pred_check
      _
    $region15: #{tpu_custom_call.1} parent=1 // pred_check_branch
      %22 = sbr.rel (0) target = $region17
    $region16: #{tpu_custom_call.1} parent=1 // pred_region
      _
    $region17: #{tpu_custom_call.1} parent=1 // pred_fallthru
      _
    // Predicated region
    $region18: #{tpu_custom_call.1} parent=1 // pred_check
      _
    $region19: #{tpu_custom_call.1} parent=1 // pred_check_branch
      %24 = sbr.rel (0) target = $region21
    $region20: #{tpu_custom_call.1} parent=1 // pred_region
      _
    $region21: #{tpu_custom_call.1} parent=1 // pred_fallthru
      _
    // Predicated region
    $region22: #{tpu_custom_call.1} parent=1 // pred_check
      _
    $region23: #{tpu_custom_call.1} parent=1 // pred_check_branch
      %26 = sbr.rel (0) target = $region25
    $region24: #{tpu_custom_call.1} parent=1 // pred_region
      _
    $region25: #{tpu_custom_call.1} parent=1 // pred_fallthru
      _
    // Predicated region
    $region26: #{tpu_custom_call.1} parent=1 // pred_check
      _
    $region27: #{tpu_custom_call.1} parent=1 // pred_check_branch
      %28 = sbr.rel (0) target = $region29
    $region28: #{tpu_custom_call.1} parent=1 // pred_region
      _
    $region29: #{tpu_custom_call.1} parent=1 // pred_fallthru
      _
    // Predicated region
    $region30: #{tpu_custom_call.1} parent=1 // pred_check
      _
    $region31: #{tpu_custom_call.1} parent=1 // pred_check_branch
      %30 = sbr.rel (0) target = $region33
    $region32: #{tpu_custom_call.1} parent=1 // pred_region
      _
    $region33: #{tpu_custom_call.1} parent=1 // pred_fallthru
      _
    // Predicated region
    $region34: #{tpu_custom_call.1} parent=1 // pred_check
      _
    $region35: #{tpu_custom_call.1} parent=1 // pred_check_branch
      %32 = sbr.rel (0) target = $region37
    $region36: #{tpu_custom_call.1} parent=1 // pred_region
      _
    $region37: #{tpu_custom_call.1} parent=1 // pred_fallthru
      _
    %v33 = vld [vmem:[%s0] sm:$0xff]
    %v34 = vld [vmem:[%s0 + $0x8] sm:$0xff]
    %v35 = vld [vmem:[%s1] sm:$0x1f]
    %v36 = vld [vmem:[%s2] sm:$0xff]
    %v37 = vld [vmem:[%s2 + $0x8] sm:$0xff]
    %vm38 = vcmask 39936
    %v40 = vsel %vm38, %v33, 0
    %v43 = vsel %vm38, %v34, 0
    %vm45 = vcmask 1044480
    %v47 = vsel %vm45, %v35, 0
    %49 = vmatprep.subr.mxu0 0.0
    %50 = vmatpush1.msra.mxu0 %v47
    %51 = vmatprep.subr.mxu0 0.0
    %52 = vmatpush1.msra.mxu0 0.0
    %53 = vmatprep.subr.mxu0 0.0
    %54 = vmatpush1.msra.mxu0 0.0
    %55 = vmatprep.subr.mxu0 0.0
    %56 = vmatpush1.msra.mxu0 0.0
    %57 = vmatprep.subr.mxu0 0.0
    %58 = vmatpush1.msra.mxu0 0.0
    %59 = vmatprep.subr.mxu0 0.0
    %60 = vmatpush1.msra.mxu0 0.0
    %61 = vmatprep.subr.mxu0 0.0
    %62 = vmatpush1.msra.mxu0 0.0
    %63 = vmatprep.subr.mxu0 0.0
    %64 = vmatpush1.msra.mxu0 0.0
    %65 = vmatprep.subr.mxu0 0.0
    %66 = vmatpush1.msra.mxu0 0.0
    %67 = vmatprep.subr.mxu0 0.0
    %68 = vmatpush1.msra.mxu0 0.0
    %69 = vmatprep.subr.mxu0 0.0
    %70 = vmatpush1.msra.mxu0 0.0
    %71 = vmatprep.subr.mxu0 0.0
    %72 = vmatpush1.msra.mxu0 0.0
    %73 = vmatprep.subr.mxu0 0.0
    %74 = vmatpush1.msra.mxu0 0.0
    %75 = vmatprep.subr.mxu0 0.0
    %76 = vmatpush1.msra.mxu0 0.0
    %77 = vmatprep.subr.mxu0 0.0
    %78 = vmatpush1.msra.mxu0 0.0
    %79 = vmatprep.subr.mxu0 0.0
    %80 = vmatpush1.msra.mxu0 0.0
    %81 = vmatprep.subr.mxu0 0.0
    %82 = vmatpush1.msra.mxu0 0.0
    %83 = vmatprep.subr.mxu0 0.0
    %84 = vmatpush1.msra.mxu0 0.0
    %85 = vmatprep.subr.mxu0 0.0
    %86 = vmatpush1.msra.mxu0 0.0
    %87 = vmatprep.subr.mxu0 0.0
    %88 = vmatpush1.msra.mxu0 0.0
    %89 = vmatprep.subr.mxu0 0.0
    %90 = vmatpush1.msra.mxu0 0.0
    %91 = vmatprep.subr.mxu0 0.0
    %92 = vmatpush1.msra.mxu0 0.0
    %93 = vmatprep.subr.mxu0 0.0
    %94 = vmatpush1.msra.mxu0 0.0
    %95 = vmatprep.subr.mxu0 0.0
    %96 = vmatpush1.msra.mxu0 0.0
    %97 = vmatprep.subr.mxu0 0.0
    %98 = vmatpush1.msra.mxu0 0.0
    %99 = vmatprep.subr.mxu0 0.0
    %100 = vmatpush1.msra.mxu0 0.0
    %101 = vmatprep.subr.mxu0 0.0
    %102 = vmatpush1.msra.mxu0 0.0
    %103 = vmatprep.subr.mxu0 0.0
    %104 = vmatpush1.msra.mxu0 0.0
    %105 = vmatprep.subr.mxu0 0.0
    %106 = vmatpush1.msra.mxu0 0.0
    %107 = vmatprep.subr.mxu0 0.0
    %108 = vmatpush1.msra.mxu0 0.0
    %109 = vmatprep.subr.mxu0 0.0
    %110 = vmatpush1.msra.mxu0 0.0
    %111 = vmatprep.subr.mxu0 0.0
    %112 = vmatpush1.msra.mxu0 0.0
    %113 = vmatprep.mubr.f32.mxu0 0.0
    %114 = vmatmul.mubr.f32.gmra.mrb[0].mxu0 %v40
    %v115 = vpop.f32.mrb[0].mxu0
    %v116 = vadd.f32 %v36, %v115
    %v117 = vpop.f32.mrb[0].mxu0
    %118 = vmatprep.mubr.f32.mxu0 0.0
    %119 = vmatmul.mubr.f32.gmra.mrb[0].mxu0 %v43
    %v120 = vpop.f32.mrb[0].mxu0
    %v121 = vadd.f32 %v37, %v120
    %v122 = vpop.f32.mrb[0].mxu0
    %123 = vdwg.mxu0
    %v124 = vld [vmem:[%s3] sm:$0xff]
    %v125 = vld [vmem:[%s3 + $0x8] sm:$0xff]
    %v126 = vld [vmem:[%s3 + $0x10] sm:$0xff]
    %v127 = vld [vmem:[%s3 + $0x18] sm:$0xff]
    %v128 = vld [vmem:[%s4] sm:$0x7]
    %vm129 = vcmask 261120
    %v130 = vsel %vm129, %v116, 0.0
    %131 = vadd.xlane.f32.xlu0 %v130
    %v132 = vpop.xlane.xlu0 %131
    %v133 = vsel %vm129, %v121, 0.0
    %134 = vadd.xlane.f32.xlu0 %v133
    %v135 = vpop.xlane.xlu0 %134
    %v136 = vrcp.pop 32.0
    %v137 = vmul.f32 %v132, %v136
    %v138 = vmul.f32 %v135, %v136
    %v139 = vsub.f32 %v116, %v137
    %v140 = vsub.f32 %v121, %v138
    %v141 = vmul.f32 %v139, %v139
    %v142 = vmul.f32 %v140, %v140
    %v143 = vsel %vm129, %v141, 0.0
    %144 = vadd.xlane.f32.xlu0 %v143
    %v145 = vpop.xlane.xlu0 %144
    %v146 = vsel %vm129, %v142, 0.0
    %147 = vadd.xlane.f32.xlu0 %v146
    %v148 = vpop.xlane.xlu0 %147
    %v149 = vmul.f32 %v145, %v136
    %v150 = vmul.f32 %v148, %v136
    %v151 = vadd.f32 %v149, 1e-05
    %v152 = vadd.f32 %v150, 1e-05
    %v153 = vrsqrt.pop %v151
    %v154 = vrsqrt.pop %v152
    %v155 = vmul.f32 %v139, %v153
    %v156 = vmul.f32 %v140, %v154
    %v157 = vlaneseq
    %v158 = vshrl.u32 %v157, 7
    %v159 = vsub.s32 1, %v158
    %v160 = vrot.slane %v128, %v159
    %v161 = vmul.f32 %v155, %v160
    %v162 = vmul.f32 %v156, %v160
    %164 = vrot.lane.b32.xlu0 %v160, 96
    %v165 = vpop.permute.xlu0 %164
    %v167 = vadd.f32 %v161, %v165
    %v168 = vadd.f32 %v162, %v165
    %v169 = vlaneseq
    %v170 = vshrl.u32 %v169, 7
    %v171 = vsub.s32 0, %v170
    %v172 = vrot.slane %v128, %v171
    %v174 = vsel %vm129, %v167, 0
    %v177 = vsel %vm129, %v168, 0
    %179 = vmatprep.subr.mxu0 0.0
    %180 = vmatpush1.msra.mxu0 %v124
    %181 = vmatprep.subr.mxu0 0.0
    %182 = vmatpush1.msra.mxu0 %v125
    %183 = vmatprep.subr.mxu0 0.0
    %184 = vmatpush1.msra.mxu0 %v126
    %185 = vmatprep.subr.mxu0 0.0
    %186 = vmatpush1.msra.mxu0 %v127
    %187 = vmatprep.subr.mxu0 0.0
    %188 = vmatpush1.msra.mxu0 0.0
    %189 = vmatprep.subr.mxu0 0.0
    %190 = vmatpush1.msra.mxu0 0.0
    %191 = vmatprep.subr.mxu0 0.0
    %192 = vmatpush1.msra.mxu0 0.0
    %193 = vmatprep.subr.mxu0 0.0
    %194 = vmatpush1.msra.mxu0 0.0
    %195 = vmatprep.subr.mxu0 0.0
    %196 = vmatpush1.msra.mxu0 0.0
    %197 = vmatprep.subr.mxu0 0.0
    %198 = vmatpush1.msra.mxu0 0.0
    %199 = vmatprep.subr.mxu0 0.0
    %200 = vmatpush1.msra.mxu0 0.0
    %201 = vmatprep.subr.mxu0 0.0
    %202 = vmatpush1.msra.mxu0 0.0
    %203 = vmatprep.subr.mxu0 0.0
    %204 = vmatpush1.msra.mxu0 0.0
    %205 = vmatprep.subr.mxu0 0.0
    %206 = vmatpush1.msra.mxu0 0.0
    %207 = vmatprep.subr.mxu0 0.0
    %208 = vmatpush1.msra.mxu0 0.0
    %209 = vmatprep.subr.mxu0 0.0
    %210 = vmatpush1.msra.mxu0 0.0
    %211 = vmatprep.subr.mxu0 0.0
    %212 = vmatpush1.msra.mxu0 0.0
    %213 = vmatprep.subr.mxu0 0.0
    %214 = vmatpush1.msra.mxu0 0.0
    %215 = vmatprep.subr.mxu0 0.0
    %216 = vmatpush1.msra.mxu0 0.0
    %217 = vmatprep.subr.mxu0 0.0
    %218 = vmatpush1.msra.mxu0 0.0
    %219 = vmatprep.subr.mxu0 0.0
    %220 = vmatpush1.msra.mxu0 0.0
    %221 = vmatprep.subr.mxu0 0.0
    %222 = vmatpush1.msra.mxu0 0.0
    %223 = vmatprep.subr.mxu0 0.0
    %224 = vmatpush1.msra.mxu0 0.0
    %225 = vmatprep.subr.mxu0 0.0
    %226 = vmatpush1.msra.mxu0 0.0
    %227 = vmatprep.subr.mxu0 0.0
    %228 = vmatpush1.msra.mxu0 0.0
    %229 = vmatprep.subr.mxu0 0.0
    %230 = vmatpush1.msra.mxu0 0.0
    %231 = vmatprep.subr.mxu0 0.0
    %232 = vmatpush1.msra.mxu0 0.0
    %233 = vmatprep.subr.mxu0 0.0
    %234 = vmatpush1.msra.mxu0 0.0
    %235 = vmatprep.subr.mxu0 0.0
    %236 = vmatpush1.msra.mxu0 0.0
    %237 = vmatprep.subr.mxu0 0.0
    %238 = vmatpush1.msra.mxu0 0.0
    %239 = vmatprep.subr.mxu0 0.0
    %240 = vmatpush1.msra.mxu0 0.0
    %241 = vmatprep.subr.mxu0 0.0
    %242 = vmatpush1.msra.mxu0 0.0
    %243 = vmatprep.mubr.f32.mxu0 0.0
    %244 = vmatmul.mubr.f32.gmra.mrb[0].mxu0 %v174
    %v245 = vpop.f32.mrb[0].mxu0
    %v246 = vadd.f32 %v172, %v245
    %v247 = vpop.f32.mrb[0].mxu0
    %248 = vmatprep.mubr.f32.mxu0 0.0
    %249 = vmatmul.mubr.f32.gmra.mrb[0].mxu0 %v177
    %v250 = vpop.f32.mrb[0].mxu0
    %v251 = vadd.f32 %v172, %v250
    %v252 = vpop.f32.mrb[0].mxu0
    %253 = vdwg.mxu0
    %255 = vrot.lane.b32.xlu0 %v246, 96
    %v256 = vpop.permute.xlu0 %255
    %vm257 = vcmask 64512
    %v258 = vsel %vm257, %v246, 0
    %v260 = vsel %vm257, %v256, 0
    %262 = vmatprep.subr.mxu0 0.0
    %263 = vmatpush1.xpose.msra.mxu0 %v260
    %264 = vmatprep.subr.mxu0 0.0
    %265 = vmatpush1.xpose.msra.mxu0 0.0
    %266 = vmatprep.subr.mxu0 0.0
    %267 = vmatpush1.xpose.msra.mxu0 0.0
    %268 = vmatprep.subr.mxu0 0.0
    %269 = vmatpush1.xpose.msra.mxu0 0.0
    %270 = vmatprep.subr.mxu0 0.0
    %271 = vmatpush1.xpose.msra.mxu0 0.0
    %272 = vmatprep.subr.mxu0 0.0
    %273 = vmatpush1.xpose.msra.mxu0 0.0
    %274 = vmatprep.subr.mxu0 0.0
    %275 = vmatpush1.xpose.msra.mxu0 0.0
    %276 = vmatprep.subr.mxu0 0.0
    %277 = vmatpush1.xpose.msra.mxu0 0.0
    %278 = vmatprep.subr.mxu0 0.0
    %279 = vmatpush1.xpose.msra.mxu0 0.0
    %280 = vmatprep.subr.mxu0 0.0
    %281 = vmatpush1.xpose.msra.mxu0 0.0
    %282 = vmatprep.subr.mxu0 0.0
    %283 = vmatpush1.xpose.msra.mxu0 0.0
    %284 = vmatprep.subr.mxu0 0.0
    %285 = vmatpush1.xpose.msra.mxu0 0.0
    %286 = vmatprep.subr.mxu0 0.0
    %287 = vmatpush1.xpose.msra.mxu0 0.0
    %288 = vmatprep.subr.mxu0 0.0
    %289 = vmatpush1.xpose.msra.mxu0 0.0
    %290 = vmatprep.subr.mxu0 0.0
    %291 = vmatpush1.xpose.msra.mxu0 0.0
    %292 = vmatprep.subr.mxu0 0.0
    %293 = vmatpush1.xpose.msra.mxu0 0.0
    %294 = vmatprep.subr.mxu0 0.0
    %295 = vmatpush1.xpose.msra.mxu0 0.0
    %296 = vmatprep.subr.mxu0 0.0
    %297 = vmatpush1.xpose.msra.mxu0 0.0
    %298 = vmatprep.subr.mxu0 0.0
    %299 = vmatpush1.xpose.msra.mxu0 0.0
    %300 = vmatprep.subr.mxu0 0.0
    %301 = vmatpush1.xpose.msra.mxu0 0.0
    %302 = vmatprep.subr.mxu0 0.0
    %303 = vmatpush1.xpose.msra.mxu0 0.0
    %304 = vmatprep.subr.mxu0 0.0
    %305 = vmatpush1.xpose.msra.mxu0 0.0
    %306 = vmatprep.subr.mxu0 0.0
    %307 = vmatpush1.xpose.msra.mxu0 0.0
    %308 = vmatprep.subr.mxu0 0.0
    %309 = vmatpush1.xpose.msra.mxu0 0.0
    %310 = vmatprep.subr.mxu0 0.0
    %311 = vmatpush1.xpose.msra.mxu0 0.0
    %312 = vmatprep.subr.mxu0 0.0
    %313 = vmatpush1.xpose.msra.mxu0 0.0
    %314 = vmatprep.subr.mxu0 0.0
    %315 = vmatpush1.xpose.msra.mxu0 0.0
    %316 = vmatprep.subr.mxu0 0.0
    %317 = vmatpush1.xpose.msra.mxu0 0.0
    %318 = vmatprep.subr.mxu0 0.0
    %319 = vmatpush1.xpose.msra.mxu0 0.0
    %320 = vmatprep.subr.mxu0 0.0
    %321 = vmatpush1.xpose.msra.mxu0 0.0
    %322 = vmatprep.subr.mxu0 0.0
    %323 = vmatpush1.xpose.msra.mxu0 0.0
    %324 = vmatprep.subr.mxu0 0.0
    %325 = vmatpush1.xpose.msra.mxu0 0.0
    %326 = vmatprep.mubr.f32.mxu0 0.0
    %327 = vmatmul.mubr.f32.gmra.mrb[0].mxu0 %v258
    %v328 = vpop.f32.mrb[0].mxu0
    %v329 = vadd.f32 0.0, %v328
    %v330 = vpop.f32.mrb[0].mxu0
    %331 = vdwg.mxu0
    %v332 = vmul.f32 %v329, 0.35355338
    %v333 = vsel %vm257, %v332, -inf
    %334 = vmax.xlane.f32.xlu0 %v333
    %v335 = vpop.xlane.xlu0 %334
    %v336 = vsub.f32 %v332, %v335
    %v337 = vmul.f32 %v336, 1.442695
    %v338 = vpow.pop %v337
    %v339 = vsel %vm257, %v338, 0.0
    %340 = vadd.xlane.f32.xlu0 %v339
    %v341 = vpop.xlane.xlu0 %340
    %v342 = vrcp.pop %v341
    %v343 = vmul.f32 %v338, %v342
    %344 = vrot.lane.b32.xlu0 %v246, 64
    %v345 = vpop.permute.xlu0 %344
    %v348 = vsel %vm257, %v343, 0
    %350 = vmatprep.subr.mxu0 0.0
    %351 = vmatpush1.msra.mxu0 %v345
    %352 = vmatprep.subr.mxu0 0.0
    %353 = vmatpush1.msra.mxu0 0.0
    %354 = vmatprep.subr.mxu0 0.0
    %355 = vmatpush1.msra.mxu0 0.0
    %356 = vmatprep.subr.mxu0 0.0
    %357 = vmatpush1.msra.mxu0 0.0
    %358 = vmatprep.subr.mxu0 0.0
    %359 = vmatpush1.msra.mxu0 0.0
    %360 = vmatprep.subr.mxu0 0.0
    %361 = vmatpush1.msra.mxu0 0.0
    %362 = vmatprep.subr.mxu0 0.0
    %363 = vmatpush1.msra.mxu0 0.0
    %364 = vmatprep.subr.mxu0 0.0
    %365 = vmatpush1.msra.mxu0 0.0
    %366 = vmatprep.subr.mxu0 0.0
    %367 = vmatpush1.msra.mxu0 0.0
    %368 = vmatprep.subr.mxu0 0.0
    %369 = vmatpush1.msra.mxu0 0.0
    %370 = vmatprep.subr.mxu0 0.0
    %371 = vmatpush1.msra.mxu0 0.0
    %372 = vmatprep.subr.mxu0 0.0
    %373 = vmatpush1.msra.mxu0 0.0
    %374 = vmatprep.subr.mxu0 0.0
    %375 = vmatpush1.msra.mxu0 0.0
    %376 = vmatprep.subr.mxu0 0.0
    %377 = vmatpush1.msra.mxu0 0.0
    %378 = vmatprep.subr.mxu0 0.0
    %379 = vmatpush1.msra.mxu0 0.0
    %380 = vmatprep.subr.mxu0 0.0
    %381 = vmatpush1.msra.mxu0 0.0
    %382 = vmatprep.subr.mxu0 0.0
    %383 = vmatpush1.msra.mxu0 0.0
    %384 = vmatprep.subr.mxu0 0.0
    %385 = vmatpush1.msra.mxu0 0.0
    %386 = vmatprep.subr.mxu0 0.0
    %387 = vmatpush1.msra.mxu0 0.0
    %388 = vmatprep.subr.mxu0 0.0
    %389 = vmatpush1.msra.mxu0 0.0
    %390 = vmatprep.subr.mxu0 0.0
    %391 = vmatpush1.msra.mxu0 0.0
    %392 = vmatprep.subr.mxu0 0.0
    %393 = vmatpush1.msra.mxu0 0.0
    %394 = vmatprep.subr.mxu0 0.0
    %395 = vmatpush1.msra.mxu0 0.0
    %396 = vmatprep.subr.mxu0 0.0
    %397 = vmatpush1.msra.mxu0 0.0
    %398 = vmatprep.subr.mxu0 0.0
    %399 = vmatpush1.msra.mxu0 0.0
    %400 = vmatprep.subr.mxu0 0.0
    %401 = vmatpush1.msra.mxu0 0.0
    %402 = vmatprep.subr.mxu0 0.0
    %403 = vmatpush1.msra.mxu0 0.0
    %404 = vmatprep.subr.mxu0 0.0
    %405 = vmatpush1.msra.mxu0 0.0
    %406 = vmatprep.subr.mxu0 0.0
    %407 = vmatpush1.msra.mxu0 0.0
    %408 = vmatprep.subr.mxu0 0.0
    %409 = vmatpush1.msra.mxu0 0.0
    %410 = vmatprep.subr.mxu0 0.0
    %411 = vmatpush1.msra.mxu0 0.0
    %412 = vmatprep.subr.mxu0 0.0
    %413 = vmatpush1.msra.mxu0 0.0
    %414 = vmatprep.mubr.f32.mxu0 0.0
    %415 = vmatmul.mubr.f32.gmra.mrb[0].mxu0 %v348
    %v416 = vpop.f32.mrb[0].mxu0
    %v417 = vadd.f32 0.0, %v416
    %v418 = vpop.f32.mrb[0].mxu0
    %419 = vdwg.mxu0
    %420 = vrot.lane.b32.xlu0 %v246, 120
    %v421 = vpop.permute.xlu0 %420
    %422 = vrot.lane.b32.xlu0 %v246, 88
    %v423 = vpop.permute.xlu0 %422
    %v424 = vsel %vm257, %v421, 0
    %v426 = vsel %vm257, %v423, 0
    %428 = vmatprep.subr.mxu0 0.0
    %429 = vmatpush1.xpose.msra.mxu0 %v426
    %430 = vmatprep.subr.mxu0 0.0
    %431 = vmatpush1.xpose.msra.mxu0 0.0
    %432 = vmatprep.subr.mxu0 0.0
    %433 = vmatpush1.xpose.msra.mxu0 0.0
    %434 = vmatprep.subr.mxu0 0.0
    %435 = vmatpush1.xpose.msra.mxu0 0.0
    %436 = vmatprep.subr.mxu0 0.0
    %437 = vmatpush1.xpose.msra.mxu0 0.0
    %438 = vmatprep.subr.mxu0 0.0
    %439 = vmatpush1.xpose.msra.mxu0 0.0
    %440 = vmatprep.subr.mxu0 0.0
    %441 = vmatpush1.xpose.msra.mxu0 0.0
    %442 = vmatprep.subr.mxu0 0.0
    %443 = vmatpush1.xpose.msra.mxu0 0.0
    %444 = vmatprep.subr.mxu0 0.0
    %445 = vmatpush1.xpose.msra.mxu0 0.0
    %446 = vmatprep.subr.mxu0 0.0
    %447 = vmatpush1.xpose.msra.mxu0 0.0
    %448 = vmatprep.subr.mxu0 0.0
    %449 = vmatpush1.xpose.msra.mxu0 0.0
    %450 = vmatprep.subr.mxu0 0.0
    %451 = vmatpush1.xpose.msra.mxu0 0.0
    %452 = vmatprep.subr.mxu0 0.0
    %453 = vmatpush1.xpose.msra.mxu0 0.0
    %454 = vmatprep.subr.mxu0 0.0
    %455 = vmatpush1.xpose.msra.mxu0 0.0
    %456 = vmatprep.subr.mxu0 0.0
    %457 = vmatpush1.xpose.msra.mxu0 0.0
    %458 = vmatprep.subr.mxu0 0.0
    %459 = vmatpush1.xpose.msra.mxu0 0.0
    %460 = vmatprep.subr.mxu0 0.0
    %461 = vmatpush1.xpose.msra.mxu0 0.0
    %462 = vmatprep.subr.mxu0 0.0
    %463 = vmatpush1.xpose.msra.mxu0 0.0
    %464 = vmatprep.subr.mxu0 0.0
    %465 = vmatpush1.xpose.msra.mxu0 0.0
    %466 = vmatprep.subr.mxu0 0.0
    %467 = vmatpush1.xpose.msra.mxu0 0.0
    %468 = vmatprep.subr.mxu0 0.0
    %469 = vmatpush1.xpose.msra.mxu0 0.0
    %470 = vmatprep.subr.mxu0 0.0
    %471 = vmatpush1.xpose.msra.mxu0 0.0
    %472 = vmatprep.subr.mxu0 0.0
    %473 = vmatpush1.xpose.msra.mxu0 0.0
    %474 = vmatprep.subr.mxu0 0.0
    %475 = vmatpush1.xpose.msra.mxu0 0.0
    %476 = vmatprep.subr.mxu0 0.0
    %477 = vmatpush1.xpose.msra.mxu0 0.0
    %478 = vmatprep.subr.mxu0 0.0
    %479 = vmatpush1.xpose.msra.mxu0 0.0
    %480 = vmatprep.subr.mxu0 0.0
    %481 = vmatpush1.xpose.msra.mxu0 0.0
    %482 = vmatprep.subr.mxu0 0.0
    %483 = vmatpush1.xpose.msra.mxu0 0.0
    %484 = vmatprep.subr.mxu0 0.0
    %485 = vmatpush1.xpose.msra.mxu0 0.0
    %486 = vmatprep.subr.mxu0 0.0
    %487 = vmatpush1.xpose.msra.mxu0 0.0
    %488 = vmatprep.subr.mxu0 0.0
    %489 = vmatpush1.xpose.msra.mxu0 0.0
    %490 = vmatprep.subr.mxu0 0.0
    %491 = vmatpush1.xpose.msra.mxu0 0.0
    %492 = vmatprep.mubr.f32.mxu0 0.0
    %493 = vmatmul.mubr.f32.gmra.mrb[0].mxu0 %v424
    %v494 = vpop.f32.mrb[0].mxu0
    %v495 = vadd.f32 0.0, %v494
    %v496 = vpop.f32.mrb[0].mxu0
    %497 = vdwg.mxu0
    %v498 = vmul.f32 %v495, 0.35355338
    %v499 = vsel %vm257, %v498, -inf
    %500 = vmax.xlane.f32.xlu0 %v499
    %v501 = vpop.xlane.xlu0 %500
    %v502 = vsub.f32 %v498, %v501
    %v503 = vmul.f32 %v502, 1.442695
    %v504 = vpow.pop %v503
    %v505 = vsel %vm257, %v504, 0.0
    %506 = vadd.xlane.f32.xlu0 %v505
    %v507 = vpop.xlane.xlu0 %506
    %v508 = vrcp.pop %v507
    %v509 = vmul.f32 %v504, %v508
    %510 = vrot.lane.b32.xlu0 %v246, 56
    %v511 = vpop.permute.xlu0 %510
    %v514 = vsel %vm257, %v509, 0
    %516 = vmatprep.subr.mxu0 0.0
    %517 = vmatpush1.msra.mxu0 %v511
    %518 = vmatprep.subr.mxu0 0.0
    %519 = vmatpush1.msra.mxu0 0.0
    %520 = vmatprep.subr.mxu0 0.0
    %521 = vmatpush1.msra.mxu0 0.0
    %522 = vmatprep.subr.mxu0 0.0
    %523 = vmatpush1.msra.mxu0 0.0
    %524 = vmatprep.subr.mxu0 0.0
    %525 = vmatpush1.msra.mxu0 0.0
    %526 = vmatprep.subr.mxu0 0.0
    %527 = vmatpush1.msra.mxu0 0.0
    %528 = vmatprep.subr.mxu0 0.0
    %529 = vmatpush1.msra.mxu0 0.0
    %530 = vmatprep.subr.mxu0 0.0
    %531 = vmatpush1.msra.mxu0 0.0
    %532 = vmatprep.subr.mxu0 0.0
    %533 = vmatpush1.msra.mxu0 0.0
    %534 = vmatprep.subr.mxu0 0.0
    %535 = vmatpush1.msra.mxu0 0.0
    %536 = vmatprep.subr.mxu0 0.0
    %537 = vmatpush1.msra.mxu0 0.0
    %538 = vmatprep.subr.mxu0 0.0
    %539 = vmatpush1.msra.mxu0 0.0
    %540 = vmatprep.subr.mxu0 0.0
    %541 = vmatpush1.msra.mxu0 0.0
    %542 = vmatprep.subr.mxu0 0.0
    %543 = vmatpush1.msra.mxu0 0.0
    %544 = vmatprep.subr.mxu0 0.0
    %545 = vmatpush1.msra.mxu0 0.0
    %546 = vmatprep.subr.mxu0 0.0
    %547 = vmatpush1.msra.mxu0 0.0
    %548 = vmatprep.subr.mxu0 0.0
    %549 = vmatpush1.msra.mxu0 0.0
    %550 = vmatprep.subr.mxu0 0.0
    %551 = vmatpush1.msra.mxu0 0.0
    %552 = vmatprep.subr.mxu0 0.0
    %553 = vmatpush1.msra.mxu0 0.0
    %554 = vmatprep.subr.mxu0 0.0
    %555 = vmatpush1.msra.mxu0 0.0
    %556 = vmatprep.subr.mxu0 0.0
    %557 = vmatpush1.msra.mxu0 0.0
    %558 = vmatprep.subr.mxu0 0.0
    %559 = vmatpush1.msra.mxu0 0.0
    %560 = vmatprep.subr.mxu0 0.0
    %561 = vmatpush1.msra.mxu0 0.0
    %562 = vmatprep.subr.mxu0 0.0
    %563 = vmatpush1.msra.mxu0 0.0
    %564 = vmatprep.subr.mxu0 0.0
    %565 = vmatpush1.msra.mxu0 0.0
    %566 = vmatprep.subr.mxu0 0.0
    %567 = vmatpush1.msra.mxu0 0.0
    %568 = vmatprep.subr.mxu0 0.0
    %569 = vmatpush1.msra.mxu0 0.0
    %570 = vmatprep.subr.mxu0 0.0
    %571 = vmatpush1.msra.mxu0 0.0
    %572 = vmatprep.subr.mxu0 0.0
    %573 = vmatpush1.msra.mxu0 0.0
    %574 = vmatprep.subr.mxu0 0.0
    %575 = vmatpush1.msra.mxu0 0.0
    %576 = vmatprep.subr.mxu0 0.0
    %577 = vmatpush1.msra.mxu0 0.0
    %578 = vmatprep.subr.mxu0 0.0
    %579 = vmatpush1.msra.mxu0 0.0
    %580 = vmatprep.mubr.f32.mxu0 0.0
    %581 = vmatmul.mubr.f32.gmra.mrb[0].mxu0 %v514
    %v582 = vpop.f32.mrb[0].mxu0
    %v583 = vadd.f32 0.0, %v582
    %v584 = vpop.f32.mrb[0].mxu0
    %585 = vdwg.mxu0
    %586 = vrot.lane.b32.xlu0 %v246, 112
    %v587 = vpop.permute.xlu0 %586
    %588 = vrot.lane.b32.xlu0 %v246, 80
    %v589 = vpop.permute.xlu0 %588
    %v590 = vsel %vm257, %v587, 0
    %v592 = vsel %vm257, %v589, 0
    %594 = vmatprep.subr.mxu0 0.0
    %595 = vmatpush1.xpose.msra.mxu0 %v592
    %596 = vmatprep.subr.mxu0 0.0
    %597 = vmatpush1.xpose.msra.mxu0 0.0
    %598 = vmatprep.subr.mxu0 0.0
    %599 = vmatpush1.xpose.msra.mxu0 0.0
    %600 = vmatprep.subr.mxu0 0.0
    %601 = vmatpush1.xpose.msra.mxu0 0.0
    %602 = vmatprep.subr.mxu0 0.0
    %603 = vmatpush1.xpose.msra.mxu0 0.0
    %604 = vmatprep.subr.mxu0 0.0
    %605 = vmatpush1.xpose.msra.mxu0 0.0
    %606 = vmatprep.subr.mxu0 0.0
    %607 = vmatpush1.xpose.msra.mxu0 0.0
    %608 = vmatprep.subr.mxu0 0.0
    %609 = vmatpush1.xpose.msra.mxu0 0.0
    %610 = vmatprep.subr.mxu0 0.0
    %611 = vmatpush1.xpose.msra.mxu0 0.0
    %612 = vmatprep.subr.mxu0 0.0
    %613 = vmatpush1.xpose.msra.mxu0 0.0
    %614 = vmatprep.subr.mxu0 0.0
    %615 = vmatpush1.xpose.msra.mxu0 0.0
    %616 = vmatprep.subr.mxu0 0.0
    %617 = vmatpush1.xpose.msra.mxu0 0.0
    %618 = vmatprep.subr.mxu0 0.0
    %619 = vmatpush1.xpose.msra.mxu0 0.0
    %620 = vmatprep.subr.mxu0 0.0
    %621 = vmatpush1.xpose.msra.mxu0 0.0
    %622 = vmatprep.subr.mxu0 0.0
    %623 = vmatpush1.xpose.msra.mxu0 0.0
    %624 = vmatprep.subr.mxu0 0.0
    %625 = vmatpush1.xpose.msra.mxu0 0.0
    %626 = vmatprep.subr.mxu0 0.0
    %627 = vmatpush1.xpose.msra.mxu0 0.0
    %628 = vmatprep.subr.mxu0 0.0
    %629 = vmatpush1.xpose.msra.mxu0 0.0
    %630 = vmatprep.subr.mxu0 0.0
    %631 = vmatpush1.xpose.msra.mxu0 0.0
    %632 = vmatprep.subr.mxu0 0.0
    %633 = vmatpush1.xpose.msra.mxu0 0.0
    %634 = vmatprep.subr.mxu0 0.0
    %635 = vmatpush1.xpose.msra.mxu0 0.0
    %636 = vmatprep.subr.mxu0 0.0
    %637 = vmatpush1.xpose.msra.mxu0 0.0
    %638 = vmatprep.subr.mxu0 0.0
    %639 = vmatpush1.xpose.msra.mxu0 0.0
    %640 = vmatprep.subr.mxu0 0.0
    %641 = vmatpush1.xpose.msra.mxu0 0.0
    %642 = vmatprep.subr.mxu0 0.0
    %643 = vmatpush1.xpose.msra.mxu0 0.0
    %644 = vmatprep.subr.mxu0 0.0
    %645 = vmatpush1.xpose.msra.mxu0 0.0
    %646 = vmatprep.subr.mxu0 0.0
    %647 = vmatpush1.xpose.msra.mxu0 0.0
    %648 = vmatprep.subr.mxu0 0.0
    %649 = vmatpush1.xpose.msra.mxu0 0.0
    %650 = vmatprep.subr.mxu0 0.0
    %651 = vmatpush1.xpose.msra.mxu0 0.0
    %652 = vmatprep.subr.mxu0 0.0
    %653 = vmatpush1.xpose.msra.mxu0 0.0
    %654 = vmatprep.subr.mxu0 0.0
    %655 = vmatpush1.xpose.msra.mxu0 0.0
    %656 = vmatprep.subr.mxu0 0.0
    %657 = vmatpush1.xpose.msra.mxu0 0.0
    %658 = vmatprep.mubr.f32.mxu0 0.0
    %659 = vmatmul.mubr.f32.gmra.mrb[0].mxu0 %v590
    %v660 = vpop.f32.mrb[0].mxu0
    %v661 = vadd.f32 0.0, %v660
    %v662 = vpop.f32.mrb[0].mxu0
    %663 = vdwg.mxu0
    %v664 = vmul.f32 %v661, 0.35355338
    %v665 = vsel %vm257, %v664, -inf
    %666 = vmax.xlane.f32.xlu0 %v665
    %v667 = vpop.xlane.xlu0 %666
    %v668 = vsub.f32 %v664, %v667
    %v669 = vmul.f32 %v668, 1.442695
    %v670 = vpow.pop %v669
    %v671 = vsel %vm257, %v670, 0.0
    %672 = vadd.xlane.f32.xlu0 %v671
    %v673 = vpop.xlane.xlu0 %672
    %v674 = vrcp.pop %v673
    %v675 = vmul.f32 %v670, %v674
    %676 = vrot.lane.b32.xlu0 %v246, 48
    %v677 = vpop.permute.xlu0 %676
    %v680 = vsel %vm257, %v675, 0
    %682 = vmatprep.subr.mxu0 0.0
    %683 = vmatpush1.msra.mxu0 %v677
    %684 = vmatprep.subr.mxu0 0.0
    %685 = vmatpush1.msra.mxu0 0.0
    %686 = vmatprep.subr.mxu0 0.0
    %687 = vmatpush1.msra.mxu0 0.0
    %688 = vmatprep.subr.mxu0 0.0
    %689 = vmatpush1.msra.mxu0 0.0
    %690 = vmatprep.subr.mxu0 0.0
    %691 = vmatpush1.msra.mxu0 0.0
    %692 = vmatprep.subr.mxu0 0.0
    %693 = vmatpush1.msra.mxu0 0.0
    %694 = vmatprep.subr.mxu0 0.0
    %695 = vmatpush1.msra.mxu0 0.0
    %696 = vmatprep.subr.mxu0 0.0
    %697 = vmatpush1.msra.mxu0 0.0
    %698 = vmatprep.subr.mxu0 0.0
    %699 = vmatpush1.msra.mxu0 0.0
    %700 = vmatprep.subr.mxu0 0.0
    %701 = vmatpush1.msra.mxu0 0.0
    %702 = vmatprep.subr.mxu0 0.0
    %703 = vmatpush1.msra.mxu0 0.0
    %704 = vmatprep.subr.mxu0 0.0
    %705 = vmatpush1.msra.mxu0 0.0
    %706 = vmatprep.subr.mxu0 0.0
    %707 = vmatpush1.msra.mxu0 0.0
    %708 = vmatprep.subr.mxu0 0.0
    %709 = vmatpush1.msra.mxu0 0.0
    %710 = vmatprep.subr.mxu0 0.0
    %711 = vmatpush1.msra.mxu0 0.0
    %712 = vmatprep.subr.mxu0 0.0
    %713 = vmatpush1.msra.mxu0 0.0
    %714 = vmatprep.subr.mxu0 0.0
    %715 = vmatpush1.msra.mxu0 0.0
    %716 = vmatprep.subr.mxu0 0.0
    %717 = vmatpush1.msra.mxu0 0.0
    %718 = vmatprep.subr.mxu0 0.0
    %719 = vmatpush1.msra.mxu0 0.0
    %720 = vmatprep.subr.mxu0 0.0
    %721 = vmatpush1.msra.mxu0 0.0
    %722 = vmatprep.subr.mxu0 0.0
    %723 = vmatpush1.msra.mxu0 0.0
    %724 = vmatprep.subr.mxu0 0.0
    %725 = vmatpush1.msra.mxu0 0.0
    %726 = vmatprep.subr.mxu0 0.0
    %727 = vmatpush1.msra.mxu0 0.0
    %728 = vmatprep.subr.mxu0 0.0
    %729 = vmatpush1.msra.mxu0 0.0
    %730 = vmatprep.subr.mxu0 0.0
    %731 = vmatpush1.msra.mxu0 0.0
    %732 = vmatprep.subr.mxu0 0.0
    %733 = vmatpush1.msra.mxu0 0.0
    %734 = vmatprep.subr.mxu0 0.0
    %735 = vmatpush1.msra.mxu0 0.0
    %736 = vmatprep.subr.mxu0 0.0
    %737 = vmatpush1.msra.mxu0 0.0
    %738 = vmatprep.subr.mxu0 0.0
    %739 = vmatpush1.msra.mxu0 0.0
    %740 = vmatprep.subr.mxu0 0.0
    %741 = vmatpush1.msra.mxu0 0.0
    %742 = vmatprep.subr.mxu0 0.0
    %743 = vmatpush1.msra.mxu0 0.0
    %744 = vmatprep.subr.mxu0 0.0
    %745 = vmatpush1.msra.mxu0 0.0
    %746 = vmatprep.mubr.f32.mxu0 0.0
    %747 = vmatmul.mubr.f32.gmra.mrb[0].mxu0 %v680
    %v748 = vpop.f32.mrb[0].mxu0
    %v749 = vadd.f32 0.0, %v748
    %v750 = vpop.f32.mrb[0].mxu0
    %751 = vdwg.mxu0
    %752 = vrot.lane.b32.xlu0 %v246, 104
    %v753 = vpop.permute.xlu0 %752
    %754 = vrot.lane.b32.xlu0 %v246, 72
    %v755 = vpop.permute.xlu0 %754
    %v756 = vsel %vm257, %v753, 0
    %v758 = vsel %vm257, %v755, 0
    %760 = vmatprep.subr.mxu0 0.0
    %761 = vmatpush1.xpose.msra.mxu0 %v758
    %762 = vmatprep.subr.mxu0 0.0
    %763 = vmatpush1.xpose.msra.mxu0 0.0
    %764 = vmatprep.subr.mxu0 0.0
    %765 = vmatpush1.xpose.msra.mxu0 0.0
    %766 = vmatprep.subr.mxu0 0.0
    %767 = vmatpush1.xpose.msra.mxu0 0.0
    %768 = vmatprep.subr.mxu0 0.0
    %769 = vmatpush1.xpose.msra.mxu0 0.0
    %770 = vmatprep.subr.mxu0 0.0
    %771 = vmatpush1.xpose.msra.mxu0 0.0
    %772 = vmatprep.subr.mxu0 0.0
    %773 = vmatpush1.xpose.msra.mxu0 0.0
    %774 = vmatprep.subr.mxu0 0.0
    %775 = vmatpush1.xpose.msra.mxu0 0.0
    %776 = vmatprep.subr.mxu0 0.0
    %777 = vmatpush1.xpose.msra.mxu0 0.0
    %778 = vmatprep.subr.mxu0 0.0
    %779 = vmatpush1.xpose.msra.mxu0 0.0
    %780 = vmatprep.subr.mxu0 0.0
    %781 = vmatpush1.xpose.msra.mxu0 0.0
    %782 = vmatprep.subr.mxu0 0.0
    %783 = vmatpush1.xpose.msra.mxu0 0.0
    %784 = vmatprep.subr.mxu0 0.0
    %785 = vmatpush1.xpose.msra.mxu0 0.0
    %786 = vmatprep.subr.mxu0 0.0
    %787 = vmatpush1.xpose.msra.mxu0 0.0
    %788 = vmatprep.subr.mxu0 0.0
    %789 = vmatpush1.xpose.msra.mxu0 0.0
    %790 = vmatprep.subr.mxu0 0.0
    %791 = vmatpush1.xpose.msra.mxu0 0.0
    %792 = vmatprep.subr.mxu0 0.0
    %793 = vmatpush1.xpose.msra.mxu0 0.0
    %794 = vmatprep.subr.mxu0 0.0
    %795 = vmatpush1.xpose.msra.mxu0 0.0
    %796 = vmatprep.subr.mxu0 0.0
    %797 = vmatpush1.xpose.msra.mxu0 0.0
    %798 = vmatprep.subr.mxu0 0.0
    %799 = vmatpush1.xpose.msra.mxu0 0.0
    %800 = vmatprep.subr.mxu0 0.0
    %801 = vmatpush1.xpose.msra.mxu0 0.0
    %802 = vmatprep.subr.mxu0 0.0
    %803 = vmatpush1.xpose.msra.mxu0 0.0
    %804 = vmatprep.subr.mxu0 0.0
    %805 = vmatpush1.xpose.msra.mxu0 0.0
    %806 = vmatprep.subr.mxu0 0.0
    %807 = vmatpush1.xpose.msra.mxu0 0.0
    %808 = vmatprep.subr.mxu0 0.0
    %809 = vmatpush1.xpose.msra.mxu0 0.0
    %810 = vmatprep.subr.mxu0 0.0
    %811 = vmatpush1.xpose.msra.mxu0 0.0
    %812 = vmatprep.subr.mxu0 0.0
    %813 = vmatpush1.xpose.msra.mxu0 0.0
    %814 = vmatprep.subr.mxu0 0.0
    %815 = vmatpush1.xpose.msra.mxu0 0.0
    %816 = vmatprep.subr.mxu0 0.0
    %817 = vmatpush1.xpose.msra.mxu0 0.0
    %818 = vmatprep.subr.mxu0 0.0
    %819 = vmatpush1.xpose.msra.mxu0 0.0
    %820 = vmatprep.subr.mxu0 0.0
    %821 = vmatpush1.xpose.msra.mxu0 0.0
    %822 = vmatprep.subr.mxu0 0.0
    %823 = vmatpush1.xpose.msra.mxu0 0.0
    %824 = vmatprep.mubr.f32.mxu0 0.0
    %825 = vmatmul.mubr.f32.gmra.mrb[0].mxu0 %v756
    %v826 = vpop.f32.mrb[0].mxu0
    %v827 = vadd.f32 0.0, %v826
    %v828 = vpop.f32.mrb[0].mxu0
    %829 = vdwg.mxu0
    %v830 = vmul.f32 %v827, 0.35355338
    %v831 = vsel %vm257, %v830, -inf
    %832 = vmax.xlane.f32.xlu0 %v831
    %v833 = vpop.xlane.xlu0 %832
    %v834 = vsub.f32 %v830, %v833
    %v835 = vmul.f32 %v834, 1.442695
    %v836 = vpow.pop %v835
    %v837 = vsel %vm257, %v836, 0.0
    %838 = vadd.xlane.f32.xlu0 %v837
    %v839 = vpop.xlane.xlu0 %838
    %v840 = vrcp.pop %v839
    %v841 = vmul.f32 %v836, %v840
    %842 = vrot.lane.b32.xlu0 %v246, 40
    %v843 = vpop.permute.xlu0 %842
    %v846 = vsel %vm257, %v841, 0
    %848 = vmatprep.subr.mxu0 0.0
    %849 = vmatpush1.msra.mxu0 %v843
    %850 = vmatprep.subr.mxu0 0.0
    %851 = vmatpush1.msra.mxu0 0.0
    %852 = vmatprep.subr.mxu0 0.0
    %853 = vmatpush1.msra.mxu0 0.0
    %854 = vmatprep.subr.mxu0 0.0
    %855 = vmatpush1.msra.mxu0 0.0
    %856 = vmatprep.subr.mxu0 0.0
    %857 = vmatpush1.msra.mxu0 0.0
    %858 = vmatprep.subr.mxu0 0.0
    %859 = vmatpush1.msra.mxu0 0.0
    %860 = vmatprep.subr.mxu0 0.0
    %861 = vmatpush1.msra.mxu0 0.0
    %862 = vmatprep.subr.mxu0 0.0
    %863 = vmatpush1.msra.mxu0 0.0
    %864 = vmatprep.subr.mxu0 0.0
    %865 = vmatpush1.msra.mxu0 0.0
    %866 = vmatprep.subr.mxu0 0.0
    %867 = vmatpush1.msra.mxu0 0.0
    %868 = vmatprep.subr.mxu0 0.0
    %869 = vmatpush1.msra.mxu0 0.0
    %870 = vmatprep.subr.mxu0 0.0
    %871 = vmatpush1.msra.mxu0 0.0
    %872 = vmatprep.subr.mxu0 0.0
    %873 = vmatpush1.msra.mxu0 0.0
    %874 = vmatprep.subr.mxu0 0.0
    %875 = vmatpush1.msra.mxu0 0.0
    %876 = vmatprep.subr.mxu0 0.0
    %877 = vmatpush1.msra.mxu0 0.0
    %878 = vmatprep.subr.mxu0 0.0
    %879 = vmatpush1.msra.mxu0 0.0
    %880 = vmatprep.subr.mxu0 0.0
    %881 = vmatpush1.msra.mxu0 0.0
    %882 = vmatprep.subr.mxu0 0.0
    %883 = vmatpush1.msra.mxu0 0.0
    %884 = vmatprep.subr.mxu0 0.0
    %885 = vmatpush1.msra.mxu0 0.0
    %886 = vmatprep.subr.mxu0 0.0
    %887 = vmatpush1.msra.mxu0 0.0
    %888 = vmatprep.subr.mxu0 0.0
    %889 = vmatpush1.msra.mxu0 0.0
    %890 = vmatprep.subr.mxu0 0.0
    %891 = vmatpush1.msra.mxu0 0.0
    %892 = vmatprep.subr.mxu0 0.0
    %893 = vmatpush1.msra.mxu0 0.0
    %894 = vmatprep.subr.mxu0 0.0
    %895 = vmatpush1.msra.mxu0 0.0
    %896 = vmatprep.subr.mxu0 0.0
    %897 = vmatpush1.msra.mxu0 0.0
    %898 = vmatprep.subr.mxu0 0.0
    %899 = vmatpush1.msra.mxu0 0.0
    %900 = vmatprep.subr.mxu0 0.0
    %901 = vmatpush1.msra.mxu0 0.0
    %902 = vmatprep.subr.mxu0 0.0
    %903 = vmatpush1.msra.mxu0 0.0
    %904 = vmatprep.subr.mxu0 0.0
    %905 = vmatpush1.msra.mxu0 0.0
    %906 = vmatprep.subr.mxu0 0.0
    %907 = vmatpush1.msra.mxu0 0.0
    %908 = vmatprep.subr.mxu0 0.0
    %909 = vmatpush1.msra.mxu0 0.0
    %910 = vmatprep.subr.mxu0 0.0
    %911 = vmatpush1.msra.mxu0 0.0
    %912 = vmatprep.mubr.f32.mxu0 0.0
    %913 = vmatmul.mubr.f32.gmra.mrb[0].mxu0 %v846
    %v914 = vpop.f32.mrb[0].mxu0
    %v915 = vadd.f32 0.0, %v914
    %v916 = vpop.f32.mrb[0].mxu0
    %917 = vdwg.mxu0
    %919 = vrot.lane.b32.xlu0 %v583, 8
    %v920 = vpop.permute.xlu0 %919
    %923 = vrot.lane.b32.xlu0 %v749, 16
    %v924 = vpop.permute.xlu0 %923
    %927 = vrot.lane.b32.xlu0 %v915, 24
    %v928 = vpop.permute.xlu0 %927
    %v930 = vsel %vm257, %v417, %v920
    %vm931 = vcmask 130048
    %v932 = vsel %vm931, %v930, %v924
    %vm933 = vcmask 195584
    %v934 = vsel %vm933, %v932, %v928
    %936 = vrot.lane.b32.xlu0 %v251, 96
    %v937 = vpop.permute.xlu0 %936
    %v938 = vsel %vm257, %v251, 0
    %v940 = vsel %vm257, %v937, 0
    %942 = vmatprep.subr.mxu0 0.0
    %943 = vmatpush1.xpose.msra.mxu0 %v940
    %944 = vmatprep.subr.mxu0 0.0
    %945 = vmatpush1.xpose.msra.mxu0 0.0
    %946 = vmatprep.subr.mxu0 0.0
    %947 = vmatpush1.xpose.msra.mxu0 0.0
    %948 = vmatprep.subr.mxu0 0.0
    %949 = vmatpush1.xpose.msra.mxu0 0.0
    %950 = vmatprep.subr.mxu0 0.0
    %951 = vmatpush1.xpose.msra.mxu0 0.0
    %952 = vmatprep.subr.mxu0 0.0
    %953 = vmatpush1.xpose.msra.mxu0 0.0
    %954 = vmatprep.subr.mxu0 0.0
    %955 = vmatpush1.xpose.msra.mxu0 0.0
    %956 = vmatprep.subr.mxu0 0.0
    %957 = vmatpush1.xpose.msra.mxu0 0.0
    %958 = vmatprep.subr.mxu0 0.0
    %959 = vmatpush1.xpose.msra.mxu0 0.0
    %960 = vmatprep.subr.mxu0 0.0
    %961 = vmatpush1.xpose.msra.mxu0 0.0
    %962 = vmatprep.subr.mxu0 0.0
    %963 = vmatpush1.xpose.msra.mxu0 0.0
    %964 = vmatprep.subr.mxu0 0.0
    %965 = vmatpush1.xpose.msra.mxu0 0.0
    %966 = vmatprep.subr.mxu0 0.0
    %967 = vmatpush1.xpose.msra.mxu0 0.0
    %968 = vmatprep.subr.mxu0 0.0
    %969 = vmatpush1.xpose.msra.mxu0 0.0
    %970 = vmatprep.subr.mxu0 0.0
    %971 = vmatpush1.xpose.msra.mxu0 0.0
    %972 = vmatprep.subr.mxu0 0.0
    %973 = vmatpush1.xpose.msra.mxu0 0.0
    %974 = vmatprep.subr.mxu0 0.0
    %975 = vmatpush1.xpose.msra.mxu0 0.0
    %976 = vmatprep.subr.mxu0 0.0
    %977 = vmatpush1.xpose.msra.mxu0 0.0
    %978 = vmatprep.subr.mxu0 0.0
    %979 = vmatpush1.xpose.msra.mxu0 0.0
    %980 = vmatprep.subr.mxu0 0.0
    %981 = vmatpush1.xpose.msra.mxu0 0.0
    %982 = vmatprep.subr.mxu0 0.0
    %983 = vmatpush1.xpose.msra.mxu0 0.0
    %984 = vmatprep.subr.mxu0 0.0
    %985 = vmatpush1.xpose.msra.mxu0 0.0
    %986 = vmatprep.subr.mxu0 0.0
    %987 = vmatpush1.xpose.msra.mxu0 0.0
    %988 = vmatprep.subr.mxu0 0.0
    %989 = vmatpush1.xpose.msra.mxu0 0.0
    %990 = vmatprep.subr.mxu0 0.0
    %991 = vmatpush1.xpose.msra.mxu0 0.0
    %992 = vmatprep.subr.mxu0 0.0
    %993 = vmatpush1.xpose.msra.mxu0 0.0
    %994 = vmatprep.subr.mxu0 0.0
    %995 = vmatpush1.xpose.msra.mxu0 0.0
    %996 = vmatprep.subr.mxu0 0.0
    %997 = vmatpush1.xpose.msra.mxu0 0.0
    %998 = vmatprep.subr.mxu0 0.0
    %999 = vmatpush1.xpose.msra.mxu0 0.0
    %1000 = vmatprep.subr.mxu0 0.0
    %1001 = vmatpush1.xpose.msra.mxu0 0.0
    %1002 = vmatprep.subr.mxu0 0.0
    %1003 = vmatpush1.xpose.msra.mxu0 0.0
    %1004 = vmatprep.subr.mxu0 0.0
    %1005 = vmatpush1.xpose.msra.mxu0 0.0
    %1006 = vmatprep.mubr.f32.mxu0 0.0
    %1007 = vmatmul.mubr.f32.gmra.mrb[0].mxu0 %v938
    %v1008 = vpop.f32.mrb[0].mxu0
    %v1009 = vadd.f32 0.0, %v1008
    %v1010 = vpop.f32.mrb[0].mxu0
    %1011 = vdwg.mxu0
    %v1012 = vmul.f32 %v1009, 0.35355338
    %v1013 = vsel %vm257, %v1012, -inf
    %1014 = vmax.xlane.f32.xlu0 %v1013
    %v1015 = vpop.xlane.xlu0 %1014
    %v1016 = vsub.f32 %v1012, %v1015
    %v1017 = vmul.f32 %v1016, 1.442695
    %v1018 = vpow.pop %v1017
    %v1019 = vsel %vm257, %v1018, 0.0
    %1020 = vadd.xlane.f32.xlu0 %v1019
    %v1021 = vpop.xlane.xlu0 %1020
    %v1022 = vrcp.pop %v1021
    %v1023 = vmul.f32 %v1018, %v1022
    %1024 = vrot.lane.b32.xlu0 %v251, 64
    %v1025 = vpop.permute.xlu0 %1024
    %v1028 = vsel %vm257, %v1023, 0
    %1030 = vmatprep.subr.mxu0 0.0
    %1031 = vmatpush1.msra.mxu0 %v1025
    %1032 = vmatprep.subr.mxu0 0.0
    %1033 = vmatpush1.msra.mxu0 0.0
    %1034 = vmatprep.subr.mxu0 0.0
    %1035 = vmatpush1.msra.mxu0 0.0
    %1036 = vmatprep.subr.mxu0 0.0
    %1037 = vmatpush1.msra.mxu0 0.0
    %1038 = vmatprep.subr.mxu0 0.0
    %1039 = vmatpush1.msra.mxu0 0.0
    %1040 = vmatprep.subr.mxu0 0.0
    %1041 = vmatpush1.msra.mxu0 0.0
    %1042 = vmatprep.subr.mxu0 0.0
    %1043 = vmatpush1.msra.mxu0 0.0
    %1044 = vmatprep.subr.mxu0 0.0
    %1045 = vmatpush1.msra.mxu0 0.0
    %1046 = vmatprep.subr.mxu0 0.0
    %1047 = vmatpush1.msra.mxu0 0.0
    %1048 = vmatprep.subr.mxu0 0.0
    %1049 = vmatpush1.msra.mxu0 0.0
    %1050 = vmatprep.subr.mxu0 0.0
    %1051 = vmatpush1.msra.mxu0 0.0
    %1052 = vmatprep.subr.mxu0 0.0
    %1053 = vmatpush1.msra.mxu0 0.0
    %1054 = vmatprep.subr.mxu0 0.0
    %1055 = vmatpush1.msra.mxu0 0.0
    %1056 = vmatprep.subr.mxu0 0.0
    %1057 = vmatpush1.msra.mxu0 0.0
    %1058 = vmatprep.subr.mxu0 0.0
    %1059 = vmatpush1.msra.mxu0 0.0
    %1060 = vmatprep.subr.mxu0 0.0
    %1061 = vmatpush1.msra.mxu0 0.0
    %1062 = vmatprep.subr.mxu0 0.0
    %1063 = vmatpush1.msra.mxu0 0.0
    %1064 = vmatprep.subr.mxu0 0.0
    %1065 = vmatpush1.msra.mxu0 0.0
    %1066 = vmatprep.subr.mxu0 0.0
    %1067 = vmatpush1.msra.mxu0 0.0
    %1068 = vmatprep.subr.mxu0 0.0
    %1069 = vmatpush1.msra.mxu0 0.0
    %1070 = vmatprep.subr.mxu0 0.0
    %1071 = vmatpush1.msra.mxu0 0.0
    %1072 = vmatprep.subr.mxu0 0.0
    %1073 = vmatpush1.msra.mxu0 0.0
    %1074 = vmatprep.subr.mxu0 0.0
    %1075 = vmatpush1.msra.mxu0 0.0
    %1076 = vmatprep.subr.mxu0 0.0
    %1077 = vmatpush1.msra.mxu0 0.0
    %1078 = vmatprep.subr.mxu0 0.0
    %1079 = vmatpush1.msra.mxu0 0.0
    %1080 = vmatprep.subr.mxu0 0.0
    %1081 = vmatpush1.msra.mxu0 0.0
    %1082 = vmatprep.subr.mxu0 0.0
    %1083 = vmatpush1.msra.mxu0 0.0
    %1084 = vmatprep.subr.mxu0 0.0
    %1085 = vmatpush1.msra.mxu0 0.0
    %1086 = vmatprep.subr.mxu0 0.0
    %1087 = vmatpush1.msra.mxu0 0.0
    %1088 = vmatprep.subr.mxu0 0.0
    %1089 = vmatpush1.msra.mxu0 0.0
    %1090 = vmatprep.subr.mxu0 0.0
    %1091 = vmatpush1.msra.mxu0 0.0
    %1092 = vmatprep.subr.mxu0 0.0
    %1093 = vmatpush1.msra.mxu0 0.0
    %1094 = vmatprep.mubr.f32.mxu0 0.0
    %1095 = vmatmul.mubr.f32.gmra.mrb[0].mxu0 %v1028
    %v1096 = vpop.f32.mrb[0].mxu0
    %v1097 = vadd.f32 0.0, %v1096
    %v1098 = vpop.f32.mrb[0].mxu0
    %1099 = vdwg.mxu0
    %1100 = vrot.lane.b32.xlu0 %v251, 120
    %v1101 = vpop.permute.xlu0 %1100
    %1102 = vrot.lane.b32.xlu0 %v251, 88
    %v1103 = vpop.permute.xlu0 %1102
    %v1104 = vsel %vm257, %v1101, 0
    %v1106 = vsel %vm257, %v1103, 0
    %1108 = vmatprep.subr.mxu0 0.0
    %1109 = vmatpush1.xpose.msra.mxu0 %v1106
    %1110 = vmatprep.subr.mxu0 0.0
    %1111 = vmatpush1.xpose.msra.mxu0 0.0
    %1112 = vmatprep.subr.mxu0 0.0
    %1113 = vmatpush1.xpose.msra.mxu0 0.0
    %1114 = vmatprep.subr.mxu0 0.0
    %1115 = vmatpush1.xpose.msra.mxu0 0.0
    %1116 = vmatprep.subr.mxu0 0.0
    %1117 = vmatpush1.xpose.msra.mxu0 0.0
    %1118 = vmatprep.subr.mxu0 0.0
    %1119 = vmatpush1.xpose.msra.mxu0 0.0
    %1120 = vmatprep.subr.mxu0 0.0
    %1121 = vmatpush1.xpose.msra.mxu0 0.0
    %1122 = vmatprep.subr.mxu0 0.0
    %1123 = vmatpush1.xpose.msra.mxu0 0.0
    %1124 = vmatprep.subr.mxu0 0.0
    %1125 = vmatpush1.xpose.msra.mxu0 0.0
    %1126 = vmatprep.subr.mxu0 0.0
    %1127 = vmatpush1.xpose.msra.mxu0 0.0
    %1128 = vmatprep.subr.mxu0 0.0
    %1129 = vmatpush1.xpose.msra.mxu0 0.0
    %1130 = vmatprep.subr.mxu0 0.0
    %1131 = vmatpush1.xpose.msra.mxu0 0.0
    %1132 = vmatprep.subr.mxu0 0.0
    %1133 = vmatpush1.xpose.msra.mxu0 0.0
    %1134 = vmatprep.subr.mxu0 0.0
    %1135 = vmatpush1.xpose.msra.mxu0 0.0
    %1136 = vmatprep.subr.mxu0 0.0
    %1137 = vmatpush1.xpose.msra.mxu0 0.0
    %1138 = vmatprep.subr.mxu0 0.0
    %1139 = vmatpush1.xpose.msra.mxu0 0.0
    %1140 = vmatprep.subr.mxu0 0.0
    %1141 = vmatpush1.xpose.msra.mxu0 0.0
    %1142 = vmatprep.subr.mxu0 0.0
    %1143 = vmatpush1.xpose.msra.mxu0 0.0
    %1144 = vmatprep.subr.mxu0 0.0
    %1145 = vmatpush1.xpose.msra.mxu0 0.0
    %1146 = vmatprep.subr.mxu0 0.0
    %1147 = vmatpush1.xpose.msra.mxu0 0.0
    %1148 = vmatprep.subr.mxu0 0.0
    %1149 = vmatpush1.xpose.msra.mxu0 0.0
    %1150 = vmatprep.subr.mxu0 0.0
    %1151 = vmatpush1.xpose.msra.mxu0 0.0
    %1152 = vmatprep.subr.mxu0 0.0
    %1153 = vmatpush1.xpose.msra.mxu0 0.0
    %1154 = vmatprep.subr.mxu0 0.0
    %1155 = vmatpush1.xpose.msra.mxu0 0.0
    %1156 = vmatprep.subr.mxu0 0.0
    %1157 = vmatpush1.xpose.msra.mxu0 0.0
    %1158 = vmatprep.subr.mxu0 0.0
    %1159 = vmatpush1.xpose.msra.mxu0 0.0
    %1160 = vmatprep.subr.mxu0 0.0
    %1161 = vmatpush1.xpose.msra.mxu0 0.0
    %1162 = vmatprep.subr.mxu0 0.0
    %1163 = vmatpush1.xpose.msra.mxu0 0.0
    %1164 = vmatprep.subr.mxu0 0.0
    %1165 = vmatpush1.xpose.msra.mxu0 0.0
    %1166 = vmatprep.subr.mxu0 0.0
    %1167 = vmatpush1.xpose.msra.mxu0 0.0
    %1168 = vmatprep.subr.mxu0 0.0
    %1169 = vmatpush1.xpose.msra.mxu0 0.0
    %1170 = vmatprep.subr.mxu0 0.0
    %1171 = vmatpush1.xpose.msra.mxu0 0.0
    %1172 = vmatprep.mubr.f32.mxu0 0.0
    %1173 = vmatmul.mubr.f32.gmra.mrb[0].mxu0 %v1104
    %v1174 = vpop.f32.mrb[0].mxu0
    %v1175 = vadd.f32 0.0, %v1174
    %v1176 = vpop.f32.mrb[0].mxu0
    %1177 = vdwg.mxu0
    %v1178 = vmul.f32 %v1175, 0.35355338
    %v1179 = vsel %vm257, %v1178, -inf
    %1180 = vmax.xlane.f32.xlu0 %v1179
    %v1181 = vpop.xlane.xlu0 %1180
    %v1182 = vsub.f32 %v1178, %v1181
    %v1183 = vmul.f32 %v1182, 1.442695
    %v1184 = vpow.pop %v1183
    %v1185 = vsel %vm257, %v1184, 0.0
    %1186 = vadd.xlane.f32.xlu0 %v1185
    %v1187 = vpop.xlane.xlu0 %1186
    %v1188 = vrcp.pop %v1187
    %v1189 = vmul.f32 %v1184, %v1188
    %1190 = vrot.lane.b32.xlu0 %v251, 56
    %v1191 = vpop.permute.xlu0 %1190
    %v1194 = vsel %vm257, %v1189, 0
    %1196 = vmatprep.subr.mxu0 0.0
    %1197 = vmatpush1.msra.mxu0 %v1191
    %1198 = vmatprep.subr.mxu0 0.0
    %1199 = vmatpush1.msra.mxu0 0.0
    %1200 = vmatprep.subr.mxu0 0.0
    %1201 = vmatpush1.msra.mxu0 0.0
    %1202 = vmatprep.subr.mxu0 0.0
    %1203 = vmatpush1.msra.mxu0 0.0
    %1204 = vmatprep.subr.mxu0 0.0
    %1205 = vmatpush1.msra.mxu0 0.0
    %1206 = vmatprep.subr.mxu0 0.0
    %1207 = vmatpush1.msra.mxu0 0.0
    %1208 = vmatprep.subr.mxu0 0.0
    %1209 = vmatpush1.msra.mxu0 0.0
    %1210 = vmatprep.subr.mxu0 0.0
    %1211 = vmatpush1.msra.mxu0 0.0
    %1212 = vmatprep.subr.mxu0 0.0
    %1213 = vmatpush1.msra.mxu0 0.0
    %1214 = vmatprep.subr.mxu0 0.0
    %1215 = vmatpush1.msra.mxu0 0.0
    %1216 = vmatprep.subr.mxu0 0.0
    %1217 = vmatpush1.msra.mxu0 0.0
    %1218 = vmatprep.subr.mxu0 0.0
    %1219 = vmatpush1.msra.mxu0 0.0
    %1220 = vmatprep.subr.mxu0 0.0
    %1221 = vmatpush1.msra.mxu0 0.0
    %1222 = vmatprep.subr.mxu0 0.0
    %1223 = vmatpush1.msra.mxu0 0.0
    %1224 = vmatprep.subr.mxu0 0.0
    %1225 = vmatpush1.msra.mxu0 0.0
    %1226 = vmatprep.subr.mxu0 0.0
    %1227 = vmatpush1.msra.mxu0 0.0
    %1228 = vmatprep.subr.mxu0 0.0
    %1229 = vmatpush1.msra.mxu0 0.0
    %1230 = vmatprep.subr.mxu0 0.0
    %1231 = vmatpush1.msra.mxu0 0.0
    %1232 = vmatprep.subr.mxu0 0.0
    %1233 = vmatpush1.msra.mxu0 0.0
    %1234 = vmatprep.subr.mxu0 0.0
    %1235 = vmatpush1.msra.mxu0 0.0
    %1236 = vmatprep.subr.mxu0 0.0
    %1237 = vmatpush1.msra.mxu0 0.0
    %1238 = vmatprep.subr.mxu0 0.0
    %1239 = vmatpush1.msra.mxu0 0.0
    %1240 = vmatprep.subr.mxu0 0.0
    %1241 = vmatpush1.msra.mxu0 0.0
    %1242 = vmatprep.subr.mxu0 0.0
    %1243 = vmatpush1.msra.mxu0 0.0
    %1244 = vmatprep.subr.mxu0 0.0
    %1245 = vmatpush1.msra.mxu0 0.0
    %1246 = vmatprep.subr.mxu0 0.0
    %1247 = vmatpush1.msra.mxu0 0.0
    %1248 = vmatprep.subr.mxu0 0.0
    %1249 = vmatpush1.msra.mxu0 0.0
    %1250 = vmatprep.subr.mxu0 0.0
    %1251 = vmatpush1.msra.mxu0 0.0
    %1252 = vmatprep.subr.mxu0 0.0
    %1253 = vmatpush1.msra.mxu0 0.0
    %1254 = vmatprep.subr.mxu0 0.0
    %1255 = vmatpush1.msra.mxu0 0.0
    %1256 = vmatprep.subr.mxu0 0.0
    %1257 = vmatpush1.msra.mxu0 0.0
    %1258 = vmatprep.subr.mxu0 0.0
    %1259 = vmatpush1.msra.mxu0 0.0
    %1260 = vmatprep.mubr.f32.mxu0 0.0
    %1261 = vmatmul.mubr.f32.gmra.mrb[0].mxu0 %v1194
    %v1262 = vpop.f32.mrb[0].mxu0
    %v1263 = vadd.f32 0.0, %v1262
    %v1264 = vpop.f32.mrb[0].mxu0
    %1265 = vdwg.mxu0
    %1266 = vrot.lane.b32.xlu0 %v251, 112
    %v1267 = vpop.permute.xlu0 %1266
    %1268 = vrot.lane.b32.xlu0 %v251, 80
    %v1269 = vpop.permute.xlu0 %1268
    %v1270 = vsel %vm257, %v1267, 0
    %v1272 = vsel %vm257, %v1269, 0
    %1274 = vmatprep.subr.mxu0 0.0
    %1275 = vmatpush1.xpose.msra.mxu0 %v1272
    %1276 = vmatprep.subr.mxu0 0.0
    %1277 = vmatpush1.xpose.msra.mxu0 0.0
    %1278 = vmatprep.subr.mxu0 0.0
    %1279 = vmatpush1.xpose.msra.mxu0 0.0
    %1280 = vmatprep.subr.mxu0 0.0
    %1281 = vmatpush1.xpose.msra.mxu0 0.0
    %1282 = vmatprep.subr.mxu0 0.0
    %1283 = vmatpush1.xpose.msra.mxu0 0.0
    %1284 = vmatprep.subr.mxu0 0.0
    %1285 = vmatpush1.xpose.msra.mxu0 0.0
    %1286 = vmatprep.subr.mxu0 0.0
    %1287 = vmatpush1.xpose.msra.mxu0 0.0
    %1288 = vmatprep.subr.mxu0 0.0
    %1289 = vmatpush1.xpose.msra.mxu0 0.0
    %1290 = vmatprep.subr.mxu0 0.0
    %1291 = vmatpush1.xpose.msra.mxu0 0.0
    %1292 = vmatprep.subr.mxu0 0.0
    %1293 = vmatpush1.xpose.msra.mxu0 0.0
    %1294 = vmatprep.subr.mxu0 0.0
    %1295 = vmatpush1.xpose.msra.mxu0 0.0
    %1296 = vmatprep.subr.mxu0 0.0
    %1297 = vmatpush1.xpose.msra.mxu0 0.0
    %1298 = vmatprep.subr.mxu0 0.0
    %1299 = vmatpush1.xpose.msra.mxu0 0.0
    %1300 = vmatprep.subr.mxu0 0.0
    %1301 = vmatpush1.xpose.msra.mxu0 0.0
    %1302 = vmatprep.subr.mxu0 0.0
    %1303 = vmatpush1.xpose.msra.mxu0 0.0
    %1304 = vmatprep.subr.mxu0 0.0
    %1305 = vmatpush1.xpose.msra.mxu0 0.0
    %1306 = vmatprep.subr.mxu0 0.0
    %1307 = vmatpush1.xpose.msra.mxu0 0.0
    %1308 = vmatprep.subr.mxu0 0.0
    %1309 = vmatpush1.xpose.msra.mxu0 0.0
    %1310 = vmatprep.subr.mxu0 0.0
    %1311 = vmatpush1.xpose.msra.mxu0 0.0
    %1312 = vmatprep.subr.mxu0 0.0
    %1313 = vmatpush1.xpose.msra.mxu0 0.0
    %1314 = vmatprep.subr.mxu0 0.0
    %1315 = vmatpush1.xpose.msra.mxu0 0.0
    %1316 = vmatprep.subr.mxu0 0.0
    %1317 = vmatpush1.xpose.msra.mxu0 0.0
    %1318 = vmatprep.subr.mxu0 0.0
    %1319 = vmatpush1.xpose.msra.mxu0 0.0
    %1320 = vmatprep.subr.mxu0 0.0
    %1321 = vmatpush1.xpose.msra.mxu0 0.0
    %1322 = vmatprep.subr.mxu0 0.0
    %1323 = vmatpush1.xpose.msra.mxu0 0.0
    %1324 = vmatprep.subr.mxu0 0.0
    %1325 = vmatpush1.xpose.msra.mxu0 0.0
    %1326 = vmatprep.subr.mxu0 0.0
    %1327 = vmatpush1.xpose.msra.mxu0 0.0
    %1328 = vmatprep.subr.mxu0 0.0
    %1329 = vmatpush1.xpose.msra.mxu0 0.0
    %1330 = vmatprep.subr.mxu0 0.0
    %1331 = vmatpush1.xpose.msra.mxu0 0.0
    %1332 = vmatprep.subr.mxu0 0.0
    %1333 = vmatpush1.xpose.msra.mxu0 0.0
    %1334 = vmatprep.subr.mxu0 0.0
    %1335 = vmatpush1.xpose.msra.mxu0 0.0
    %1336 = vmatprep.subr.mxu0 0.0
    %1337 = vmatpush1.xpose.msra.mxu0 0.0
    %1338 = vmatprep.mubr.f32.mxu0 0.0
    %1339 = vmatmul.mubr.f32.gmra.mrb[0].mxu0 %v1270
    %v1340 = vpop.f32.mrb[0].mxu0
    %v1341 = vadd.f32 0.0, %v1340
    %v1342 = vpop.f32.mrb[0].mxu0
    %1343 = vdwg.mxu0
    %v1344 = vmul.f32 %v1341, 0.35355338
    %v1345 = vsel %vm257, %v1344, -inf
    %1346 = vmax.xlane.f32.xlu0 %v1345
    %v1347 = vpop.xlane.xlu0 %1346
    %v1348 = vsub.f32 %v1344, %v1347
    %v1349 = vmul.f32 %v1348, 1.442695
    %v1350 = vpow.pop %v1349
    %v1351 = vsel %vm257, %v1350, 0.0
    %1352 = vadd.xlane.f32.xlu0 %v1351
    %v1353 = vpop.xlane.xlu0 %1352
    %v1354 = vrcp.pop %v1353
    %v1355 = vmul.f32 %v1350, %v1354
    %1356 = vrot.lane.b32.xlu0 %v251, 48
    %v1357 = vpop.permute.xlu0 %1356
    %v1360 = vsel %vm257, %v1355, 0
    %1362 = vmatprep.subr.mxu0 0.0
    %1363 = vmatpush1.msra.mxu0 %v1357
    %1364 = vmatprep.subr.mxu0 0.0
    %1365 = vmatpush1.msra.mxu0 0.0
    %1366 = vmatprep.subr.mxu0 0.0
    %1367 = vmatpush1.msra.mxu0 0.0
    %1368 = vmatprep.subr.mxu0 0.0
    %1369 = vmatpush1.msra.mxu0 0.0
    %1370 = vmatprep.subr.mxu0 0.0
    %1371 = vmatpush1.msra.mxu0 0.0
    %1372 = vmatprep.subr.mxu0 0.0
    %1373 = vmatpush1.msra.mxu0 0.0
    %1374 = vmatprep.subr.mxu0 0.0
    %1375 = vmatpush1.msra.mxu0 0.0
    %1376 = vmatprep.subr.mxu0 0.0
    %1377 = vmatpush1.msra.mxu0 0.0
    %1378 = vmatprep.subr.mxu0 0.0
    %1379 = vmatpush1.msra.mxu0 0.0
    %1380 = vmatprep.subr.mxu0 0.0
    %1381 = vmatpush1.msra.mxu0 0.0
    %1382 = vmatprep.subr.mxu0 0.0
    %1383 = vmatpush1.msra.mxu0 0.0
    %1384 = vmatprep.subr.mxu0 0.0
    %1385 = vmatpush1.msra.mxu0 0.0
    %1386 = vmatprep.subr.mxu0 0.0
    %1387 = vmatpush1.msra.mxu0 0.0
    %1388 = vmatprep.subr.mxu0 0.0
    %1389 = vmatpush1.msra.mxu0 0.0
    %1390 = vmatprep.subr.mxu0 0.0
    %1391 = vmatpush1.msra.mxu0 0.0
    %1392 = vmatprep.subr.mxu0 0.0
    %1393 = vmatpush1.msra.mxu0 0.0
    %1394 = vmatprep.subr.mxu0 0.0
    %1395 = vmatpush1.msra.mxu0 0.0
    %1396 = vmatprep.subr.mxu0 0.0
    %1397 = vmatpush1.msra.mxu0 0.0
    %1398 = vmatprep.subr.mxu0 0.0
    %1399 = vmatpush1.msra.mxu0 0.0
    %1400 = vmatprep.subr.mxu0 0.0
    %1401 = vmatpush1.msra.mxu0 0.0
    %1402 = vmatprep.subr.mxu0 0.0
    %1403 = vmatpush1.msra.mxu0 0.0
    %1404 = vmatprep.subr.mxu0 0.0
    %1405 = vmatpush1.msra.mxu0 0.0
    %1406 = vmatprep.subr.mxu0 0.0
    %1407 = vmatpush1.msra.mxu0 0.0
    %1408 = vmatprep.subr.mxu0 0.0
    %1409 = vmatpush1.msra.mxu0 0.0
    %1410 = vmatprep.subr.mxu0 0.0
    %1411 = vmatpush1.msra.mxu0 0.0
    %1412 = vmatprep.subr.mxu0 0.0
    %1413 = vmatpush1.msra.mxu0 0.0
    %1414 = vmatprep.subr.mxu0 0.0
    %1415 = vmatpush1.msra.mxu0 0.0
    %1416 = vmatprep.subr.mxu0 0.0
    %1417 = vmatpush1.msra.mxu0 0.0
    %1418 = vmatprep.subr.mxu0 0.0
    %1419 = vmatpush1.msra.mxu0 0.0
    %1420 = vmatprep.subr.mxu0 0.0
    %1421 = vmatpush1.msra.mxu0 0.0
    %1422 = vmatprep.subr.mxu0 0.0
    %1423 = vmatpush1.msra.mxu0 0.0
    %1424 = vmatprep.subr.mxu0 0.0
    %1425 = vmatpush1.msra.mxu0 0.0
    %1426 = vmatprep.mubr.f32.mxu0 0.0
    %1427 = vmatmul.mubr.f32.gmra.mrb[0].mxu0 %v1360
    %v1428 = vpop.f32.mrb[0].mxu0
    %v1429 = vadd.f32 0.0, %v1428
    %v1430 = vpop.f32.mrb[0].mxu0
    %1431 = vdwg.mxu0
    %1432 = vrot.lane.b32.xlu0 %v251, 104
    %v1433 = vpop.permute.xlu0 %1432
    %1434 = vrot.lane.b32.xlu0 %v251, 72
    %v1435 = vpop.permute.xlu0 %1434
    %v1436 = vsel %vm257, %v1433, 0
    %v1438 = vsel %vm257, %v1435, 0
    %1440 = vmatprep.subr.mxu0 0.0
    %1441 = vmatpush1.xpose.msra.mxu0 %v1438
    %1442 = vmatprep.subr.mxu0 0.0
    %1443 = vmatpush1.xpose.msra.mxu0 0.0
    %1444 = vmatprep.subr.mxu0 0.0
    %1445 = vmatpush1.xpose.msra.mxu0 0.0
    %1446 = vmatprep.subr.mxu0 0.0
    %1447 = vmatpush1.xpose.msra.mxu0 0.0
    %1448 = vmatprep.subr.mxu0 0.0
    %1449 = vmatpush1.xpose.msra.mxu0 0.0
    %1450 = vmatprep.subr.mxu0 0.0
    %1451 = vmatpush1.xpose.msra.mxu0 0.0
    %1452 = vmatprep.subr.mxu0 0.0
    %1453 = vmatpush1.xpose.msra.mxu0 0.0
    %1454 = vmatprep.subr.mxu0 0.0
    %1455 = vmatpush1.xpose.msra.mxu0 0.0
    %1456 = vmatprep.subr.mxu0 0.0
    %1457 = vmatpush1.xpose.msra.mxu0 0.0
    %1458 = vmatprep.subr.mxu0 0.0
    %1459 = vmatpush1.xpose.msra.mxu0 0.0
    %1460 = vmatprep.subr.mxu0 0.0
    %1461 = vmatpush1.xpose.msra.mxu0 0.0
    %1462 = vmatprep.subr.mxu0 0.0
    %1463 = vmatpush1.xpose.msra.mxu0 0.0
    %1464 = vmatprep.subr.mxu0 0.0
    %1465 = vmatpush1.xpose.msra.mxu0 0.0
    %1466 = vmatprep.subr.mxu0 0.0
    %1467 = vmatpush1.xpose.msra.mxu0 0.0
    %1468 = vmatprep.subr.mxu0 0.0
    %1469 = vmatpush1.xpose.msra.mxu0 0.0
    %1470 = vmatprep.subr.mxu0 0.0
    %1471 = vmatpush1.xpose.msra.mxu0 0.0
    %1472 = vmatprep.subr.mxu0 0.0
    %1473 = vmatpush1.xpose.msra.mxu0 0.0
    %1474 = vmatprep.subr.mxu0 0.0
    %1475 = vmatpush1.xpose.msra.mxu0 0.0
    %1476 = vmatprep.subr.mxu0 0.0
    %1477 = vmatpush1.xpose.msra.mxu0 0.0
    %1478 = vmatprep.subr.mxu0 0.0
    %1479 = vmatpush1.xpose.msra.mxu0 0.0
    %1480 = vmatprep.subr.mxu0 0.0
    %1481 = vmatpush1.xpose.msra.mxu0 0.0
    %1482 = vmatprep.subr.mxu0 0.0
    %1483 = vmatpush1.xpose.msra.mxu0 0.0
    %1484 = vmatprep.subr.mxu0 0.0
    %1485 = vmatpush1.xpose.msra.mxu0 0.0
    %1486 = vmatprep.subr.mxu0 0.0
    %1487 = vmatpush1.xpose.msra.mxu0 0.0
    %1488 = vmatprep.subr.mxu0 0.0
    %1489 = vmatpush1.xpose.msra.mxu0 0.0
    %1490 = vmatprep.subr.mxu0 0.0
    %1491 = vmatpush1.xpose.msra.mxu0 0.0
    %1492 = vmatprep.subr.mxu0 0.0
    %1493 = vmatpush1.xpose.msra.mxu0 0.0
    %1494 = vmatprep.subr.mxu0 0.0
    %1495 = vmatpush1.xpose.msra.mxu0 0.0
    %1496 = vmatprep.subr.mxu0 0.0
    %1497 = vmatpush1.xpose.msra.mxu0 0.0
    %1498 = vmatprep.subr.mxu0 0.0
    %1499 = vmatpush1.xpose.msra.mxu0 0.0
    %1500 = vmatprep.subr.mxu0 0.0
    %1501 = vmatpush1.xpose.msra.mxu0 0.0
    %1502 = vmatprep.subr.mxu0 0.0
    %1503 = vmatpush1.xpose.msra.mxu0 0.0
    %1504 = vmatprep.mubr.f32.mxu0 0.0
    %1505 = vmatmul.mubr.f32.gmra.mrb[0].mxu0 %v1436
    %v1506 = vpop.f32.mrb[0].mxu0
    %v1507 = vadd.f32 0.0, %v1506
    %v1508 = vpop.f32.mrb[0].mxu0
    %1509 = vdwg.mxu0
    %v1510 = vmul.f32 %v1507, 0.35355338
    %v1511 = vsel %vm257, %v1510, -inf
    %1512 = vmax.xlane.f32.xlu0 %v1511
    %v1513 = vpop.xlane.xlu0 %1512
    %v1514 = vsub.f32 %v1510, %v1513
    %v1515 = vmul.f32 %v1514, 1.442695
    %v1516 = vpow.pop %v1515
    %v1517 = vsel %vm257, %v1516, 0.0
    %1518 = vadd.xlane.f32.xlu0 %v1517
    %v1519 = vpop.xlane.xlu0 %1518
    %v1520 = vrcp.pop %v1519
    %v1521 = vmul.f32 %v1516, %v1520
    %1522 = vrot.lane.b32.xlu0 %v251, 40
    %v1523 = vpop.permute.xlu0 %1522
    %v1526 = vsel %vm257, %v1521, 0
    %1528 = vmatprep.subr.mxu0 0.0
    %1529 = vmatpush1.msra.mxu0 %v1523
    %1530 = vmatprep.subr.mxu0 0.0
    %1531 = vmatpush1.msra.mxu0 0.0
    %1532 = vmatprep.subr.mxu0 0.0
    %1533 = vmatpush1.msra.mxu0 0.0
    %1534 = vmatprep.subr.mxu0 0.0
    %1535 = vmatpush1.msra.mxu0 0.0
    %1536 = vmatprep.subr.mxu0 0.0
    %1537 = vmatpush1.msra.mxu0 0.0
    %1538 = vmatprep.subr.mxu0 0.0
    %1539 = vmatpush1.msra.mxu0 0.0
    %1540 = vmatprep.subr.mxu0 0.0
    %1541 = vmatpush1.msra.mxu0 0.0
    %1542 = vmatprep.subr.mxu0 0.0
    %1543 = vmatpush1.msra.mxu0 0.0
    %1544 = vmatprep.subr.mxu0 0.0
    %1545 = vmatpush1.msra.mxu0 0.0
    %1546 = vmatprep.subr.mxu0 0.0
    %1547 = vmatpush1.msra.mxu0 0.0
    %1548 = vmatprep.subr.mxu0 0.0
    %1549 = vmatpush1.msra.mxu0 0.0
    %1550 = vmatprep.subr.mxu0 0.0
    %1551 = vmatpush1.msra.mxu0 0.0
    %1552 = vmatprep.subr.mxu0 0.0
    %1553 = vmatpush1.msra.mxu0 0.0
    %1554 = vmatprep.subr.mxu0 0.0
    %1555 = vmatpush1.msra.mxu0 0.0
    %1556 = vmatprep.subr.mxu0 0.0
    %1557 = vmatpush1.msra.mxu0 0.0
    %1558 = vmatprep.subr.mxu0 0.0
    %1559 = vmatpush1.msra.mxu0 0.0
    %1560 = vmatprep.subr.mxu0 0.0
    %1561 = vmatpush1.msra.mxu0 0.0
    %1562 = vmatprep.subr.mxu0 0.0
    %1563 = vmatpush1.msra.mxu0 0.0
    %1564 = vmatprep.subr.mxu0 0.0
    %1565 = vmatpush1.msra.mxu0 0.0
    %1566 = vmatprep.subr.mxu0 0.0
    %1567 = vmatpush1.msra.mxu0 0.0
    %1568 = vmatprep.subr.mxu0 0.0
    %1569 = vmatpush1.msra.mxu0 0.0
    %1570 = vmatprep.subr.mxu0 0.0
    %1571 = vmatpush1.msra.mxu0 0.0
    %1572 = vmatprep.subr.mxu0 0.0
    %1573 = vmatpush1.msra.mxu0 0.0
    %1574 = vmatprep.subr.mxu0 0.0
    %1575 = vmatpush1.msra.mxu0 0.0
    %1576 = vmatprep.subr.mxu0 0.0
    %1577 = vmatpush1.msra.mxu0 0.0
    %1578 = vmatprep.subr.mxu0 0.0
    %1579 = vmatpush1.msra.mxu0 0.0
    %1580 = vmatprep.subr.mxu0 0.0
    %1581 = vmatpush1.msra.mxu0 0.0
    %1582 = vmatprep.subr.mxu0 0.0
    %1583 = vmatpush1.msra.mxu0 0.0
    %1584 = vmatprep.subr.mxu0 0.0
    %1585 = vmatpush1.msra.mxu0 0.0
    %1586 = vmatprep.subr.mxu0 0.0
    %1587 = vmatpush1.msra.mxu0 0.0
    %1588 = vmatprep.subr.mxu0 0.0
    %1589 = vmatpush1.msra.mxu0 0.0
    %1590 = vmatprep.subr.mxu0 0.0
    %1591 = vmatpush1.msra.mxu0 0.0
    %1592 = vmatprep.mubr.f32.mxu0 0.0
    %1593 = vmatmul.mubr.f32.gmra.mrb[0].mxu0 %v1526
    %v1594 = vpop.f32.mrb[0].mxu0
    %v1595 = vadd.f32 0.0, %v1594
    %v1596 = vpop.f32.mrb[0].mxu0
    %1597 = vdwg.mxu0
    %1599 = vrot.lane.b32.xlu0 %v1263, 8
    %v1600 = vpop.permute.xlu0 %1599
    %1603 = vrot.lane.b32.xlu0 %v1429, 16
    %v1604 = vpop.permute.xlu0 %1603
    %1607 = vrot.lane.b32.xlu0 %v1595, 24
    %v1608 = vpop.permute.xlu0 %1607
    %v1610 = vsel %vm257, %v1097, %v1600
    %v1611 = vsel %vm931, %v1610, %v1604
    %v1612 = vsel %vm933, %v1611, %v1608
    %1617 = vrot.lane.b32.xlu0 %v124, 32
    %v1618 = vpop.permute.xlu0 %1617
    %1619 = vrot.lane.b32.xlu0 %v125, 32
    %v1620 = vpop.permute.xlu0 %1619
    %1621 = vrot.lane.b32.xlu0 %v126, 32
    %v1622 = vpop.permute.xlu0 %1621
    %1623 = vrot.lane.b32.xlu0 %v127, 32
    %v1624 = vpop.permute.xlu0 %1623
    %v1630 = vsel %vm129, %v934, 0
    %v1633 = vsel %vm129, %v1612, 0
    %1635 = vmatprep.subr.mxu0 0.0
    %1636 = vmatpush1.msra.mxu0 %v1618
    %1637 = vmatprep.subr.mxu0 0.0
    %1638 = vmatpush1.msra.mxu0 %v1620
    %1639 = vmatprep.subr.mxu0 0.0
    %1640 = vmatpush1.msra.mxu0 %v1622
    %1641 = vmatprep.subr.mxu0 0.0
    %1642 = vmatpush1.msra.mxu0 %v1624
    %1643 = vmatprep.subr.mxu0 0.0
    %1644 = vmatpush1.msra.mxu0 0.0
    %1645 = vmatprep.subr.mxu0 0.0
    %1646 = vmatpush1.msra.mxu0 0.0
    %1647 = vmatprep.subr.mxu0 0.0
    %1648 = vmatpush1.msra.mxu0 0.0
    %1649 = vmatprep.subr.mxu0 0.0
    %1650 = vmatpush1.msra.mxu0 0.0
    %1651 = vmatprep.subr.mxu0 0.0
    %1652 = vmatpush1.msra.mxu0 0.0
    %1653 = vmatprep.subr.mxu0 0.0
    %1654 = vmatpush1.msra.mxu0 0.0
    %1655 = vmatprep.subr.mxu0 0.0
    %1656 = vmatpush1.msra.mxu0 0.0
    %1657 = vmatprep.subr.mxu0 0.0
    %1658 = vmatpush1.msra.mxu0 0.0
    %1659 = vmatprep.subr.mxu0 0.0
    %1660 = vmatpush1.msra.mxu0 0.0
    %1661 = vmatprep.subr.mxu0 0.0
    %1662 = vmatpush1.msra.mxu0 0.0
    %1663 = vmatprep.subr.mxu0 0.0
    %1664 = vmatpush1.msra.mxu0 0.0
    %1665 = vmatprep.subr.mxu0 0.0
    %1666 = vmatpush1.msra.mxu0 0.0
    %1667 = vmatprep.subr.mxu0 0.0
    %1668 = vmatpush1.msra.mxu0 0.0
    %1669 = vmatprep.subr.mxu0 0.0
    %1670 = vmatpush1.msra.mxu0 0.0
    %1671 = vmatprep.subr.mxu0 0.0
    %1672 = vmatpush1.msra.mxu0 0.0
    %1673 = vmatprep.subr.mxu0 0.0
    %1674 = vmatpush1.msra.mxu0 0.0
    %1675 = vmatprep.subr.mxu0 0.0
    %1676 = vmatpush1.msra.mxu0 0.0
    %1677 = vmatprep.subr.mxu0 0.0
    %1678 = vmatpush1.msra.mxu0 0.0
    %1679 = vmatprep.subr.mxu0 0.0
    %1680 = vmatpush1.msra.mxu0 0.0
    %1681 = vmatprep.subr.mxu0 0.0
    %1682 = vmatpush1.msra.mxu0 0.0
    %1683 = vmatprep.subr.mxu0 0.0
    %1684 = vmatpush1.msra.mxu0 0.0
    %1685 = vmatprep.subr.mxu0 0.0
    %1686 = vmatpush1.msra.mxu0 0.0
    %1687 = vmatprep.subr.mxu0 0.0
    %1688 = vmatpush1.msra.mxu0 0.0
    %1689 = vmatprep.subr.mxu0 0.0
    %1690 = vmatpush1.msra.mxu0 0.0
    %1691 = vmatprep.subr.mxu0 0.0
    %1692 = vmatpush1.msra.mxu0 0.0
    %1693 = vmatprep.subr.mxu0 0.0
    %1694 = vmatpush1.msra.mxu0 0.0
    %1695 = vmatprep.subr.mxu0 0.0
    %1696 = vmatpush1.msra.mxu0 0.0
    %1697 = vmatprep.subr.mxu0 0.0
    %1698 = vmatpush1.msra.mxu0 0.0
    %1699 = vmatprep.mubr.f32.mxu0 0.0
    %1700 = vmatmul.mubr.f32.gmra.mrb[0].mxu0 %v1630
    %v1701 = vpop.f32.mrb[0].mxu0
    %v1702 = vadd.f32 0.0, %v1701
    %v1703 = vpop.f32.mrb[0].mxu0
    %1704 = vmatprep.mubr.f32.mxu0 0.0
    %1705 = vmatmul.mubr.f32.gmra.mrb[0].mxu0 %v1633
    %v1706 = vpop.f32.mrb[0].mxu0
    %v1707 = vadd.f32 0.0, %v1706
    %v1708 = vpop.f32.mrb[0].mxu0
    %1709 = vdwg.mxu0
    %v1710 = vadd.f32 %v116, %v1702
    %v1711 = vadd.f32 %v121, %v1707
    %1713 = vrot.lane.b32.xlu0 %v172, 32
    %v1714 = vpop.permute.xlu0 %1713
    %v1716 = vadd.f32 %v1710, %v1714
    %v1717 = vadd.f32 %v1711, %v1714
    %v1718 = vsel %vm129, %v1716, 0.0
    %1719 = vadd.xlane.f32.xlu0 %v1718
    %v1720 = vpop.xlane.xlu0 %1719
    %v1721 = vsel %vm129, %v1717, 0.0
    %1722 = vadd.xlane.f32.xlu0 %v1721
    %v1723 = vpop.xlane.xlu0 %1722
    %v1724 = vmul.f32 %v1720, %v136
    %v1725 = vmul.f32 %v1723, %v136
    %v1726 = vsub.f32 %v1716, %v1724
    %v1727 = vsub.f32 %v1717, %v1725
    %v1728 = vmul.f32 %v1726, %v1726
    %v1729 = vmul.f32 %v1727, %v1727
    %v1730 = vsel %vm129, %v1728, 0.0
    %1731 = vadd.xlane.f32.xlu0 %v1730
    %v1732 = vpop.xlane.xlu0 %1731
    %v1733 = vsel %vm129, %v1729, 0.0
    %1734 = vadd.xlane.f32.xlu0 %v1733
    %v1735 = vpop.xlane.xlu0 %1734
    %v1736 = vmul.f32 %v1732, %v136
    %v1737 = vmul.f32 %v1735, %v136
    %v1738 = vadd.f32 %v1736, 1e-05
    %v1739 = vadd.f32 %v1737, 1e-05
    %v1740 = vrsqrt.pop %v1738
    %v1741 = vrsqrt.pop %v1739
    %v1742 = vmul.f32 %v1726, %v1740
    %v1743 = vmul.f32 %v1727, %v1741
    %1744 = vrot.lane.b32.xlu0 %v160, 64
    %v1745 = vpop.permute.xlu0 %1744
    %v1747 = vmul.f32 %v1742, %v1745
    %v1748 = vmul.f32 %v1743, %v1745
    %1749 = vrot.lane.b32.xlu0 %v160, 32
    %v1750 = vpop.permute.xlu0 %1749
    %v1752 = vadd.f32 %v1747, %v1750
    %v1753 = vadd.f32 %v1748, %v1750
    %v1754 = vld [vmem:[%s5] sm:$0xff]
    %v1755 = vld [vmem:[%s5 + $0x8] sm:$0xff]
    %v1756 = vld [vmem:[%s5 + $0x10] sm:$0xff]
    %v1757 = vld [vmem:[%s5 + $0x18] sm:$0xff]
    %v1758 = vlaneseq
    %v1759 = vshrl.u32 %v1758, 7
    %v1760 = vsub.s32 2, %v1759
    %v1761 = vrot.slane %v128, %v1760
    %v1763 = vsel %vm129, %v1752, 0
    %v1766 = vsel %vm129, %v1753, 0
    %1768 = vmatprep.subr.mxu0 0.0
    %1769 = vmatpush1.msra.mxu0 %v1754
    %1770 = vmatprep.subr.mxu0 0.0
    %1771 = vmatpush1.msra.mxu0 %v1755
    %1772 = vmatprep.subr.mxu0 0.0
    %1773 = vmatpush1.msra.mxu0 %v1756
    %1774 = vmatprep.subr.mxu0 0.0
    %1775 = vmatpush1.msra.mxu0 %v1757
    %1776 = vmatprep.subr.mxu0 0.0
    %1777 = vmatpush1.msra.mxu0 0.0
    %1778 = vmatprep.subr.mxu0 0.0
    %1779 = vmatpush1.msra.mxu0 0.0
    %1780 = vmatprep.subr.mxu0 0.0
    %1781 = vmatpush1.msra.mxu0 0.0
    %1782 = vmatprep.subr.mxu0 0.0
    %1783 = vmatpush1.msra.mxu0 0.0
    %1784 = vmatprep.subr.mxu0 0.0
    %1785 = vmatpush1.msra.mxu0 0.0
    %1786 = vmatprep.subr.mxu0 0.0
    %1787 = vmatpush1.msra.mxu0 0.0
    %1788 = vmatprep.subr.mxu0 0.0
    %1789 = vmatpush1.msra.mxu0 0.0
    %1790 = vmatprep.subr.mxu0 0.0
    %1791 = vmatpush1.msra.mxu0 0.0
    %1792 = vmatprep.subr.mxu0 0.0
    %1793 = vmatpush1.msra.mxu0 0.0
    %1794 = vmatprep.subr.mxu0 0.0
    %1795 = vmatpush1.msra.mxu0 0.0
    %1796 = vmatprep.subr.mxu0 0.0
    %1797 = vmatpush1.msra.mxu0 0.0
    %1798 = vmatprep.subr.mxu0 0.0
    %1799 = vmatpush1.msra.mxu0 0.0
    %1800 = vmatprep.subr.mxu0 0.0
    %1801 = vmatpush1.msra.mxu0 0.0
    %1802 = vmatprep.subr.mxu0 0.0
    %1803 = vmatpush1.msra.mxu0 0.0
    %1804 = vmatprep.subr.mxu0 0.0
    %1805 = vmatpush1.msra.mxu0 0.0
    %1806 = vmatprep.subr.mxu0 0.0
    %1807 = vmatpush1.msra.mxu0 0.0
    %1808 = vmatprep.subr.mxu0 0.0
    %1809 = vmatpush1.msra.mxu0 0.0
    %1810 = vmatprep.subr.mxu0 0.0
    %1811 = vmatpush1.msra.mxu0 0.0
    %1812 = vmatprep.subr.mxu0 0.0
    %1813 = vmatpush1.msra.mxu0 0.0
    %1814 = vmatprep.subr.mxu0 0.0
    %1815 = vmatpush1.msra.mxu0 0.0
    %1816 = vmatprep.subr.mxu0 0.0
    %1817 = vmatpush1.msra.mxu0 0.0
    %1818 = vmatprep.subr.mxu0 0.0
    %1819 = vmatpush1.msra.mxu0 0.0
    %1820 = vmatprep.subr.mxu0 0.0
    %1821 = vmatpush1.msra.mxu0 0.0
    %1822 = vmatprep.subr.mxu0 0.0
    %1823 = vmatpush1.msra.mxu0 0.0
    %1824 = vmatprep.subr.mxu0 0.0
    %1825 = vmatpush1.msra.mxu0 0.0
    %1826 = vmatprep.subr.mxu0 0.0
    %1827 = vmatpush1.msra.mxu0 0.0
    %1828 = vmatprep.subr.mxu0 0.0
    %1829 = vmatpush1.msra.mxu0 0.0
    %1830 = vmatprep.subr.mxu0 0.0
    %1831 = vmatpush1.msra.mxu0 0.0
    %1832 = vmatprep.mubr.f32.mxu0 0.0
    %1833 = vmatmul.mubr.f32.gmra.mrb[0].mxu0 %v1763
    %v1834 = vpop.f32.mrb[0].mxu0
    %v1835 = vadd.f32 %v1761, %v1834
    %v1836 = vpop.f32.mrb[0].mxu0
    %1837 = vmatprep.mubr.f32.mxu0 0.0
    %1838 = vmatmul.mubr.f32.gmra.mrb[0].mxu0 %v1766
    %v1839 = vpop.f32.mrb[0].mxu0
    %v1840 = vadd.f32 %v1761, %v1839
    %v1841 = vpop.f32.mrb[0].mxu0
    %1842 = vdwg.mxu0
    %v1843 = vmul.f32 %v1835, 0.5
    %v1844 = vmul.f32 %v1840, 0.5
    %v1845 = vmul.f32 %v1835, 0.70710677
    %v1846 = vmul.f32 %v1840, 0.70710677
    %v1847 = verf.f32.pop %v1845
    %v1848 = verf.f32.pop %v1846
    %v1849 = vadd.f32 %v1847, 1.0
    %v1850 = vadd.f32 %v1848, 1.0
    %v1851 = vmul.f32 %v1843, %v1849
    %v1852 = vmul.f32 %v1844, %v1850
    %v1853 = vld [vmem:[%s6] sm:$0xff]
    %v1854 = vld [vmem:[%s6 + $0x8] sm:$0xff]
    %v1855 = vld [vmem:[%s6 + $0x10] sm:$0xff]
    %v1856 = vld [vmem:[%s6 + $0x18] sm:$0xff]
    %v1857 = vld [vmem:[%s6 + $0x20] sm:$0xff]
    %v1858 = vld [vmem:[%s6 + $0x28] sm:$0xff]
    %v1859 = vld [vmem:[%s6 + $0x30] sm:$0xff]
    %v1860 = vld [vmem:[%s6 + $0x38] sm:$0xff]
    %vm1861 = vcmask 523264
    %v1863 = vsel %vm1861, %v1851, 0
    %v1866 = vsel %vm1861, %v1852, 0
    %1868 = vmatprep.subr.mxu0 0.0
    %1869 = vmatpush1.msra.mxu0 %v1853
    %1870 = vmatprep.subr.mxu0 0.0
    %1871 = vmatpush1.msra.mxu0 %v1854
    %1872 = vmatprep.subr.mxu0 0.0
    %1873 = vmatpush1.msra.mxu0 %v1855
    %1874 = vmatprep.subr.mxu0 0.0
    %1875 = vmatpush1.msra.mxu0 %v1856
    %1876 = vmatprep.subr.mxu0 0.0
    %1877 = vmatpush1.msra.mxu0 %v1857
    %1878 = vmatprep.subr.mxu0 0.0
    %1879 = vmatpush1.msra.mxu0 %v1858
    %1880 = vmatprep.subr.mxu0 0.0
    %1881 = vmatpush1.msra.mxu0 %v1859
    %1882 = vmatprep.subr.mxu0 0.0
    %1883 = vmatpush1.msra.mxu0 %v1860
    %1884 = vmatprep.subr.mxu0 0.0
    %1885 = vmatpush1.msra.mxu0 0.0
    %1886 = vmatprep.subr.mxu0 0.0
    %1887 = vmatpush1.msra.mxu0 0.0
    %1888 = vmatprep.subr.mxu0 0.0
    %1889 = vmatpush1.msra.mxu0 0.0
    %1890 = vmatprep.subr.mxu0 0.0
    %1891 = vmatpush1.msra.mxu0 0.0
    %1892 = vmatprep.subr.mxu0 0.0
    %1893 = vmatpush1.msra.mxu0 0.0
    %1894 = vmatprep.subr.mxu0 0.0
    %1895 = vmatpush1.msra.mxu0 0.0
    %1896 = vmatprep.subr.mxu0 0.0
    %1897 = vmatpush1.msra.mxu0 0.0
    %1898 = vmatprep.subr.mxu0 0.0
    %1899 = vmatpush1.msra.mxu0 0.0
    %1900 = vmatprep.subr.mxu0 0.0
    %1901 = vmatpush1.msra.mxu0 0.0
    %1902 = vmatprep.subr.mxu0 0.0
    %1903 = vmatpush1.msra.mxu0 0.0
    %1904 = vmatprep.subr.mxu0 0.0
    %1905 = vmatpush1.msra.mxu0 0.0
    %1906 = vmatprep.subr.mxu0 0.0
    %1907 = vmatpush1.msra.mxu0 0.0
    %1908 = vmatprep.subr.mxu0 0.0
    %1909 = vmatpush1.msra.mxu0 0.0
    %1910 = vmatprep.subr.mxu0 0.0
    %1911 = vmatpush1.msra.mxu0 0.0
    %1912 = vmatprep.subr.mxu0 0.0
    %1913 = vmatpush1.msra.mxu0 0.0
    %1914 = vmatprep.subr.mxu0 0.0
    %1915 = vmatpush1.msra.mxu0 0.0
    %1916 = vmatprep.subr.mxu0 0.0
    %1917 = vmatpush1.msra.mxu0 0.0
    %1918 = vmatprep.subr.mxu0 0.0
    %1919 = vmatpush1.msra.mxu0 0.0
    %1920 = vmatprep.subr.mxu0 0.0
    %1921 = vmatpush1.msra.mxu0 0.0
    %1922 = vmatprep.subr.mxu0 0.0
    %1923 = vmatpush1.msra.mxu0 0.0
    %1924 = vmatprep.subr.mxu0 0.0
    %1925 = vmatpush1.msra.mxu0 0.0
    %1926 = vmatprep.subr.mxu0 0.0
    %1927 = vmatpush1.msra.mxu0 0.0
    %1928 = vmatprep.subr.mxu0 0.0
    %1929 = vmatpush1.msra.mxu0 0.0
    %1930 = vmatprep.subr.mxu0 0.0
    %1931 = vmatpush1.msra.mxu0 0.0
    %1932 = vmatprep.mubr.f32.mxu0 0.0
    %1933 = vmatmul.mubr.f32.gmra.mrb[0].mxu0 %v1863
    %v1934 = vpop.f32.mrb[0].mxu0
    %v1935 = vadd.f32 0.0, %v1934
    %v1936 = vpop.f32.mrb[0].mxu0
    %1937 = vmatprep.mubr.f32.mxu0 0.0
    %1938 = vmatmul.mubr.f32.gmra.mrb[0].mxu0 %v1866
    %v1939 = vpop.f32.mrb[0].mxu0
    %v1940 = vadd.f32 0.0, %v1939
    %v1941 = vpop.f32.mrb[0].mxu0
    %1942 = vdwg.mxu0
    %v1943 = vadd.f32 %v1716, %v1935
    %v1944 = vadd.f32 %v1717, %v1940
    %1946 = vrot.lane.b32.xlu0 %v1761, 64
    %v1947 = vpop.permute.xlu0 %1946
    %v1949 = vadd.f32 %v1943, %v1947
    %v1950 = vadd.f32 %v1944, %v1947
    %s1951 = scalar_lea.vmem %s3, 32
    %v1952 = vld [vmem:[%s1951] sm:$0xff]
    %v1953 = vld [vmem:[%s1951 + $0x8] sm:$0xff]
    %v1954 = vld [vmem:[%s1951 + $0x10] sm:$0xff]
    %v1955 = vld [vmem:[%s1951 + $0x18] sm:$0xff]
    %s1956 = scalar_lea.vmem %s4, 4
    %v1957 = vld [vmem:[%s1956] sm:$0x7]
    %v1958 = vsel %vm129, %v1949, 0.0
    %1959 = vadd.xlane.f32.xlu0 %v1958
    %v1960 = vpop.xlane.xlu0 %1959
    %v1961 = vsel %vm129, %v1950, 0.0
    %1962 = vadd.xlane.f32.xlu0 %v1961
    %v1963 = vpop.xlane.xlu0 %1962
    %v1964 = vmul.f32 %v1960, %v136
    %v1965 = vmul.f32 %v1963, %v136
    %v1966 = vsub.f32 %v1949, %v1964
    %v1967 = vsub.f32 %v1950, %v1965
    %v1968 = vmul.f32 %v1966, %v1966
    %v1969 = vmul.f32 %v1967, %v1967
    %v1970 = vsel %vm129, %v1968, 0.0
    %1971 = vadd.xlane.f32.xlu0 %v1970
    %v1972 = vpop.xlane.xlu0 %1971
    %v1973 = vsel %vm129, %v1969, 0.0
    %1974 = vadd.xlane.f32.xlu0 %v1973
    %v1975 = vpop.xlane.xlu0 %1974
    %v1976 = vmul.f32 %v1972, %v136
    %v1977 = vmul.f32 %v1975, %v136
    %v1978 = vadd.f32 %v1976, 1e-05
    %v1979 = vadd.f32 %v1977, 1e-05
    %v1980 = vrsqrt.pop %v1978
    %v1981 = vrsqrt.pop %v1979
    %v1982 = vmul.f32 %v1966, %v1980
    %v1983 = vmul.f32 %v1967, %v1981
    %v1984 = vlaneseq
    %v1985 = vshrl.u32 %v1984, 7
    %v1986 = vsub.s32 1, %v1985
    %v1987 = vrot.slane %v1957, %v1986
    %v1988 = vmul.f32 %v1982, %v1987
    %v1989 = vmul.f32 %v1983, %v1987
    %1991 = vrot.lane.b32.xlu0 %v1987, 96
    %v1992 = vpop.permute.xlu0 %1991
    %v1994 = vadd.f32 %v1988, %v1992
    %v1995 = vadd.f32 %v1989, %v1992
    %v1996 = vlaneseq
    %v1997 = vshrl.u32 %v1996, 7
    %v1998 = vsub.s32 0, %v1997
    %v1999 = vrot.slane %v1957, %v1998
    %v2001 = vsel %vm129, %v1994, 0
    %v2004 = vsel %vm129, %v1995, 0
    %2006 = vmatprep.subr.mxu0 0.0
    %2007 = vmatpush1.msra.mxu0 %v1952
    %2008 = vmatprep.subr.mxu0 0.0
    %2009 = vmatpush1.msra.mxu0 %v1953
    %2010 = vmatprep.subr.mxu0 0.0
    %2011 = vmatpush1.msra.mxu0 %v1954
    %2012 = vmatprep.subr.mxu0 0.0
    %2013 = vmatpush1.msra.mxu0 %v1955
    %2014 = vmatprep.subr.mxu0 0.0
    %2015 = vmatpush1.msra.mxu0 0.0
    %2016 = vmatprep.subr.mxu0 0.0
    %2017 = vmatpush1.msra.mxu0 0.0
    %2018 = vmatprep.subr.mxu0 0.0
    %2019 = vmatpush1.msra.mxu0 0.0
    %2020 = vmatprep.subr.mxu0 0.0
    %2021 = vmatpush1.msra.mxu0 0.0
    %2022 = vmatprep.subr.mxu0 0.0
    %2023 = vmatpush1.msra.mxu0 0.0
    %2024 = vmatprep.subr.mxu0 0.0
    %2025 = vmatpush1.msra.mxu0 0.0
    %2026 = vmatprep.subr.mxu0 0.0
    %2027 = vmatpush1.msra.mxu0 0.0
    %2028 = vmatprep.subr.mxu0 0.0
    %2029 = vmatpush1.msra.mxu0 0.0
    %2030 = vmatprep.subr.mxu0 0.0
    %2031 = vmatpush1.msra.mxu0 0.0
    %2032 = vmatprep.subr.mxu0 0.0
    %2033 = vmatpush1.msra.mxu0 0.0
    %2034 = vmatprep.subr.mxu0 0.0
    %2035 = vmatpush1.msra.mxu0 0.0
    %2036 = vmatprep.subr.mxu0 0.0
    %2037 = vmatpush1.msra.mxu0 0.0
    %2038 = vmatprep.subr.mxu0 0.0
    %2039 = vmatpush1.msra.mxu0 0.0
    %2040 = vmatprep.subr.mxu0 0.0
    %2041 = vmatpush1.msra.mxu0 0.0
    %2042 = vmatprep.subr.mxu0 0.0
    %2043 = vmatpush1.msra.mxu0 0.0
    %2044 = vmatprep.subr.mxu0 0.0
    %2045 = vmatpush1.msra.mxu0 0.0
    %2046 = vmatprep.subr.mxu0 0.0
    %2047 = vmatpush1.msra.mxu0 0.0
    %2048 = vmatprep.subr.mxu0 0.0
    %2049 = vmatpush1.msra.mxu0 0.0
    %2050 = vmatprep.subr.mxu0 0.0
    %2051 = vmatpush1.msra.mxu0 0.0
    %2052 = vmatprep.subr.mxu0 0.0
    %2053 = vmatpush1.msra.mxu0 0.0
    %2054 = vmatprep.subr.mxu0 0.0
    %2055 = vmatpush1.msra.mxu0 0.0
    %2056 = vmatprep.subr.mxu0 0.0
    %2057 = vmatpush1.msra.mxu0 0.0
    %2058 = vmatprep.subr.mxu0 0.0
    %2059 = vmatpush1.msra.mxu0 0.0
    %2060 = vmatprep.subr.mxu0 0.0
    %2061 = vmatpush1.msra.mxu0 0.0
    %2062 = vmatprep.subr.mxu0 0.0
    %2063 = vmatpush1.msra.mxu0 0.0
    %2064 = vmatprep.subr.mxu0 0.0
    %2065 = vmatpush1.msra.mxu0 0.0
    %2066 = vmatprep.subr.mxu0 0.0
    %2067 = vmatpush1.msra.mxu0 0.0
    %2068 = vmatprep.subr.mxu0 0.0
    %2069 = vmatpush1.msra.mxu0 0.0
    %2070 = vmatprep.mubr.f32.mxu0 0.0
    %2071 = vmatmul.mubr.f32.gmra.mrb[0].mxu0 %v2001
    %v2072 = vpop.f32.mrb[0].mxu0
    %v2073 = vadd.f32 %v1999, %v2072
    %v2074 = vpop.f32.mrb[0].mxu0
    %2075 = vmatprep.mubr.f32.mxu0 0.0
    %2076 = vmatmul.mubr.f32.gmra.mrb[0].mxu0 %v2004
    %v2077 = vpop.f32.mrb[0].mxu0
    %v2078 = vadd.f32 %v1999, %v2077
    %v2079 = vpop.f32.mrb[0].mxu0
    %2080 = vdwg.mxu0
    %2082 = vrot.lane.b32.xlu0 %v2073, 96
    %v2083 = vpop.permute.xlu0 %2082
    %v2084 = vsel %vm257, %v2073, 0
    %v2086 = vsel %vm257, %v2083, 0
    %2088 = vmatprep.subr.mxu0 0.0
    %2089 = vmatpush1.xpose.msra.mxu0 %v2086
    %2090 = vmatprep.subr.mxu0 0.0
    %2091 = vmatpush1.xpose.msra.mxu0 0.0
    %2092 = vmatprep.subr.mxu0 0.0
    %2093 = vmatpush1.xpose.msra.mxu0 0.0
    %2094 = vmatprep.subr.mxu0 0.0
    %2095 = vmatpush1.xpose.msra.mxu0 0.0
    %2096 = vmatprep.subr.mxu0 0.0
    %2097 = vmatpush1.xpose.msra.mxu0 0.0
    %2098 = vmatprep.subr.mxu0 0.0
    %2099 = vmatpush1.xpose.msra.mxu0 0.0
    %2100 = vmatprep.subr.mxu0 0.0
    %2101 = vmatpush1.xpose.msra.mxu0 0.0
    %2102 = vmatprep.subr.mxu0 0.0
    %2103 = vmatpush1.xpose.msra.mxu0 0.0
    %2104 = vmatprep.subr.mxu0 0.0
    %2105 = vmatpush1.xpose.msra.mxu0 0.0
    %2106 = vmatprep.subr.mxu0 0.0
    %2107 = vmatpush1.xpose.msra.mxu0 0.0
    %2108 = vmatprep.subr.mxu0 0.0
    %2109 = vmatpush1.xpose.msra.mxu0 0.0
    %2110 = vmatprep.subr.mxu0 0.0
    %2111 = vmatpush1.xpose.msra.mxu0 0.0
    %2112 = vmatprep.subr.mxu0 0.0
    %2113 = vmatpush1.xpose.msra.mxu0 0.0
    %2114 = vmatprep.subr.mxu0 0.0
    %2115 = vmatpush1.xpose.msra.mxu0 0.0
    %2116 = vmatprep.subr.mxu0 0.0
    %2117 = vmatpush1.xpose.msra.mxu0 0.0
    %2118 = vmatprep.subr.mxu0 0.0
    %2119 = vmatpush1.xpose.msra.mxu0 0.0
    %2120 = vmatprep.subr.mxu0 0.0
    %2121 = vmatpush1.xpose.msra.mxu0 0.0
    %2122 = vmatprep.subr.mxu0 0.0
    %2123 = vmatpush1.xpose.msra.mxu0 0.0
    %2124 = vmatprep.subr.mxu0 0.0
    %2125 = vmatpush1.xpose.msra.mxu0 0.0
    %2126 = vmatprep.subr.mxu0 0.0
    %2127 = vmatpush1.xpose.msra.mxu0 0.0
    %2128 = vmatprep.subr.mxu0 0.0
    %2129 = vmatpush1.xpose.msra.mxu0 0.0
    %2130 = vmatprep.subr.mxu0 0.0
    %2131 = vmatpush1.xpose.msra.mxu0 0.0
    %2132 = vmatprep.subr.mxu0 0.0
    %2133 = vmatpush1.xpose.msra.mxu0 0.0
    %2134 = vmatprep.subr.mxu0 0.0
    %2135 = vmatpush1.xpose.msra.mxu0 0.0
    %2136 = vmatprep.subr.mxu0 0.0
    %2137 = vmatpush1.xpose.msra.mxu0 0.0
    %2138 = vmatprep.subr.mxu0 0.0
    %2139 = vmatpush1.xpose.msra.mxu0 0.0
    %2140 = vmatprep.subr.mxu0 0.0
    %2141 = vmatpush1.xpose.msra.mxu0 0.0
    %2142 = vmatprep.subr.mxu0 0.0
    %2143 = vmatpush1.xpose.msra.mxu0 0.0
    %2144 = vmatprep.subr.mxu0 0.0
    %2145 = vmatpush1.xpose.msra.mxu0 0.0
    %2146 = vmatprep.subr.mxu0 0.0
    %2147 = vmatpush1.xpose.msra.mxu0 0.0
    %2148 = vmatprep.subr.mxu0 0.0
    %2149 = vmatpush1.xpose.msra.mxu0 0.0
    %2150 = vmatprep.subr.mxu0 0.0
    %2151 = vmatpush1.xpose.msra.mxu0 0.0
    %2152 = vmatprep.mubr.f32.mxu0 0.0
    %2153 = vmatmul.mubr.f32.gmra.mrb[0].mxu0 %v2084
    %v2154 = vpop.f32.mrb[0].mxu0
    %v2155 = vadd.f32 0.0, %v2154
    %v2156 = vpop.f32.mrb[0].mxu0
    %2157 = vdwg.mxu0
    %v2158 = vmul.f32 %v2155, 0.35355338
    %v2159 = vsel %vm257, %v2158, -inf
    %2160 = vmax.xlane.f32.xlu0 %v2159
    %v2161 = vpop.xlane.xlu0 %2160
    %v2162 = vsub.f32 %v2158, %v2161
    %v2163 = vmul.f32 %v2162, 1.442695
    %v2164 = vpow.pop %v2163
    %v2165 = vsel %vm257, %v2164, 0.0
    %2166 = vadd.xlane.f32.xlu0 %v2165
    %v2167 = vpop.xlane.xlu0 %2166
    %v2168 = vrcp.pop %v2167
    %v2169 = vmul.f32 %v2164, %v2168
    %2170 = vrot.lane.b32.xlu0 %v2073, 64
    %v2171 = vpop.permute.xlu0 %2170
    %v2174 = vsel %vm257, %v2169, 0
    %2176 = vmatprep.subr.mxu0 0.0
    %2177 = vmatpush1.msra.mxu0 %v2171
    %2178 = vmatprep.subr.mxu0 0.0
    %2179 = vmatpush1.msra.mxu0 0.0
    %2180 = vmatprep.subr.mxu0 0.0
    %2181 = vmatpush1.msra.mxu0 0.0
    %2182 = vmatprep.subr.mxu0 0.0
    %2183 = vmatpush1.msra.mxu0 0.0
    %2184 = vmatprep.subr.mxu0 0.0
    %2185 = vmatpush1.msra.mxu0 0.0
    %2186 = vmatprep.subr.mxu0 0.0
    %2187 = vmatpush1.msra.mxu0 0.0
    %2188 = vmatprep.subr.mxu0 0.0
    %2189 = vmatpush1.msra.mxu0 0.0
    %2190 = vmatprep.subr.mxu0 0.0
    %2191 = vmatpush1.msra.mxu0 0.0
    %2192 = vmatprep.subr.mxu0 0.0
    %2193 = vmatpush1.msra.mxu0 0.0
    %2194 = vmatprep.subr.mxu0 0.0
    %2195 = vmatpush1.msra.mxu0 0.0
    %2196 = vmatprep.subr.mxu0 0.0
    %2197 = vmatpush1.msra.mxu0 0.0
    %2198 = vmatprep.subr.mxu0 0.0
    %2199 = vmatpush1.msra.mxu0 0.0
    %2200 = vmatprep.subr.mxu0 0.0
    %2201 = vmatpush1.msra.mxu0 0.0
    %2202 = vmatprep.subr.mxu0 0.0
    %2203 = vmatpush1.msra.mxu0 0.0
    %2204 = vmatprep.subr.mxu0 0.0
    %2205 = vmatpush1.msra.mxu0 0.0
    %2206 = vmatprep.subr.mxu0 0.0
    %2207 = vmatpush1.msra.mxu0 0.0
    %2208 = vmatprep.subr.mxu0 0.0
    %2209 = vmatpush1.msra.mxu0 0.0
    %2210 = vmatprep.subr.mxu0 0.0
    %2211 = vmatpush1.msra.mxu0 0.0
    %2212 = vmatprep.subr.mxu0 0.0
    %2213 = vmatpush1.msra.mxu0 0.0
    %2214 = vmatprep.subr.mxu0 0.0
    %2215 = vmatpush1.msra.mxu0 0.0
    %2216 = vmatprep.subr.mxu0 0.0
    %2217 = vmatpush1.msra.mxu0 0.0
    %2218 = vmatprep.subr.mxu0 0.0
    %2219 = vmatpush1.msra.mxu0 0.0
    %2220 = vmatprep.subr.mxu0 0.0
    %2221 = vmatpush1.msra.mxu0 0.0
    %2222 = vmatprep.subr.mxu0 0.0
    %2223 = vmatpush1.msra.mxu0 0.0
    %2224 = vmatprep.subr.mxu0 0.0
    %2225 = vmatpush1.msra.mxu0 0.0
    %2226 = vmatprep.subr.mxu0 0.0
    %2227 = vmatpush1.msra.mxu0 0.0
    %2228 = vmatprep.subr.mxu0 0.0
    %2229 = vmatpush1.msra.mxu0 0.0
    %2230 = vmatprep.subr.mxu0 0.0
    %2231 = vmatpush1.msra.mxu0 0.0
    %2232 = vmatprep.subr.mxu0 0.0
    %2233 = vmatpush1.msra.mxu0 0.0
    %2234 = vmatprep.subr.mxu0 0.0
    %2235 = vmatpush1.msra.mxu0 0.0
    %2236 = vmatprep.subr.mxu0 0.0
    %2237 = vmatpush1.msra.mxu0 0.0
    %2238 = vmatprep.subr.mxu0 0.0
    %2239 = vmatpush1.msra.mxu0 0.0
    %2240 = vmatprep.mubr.f32.mxu0 0.0
    %2241 = vmatmul.mubr.f32.gmra.mrb[0].mxu0 %v2174
    %v2242 = vpop.f32.mrb[0].mxu0
    %v2243 = vadd.f32 0.0, %v2242
    %v2244 = vpop.f32.mrb[0].mxu0
    %2245 = vdwg.mxu0
    %2246 = vrot.lane.b32.xlu0 %v2073, 120
    %v2247 = vpop.permute.xlu0 %2246
    %2248 = vrot.lane.b32.xlu0 %v2073, 88
    %v2249 = vpop.permute.xlu0 %2248
    %v2250 = vsel %vm257, %v2247, 0
    %v2252 = vsel %vm257, %v2249, 0
    %2254 = vmatprep.subr.mxu0 0.0
    %2255 = vmatpush1.xpose.msra.mxu0 %v2252
    %2256 = vmatprep.subr.mxu0 0.0
    %2257 = vmatpush1.xpose.msra.mxu0 0.0
    %2258 = vmatprep.subr.mxu0 0.0
    %2259 = vmatpush1.xpose.msra.mxu0 0.0
    %2260 = vmatprep.subr.mxu0 0.0
    %2261 = vmatpush1.xpose.msra.mxu0 0.0
    %2262 = vmatprep.subr.mxu0 0.0
    %2263 = vmatpush1.xpose.msra.mxu0 0.0
    %2264 = vmatprep.subr.mxu0 0.0
    %2265 = vmatpush1.xpose.msra.mxu0 0.0
    %2266 = vmatprep.subr.mxu0 0.0
    %2267 = vmatpush1.xpose.msra.mxu0 0.0
    %2268 = vmatprep.subr.mxu0 0.0
    %2269 = vmatpush1.xpose.msra.mxu0 0.0
    %2270 = vmatprep.subr.mxu0 0.0
    %2271 = vmatpush1.xpose.msra.mxu0 0.0
    %2272 = vmatprep.subr.mxu0 0.0
    %2273 = vmatpush1.xpose.msra.mxu0 0.0
    %2274 = vmatprep.subr.mxu0 0.0
    %2275 = vmatpush1.xpose.msra.mxu0 0.0
    %2276 = vmatprep.subr.mxu0 0.0
    %2277 = vmatpush1.xpose.msra.mxu0 0.0
    %2278 = vmatprep.subr.mxu0 0.0
    %2279 = vmatpush1.xpose.msra.mxu0 0.0
    %2280 = vmatprep.subr.mxu0 0.0
    %2281 = vmatpush1.xpose.msra.mxu0 0.0
    %2282 = vmatprep.subr.mxu0 0.0
    %2283 = vmatpush1.xpose.msra.mxu0 0.0
    %2284 = vmatprep.subr.mxu0 0.0
    %2285 = vmatpush1.xpose.msra.mxu0 0.0
    %2286 = vmatprep.subr.mxu0 0.0
    %2287 = vmatpush1.xpose.msra.mxu0 0.0
    %2288 = vmatprep.subr.mxu0 0.0
    %2289 = vmatpush1.xpose.msra.mxu0 0.0
    %2290 = vmatprep.subr.mxu0 0.0
    %2291 = vmatpush1.xpose.msra.mxu0 0.0
    %2292 = vmatprep.subr.mxu0 0.0
    %2293 = vmatpush1.xpose.msra.mxu0 0.0
    %2294 = vmatprep.subr.mxu0 0.0
    %2295 = vmatpush1.xpose.msra.mxu0 0.0
    %2296 = vmatprep.subr.mxu0 0.0
    %2297 = vmatpush1.xpose.msra.mxu0 0.0
    %2298 = vmatprep.subr.mxu0 0.0
    %2299 = vmatpush1.xpose.msra.mxu0 0.0
    %2300 = vmatprep.subr.mxu0 0.0
    %2301 = vmatpush1.xpose.msra.mxu0 0.0
    %2302 = vmatprep.subr.mxu0 0.0
    %2303 = vmatpush1.xpose.msra.mxu0 0.0
    %2304 = vmatprep.subr.mxu0 0.0
    %2305 = vmatpush1.xpose.msra.mxu0 0.0
    %2306 = vmatprep.subr.mxu0 0.0
    %2307 = vmatpush1.xpose.msra.mxu0 0.0
    %2308 = vmatprep.subr.mxu0 0.0
    %2309 = vmatpush1.xpose.msra.mxu0 0.0
    %2310 = vmatprep.subr.mxu0 0.0
    %2311 = vmatpush1.xpose.msra.mxu0 0.0
    %2312 = vmatprep.subr.mxu0 0.0
    %2313 = vmatpush1.xpose.msra.mxu0 0.0
    %2314 = vmatprep.subr.mxu0 0.0
    %2315 = vmatpush1.xpose.msra.mxu0 0.0
    %2316 = vmatprep.subr.mxu0 0.0
    %2317 = vmatpush1.xpose.msra.mxu0 0.0
    %2318 = vmatprep.mubr.f32.mxu0 0.0
    %2319 = vmatmul.mubr.f32.gmra.mrb[0].mxu0 %v2250
    %v2320 = vpop.f32.mrb[0].mxu0
    %v2321 = vadd.f32 0.0, %v2320
    %v2322 = vpop.f32.mrb[0].mxu0
    %2323 = vdwg.mxu0
    %v2324 = vmul.f32 %v2321, 0.35355338
    %v2325 = vsel %vm257, %v2324, -inf
    %2326 = vmax.xlane.f32.xlu0 %v2325
    %v2327 = vpop.xlane.xlu0 %2326
    %v2328 = vsub.f32 %v2324, %v2327
    %v2329 = vmul.f32 %v2328, 1.442695
    %v2330 = vpow.pop %v2329
    %v2331 = vsel %vm257, %v2330, 0.0
    %2332 = vadd.xlane.f32.xlu0 %v2331
    %v2333 = vpop.xlane.xlu0 %2332
    %v2334 = vrcp.pop %v2333
    %v2335 = vmul.f32 %v2330, %v2334
    %2336 = vrot.lane.b32.xlu0 %v2073, 56
    %v2337 = vpop.permute.xlu0 %2336
    %v2340 = vsel %vm257, %v2335, 0
    %2342 = vmatprep.subr.mxu0 0.0
    %2343 = vmatpush1.msra.mxu0 %v2337
    %2344 = vmatprep.subr.mxu0 0.0
    %2345 = vmatpush1.msra.mxu0 0.0
    %2346 = vmatprep.subr.mxu0 0.0
    %2347 = vmatpush1.msra.mxu0 0.0
    %2348 = vmatprep.subr.mxu0 0.0
    %2349 = vmatpush1.msra.mxu0 0.0
    %2350 = vmatprep.subr.mxu0 0.0
    %2351 = vmatpush1.msra.mxu0 0.0
    %2352 = vmatprep.subr.mxu0 0.0
    %2353 = vmatpush1.msra.mxu0 0.0
    %2354 = vmatprep.subr.mxu0 0.0
    %2355 = vmatpush1.msra.mxu0 0.0
    %2356 = vmatprep.subr.mxu0 0.0
    %2357 = vmatpush1.msra.mxu0 0.0
    %2358 = vmatprep.subr.mxu0 0.0
    %2359 = vmatpush1.msra.mxu0 0.0
    %2360 = vmatprep.subr.mxu0 0.0
    %2361 = vmatpush1.msra.mxu0 0.0
    %2362 = vmatprep.subr.mxu0 0.0
    %2363 = vmatpush1.msra.mxu0 0.0
    %2364 = vmatprep.subr.mxu0 0.0
    %2365 = vmatpush1.msra.mxu0 0.0
    %2366 = vmatprep.subr.mxu0 0.0
    %2367 = vmatpush1.msra.mxu0 0.0
    %2368 = vmatprep.subr.mxu0 0.0
    %2369 = vmatpush1.msra.mxu0 0.0
    %2370 = vmatprep.subr.mxu0 0.0
    %2371 = vmatpush1.msra.mxu0 0.0
    %2372 = vmatprep.subr.mxu0 0.0
    %2373 = vmatpush1.msra.mxu0 0.0
    %2374 = vmatprep.subr.mxu0 0.0
    %2375 = vmatpush1.msra.mxu0 0.0
    %2376 = vmatprep.subr.mxu0 0.0
    %2377 = vmatpush1.msra.mxu0 0.0
    %2378 = vmatprep.subr.mxu0 0.0
    %2379 = vmatpush1.msra.mxu0 0.0
    %2380 = vmatprep.subr.mxu0 0.0
    %2381 = vmatpush1.msra.mxu0 0.0
    %2382 = vmatprep.subr.mxu0 0.0
    %2383 = vmatpush1.msra.mxu0 0.0
    %2384 = vmatprep.subr.mxu0 0.0
    %2385 = vmatpush1.msra.mxu0 0.0
    %2386 = vmatprep.subr.mxu0 0.0
    %2387 = vmatpush1.msra.mxu0 0.0
    %2388 = vmatprep.subr.mxu0 0.0
    %2389 = vmatpush1.msra.mxu0 0.0
    %2390 = vmatprep.subr.mxu0 0.0
    %2391 = vmatpush1.msra.mxu0 0.0
    %2392 = vmatprep.subr.mxu0 0.0
    %2393 = vmatpush1.msra.mxu0 0.0
    %2394 = vmatprep.subr.mxu0 0.0
    %2395 = vmatpush1.msra.mxu0 0.0
    %2396 = vmatprep.subr.mxu0 0.0
    %2397 = vmatpush1.msra.mxu0 0.0
    %2398 = vmatprep.subr.mxu0 0.0
    %2399 = vmatpush1.msra.mxu0 0.0
    %2400 = vmatprep.subr.mxu0 0.0
    %2401 = vmatpush1.msra.mxu0 0.0
    %2402 = vmatprep.subr.mxu0 0.0
    %2403 = vmatpush1.msra.mxu0 0.0
    %2404 = vmatprep.subr.mxu0 0.0
    %2405 = vmatpush1.msra.mxu0 0.0
    %2406 = vmatprep.mubr.f32.mxu0 0.0
    %2407 = vmatmul.mubr.f32.gmra.mrb[0].mxu0 %v2340
    %v2408 = vpop.f32.mrb[0].mxu0
    %v2409 = vadd.f32 0.0, %v2408
    %v2410 = vpop.f32.mrb[0].mxu0
    %2411 = vdwg.mxu0
    %2412 = vrot.lane.b32.xlu0 %v2073, 112
    %v2413 = vpop.permute.xlu0 %2412
    %2414 = vrot.lane.b32.xlu0 %v2073, 80
    %v2415 = vpop.permute.xlu0 %2414
    %v2416 = vsel %vm257, %v2413, 0
    %v2418 = vsel %vm257, %v2415, 0
    %2420 = vmatprep.subr.mxu0 0.0
    %2421 = vmatpush1.xpose.msra.mxu0 %v2418
    %2422 = vmatprep.subr.mxu0 0.0
    %2423 = vmatpush1.xpose.msra.mxu0 0.0
    %2424 = vmatprep.subr.mxu0 0.0
    %2425 = vmatpush1.xpose.msra.mxu0 0.0
    %2426 = vmatprep.subr.mxu0 0.0
    %2427 = vmatpush1.xpose.msra.mxu0 0.0
    %2428 = vmatprep.subr.mxu0 0.0
    %2429 = vmatpush1.xpose.msra.mxu0 0.0
    %2430 = vmatprep.subr.mxu0 0.0
    %2431 = vmatpush1.xpose.msra.mxu0 0.0
    %2432 = vmatprep.subr.mxu0 0.0
    %2433 = vmatpush1.xpose.msra.mxu0 0.0
    %2434 = vmatprep.subr.mxu0 0.0
    %2435 = vmatpush1.xpose.msra.mxu0 0.0
    %2436 = vmatprep.subr.mxu0 0.0
    %2437 = vmatpush1.xpose.msra.mxu0 0.0
    %2438 = vmatprep.subr.mxu0 0.0
    %2439 = vmatpush1.xpose.msra.mxu0 0.0
    %2440 = vmatprep.subr.mxu0 0.0
    %2441 = vmatpush1.xpose.msra.mxu0 0.0
    %2442 = vmatprep.subr.mxu0 0.0
    %2443 = vmatpush1.xpose.msra.mxu0 0.0
    %2444 = vmatprep.subr.mxu0 0.0
    %2445 = vmatpush1.xpose.msra.mxu0 0.0
    %2446 = vmatprep.subr.mxu0 0.0
    %2447 = vmatpush1.xpose.msra.mxu0 0.0
    %2448 = vmatprep.subr.mxu0 0.0
    %2449 = vmatpush1.xpose.msra.mxu0 0.0
    %2450 = vmatprep.subr.mxu0 0.0
    %2451 = vmatpush1.xpose.msra.mxu0 0.0
    %2452 = vmatprep.subr.mxu0 0.0
    %2453 = vmatpush1.xpose.msra.mxu0 0.0
    %2454 = vmatprep.subr.mxu0 0.0
    %2455 = vmatpush1.xpose.msra.mxu0 0.0
    %2456 = vmatprep.subr.mxu0 0.0
    %2457 = vmatpush1.xpose.msra.mxu0 0.0
    %2458 = vmatprep.subr.mxu0 0.0
    %2459 = vmatpush1.xpose.msra.mxu0 0.0
    %2460 = vmatprep.subr.mxu0 0.0
    %2461 = vmatpush1.xpose.msra.mxu0 0.0
    %2462 = vmatprep.subr.mxu0 0.0
    %2463 = vmatpush1.xpose.msra.mxu0 0.0
    %2464 = vmatprep.subr.mxu0 0.0
    %2465 = vmatpush1.xpose.msra.mxu0 0.0
    %2466 = vmatprep.subr.mxu0 0.0
    %2467 = vmatpush1.xpose.msra.mxu0 0.0
    %2468 = vmatprep.subr.mxu0 0.0
    %2469 = vmatpush1.xpose.msra.mxu0 0.0
    %2470 = vmatprep.subr.mxu0 0.0
    %2471 = vmatpush1.xpose.msra.mxu0 0.0
    %2472 = vmatprep.subr.mxu0 0.0
    %2473 = vmatpush1.xpose.msra.mxu0 0.0
    %2474 = vmatprep.subr.mxu0 0.0
    %2475 = vmatpush1.xpose.msra.mxu0 0.0
    %2476 = vmatprep.subr.mxu0 0.0
    %2477 = vmatpush1.xpose.msra.mxu0 0.0
    %2478 = vmatprep.subr.mxu0 0.0
    %2479 = vmatpush1.xpose.msra.mxu0 0.0
    %2480 = vmatprep.subr.mxu0 0.0
    %2481 = vmatpush1.xpose.msra.mxu0 0.0
    %2482 = vmatprep.subr.mxu0 0.0
    %2483 = vmatpush1.xpose.msra.mxu0 0.0
    %2484 = vmatprep.mubr.f32.mxu0 0.0
    %2485 = vmatmul.mubr.f32.gmra.mrb[0].mxu0 %v2416
    %v2486 = vpop.f32.mrb[0].mxu0
    %v2487 = vadd.f32 0.0, %v2486
    %v2488 = vpop.f32.mrb[0].mxu0
    %2489 = vdwg.mxu0
    %v2490 = vmul.f32 %v2487, 0.35355338
    %v2491 = vsel %vm257, %v2490, -inf
    %2492 = vmax.xlane.f32.xlu0 %v2491
    %v2493 = vpop.xlane.xlu0 %2492
    %v2494 = vsub.f32 %v2490, %v2493
    %v2495 = vmul.f32 %v2494, 1.442695
    %v2496 = vpow.pop %v2495
    %v2497 = vsel %vm257, %v2496, 0.0
    %2498 = vadd.xlane.f32.xlu0 %v2497
    %v2499 = vpop.xlane.xlu0 %2498
    %v2500 = vrcp.pop %v2499
    %v2501 = vmul.f32 %v2496, %v2500
    %2502 = vrot.lane.b32.xlu0 %v2073, 48
    %v2503 = vpop.permute.xlu0 %2502
    %v2506 = vsel %vm257, %v2501, 0
    %2508 = vmatprep.subr.mxu0 0.0
    %2509 = vmatpush1.msra.mxu0 %v2503
    %2510 = vmatprep.subr.mxu0 0.0
    %2511 = vmatpush1.msra.mxu0 0.0
    %2512 = vmatprep.subr.mxu0 0.0
    %2513 = vmatpush1.msra.mxu0 0.0
    %2514 = vmatprep.subr.mxu0 0.0
    %2515 = vmatpush1.msra.mxu0 0.0
    %2516 = vmatprep.subr.mxu0 0.0
    %2517 = vmatpush1.msra.mxu0 0.0
    %2518 = vmatprep.subr.mxu0 0.0
    %2519 = vmatpush1.msra.mxu0 0.0
    %2520 = vmatprep.subr.mxu0 0.0
    %2521 = vmatpush1.msra.mxu0 0.0
    %2522 = vmatprep.subr.mxu0 0.0
    %2523 = vmatpush1.msra.mxu0 0.0
    %2524 = vmatprep.subr.mxu0 0.0
    %2525 = vmatpush1.msra.mxu0 0.0
    %2526 = vmatprep.subr.mxu0 0.0
    %2527 = vmatpush1.msra.mxu0 0.0
    %2528 = vmatprep.subr.mxu0 0.0
    %2529 = vmatpush1.msra.mxu0 0.0
    %2530 = vmatprep.subr.mxu0 0.0
    %2531 = vmatpush1.msra.mxu0 0.0
    %2532 = vmatprep.subr.mxu0 0.0
    %2533 = vmatpush1.msra.mxu0 0.0
    %2534 = vmatprep.subr.mxu0 0.0
    %2535 = vmatpush1.msra.mxu0 0.0
    %2536 = vmatprep.subr.mxu0 0.0
    %2537 = vmatpush1.msra.mxu0 0.0
    %2538 = vmatprep.subr.mxu0 0.0
    %2539 = vmatpush1.msra.mxu0 0.0
    %2540 = vmatprep.subr.mxu0 0.0
    %2541 = vmatpush1.msra.mxu0 0.0
    %2542 = vmatprep.subr.mxu0 0.0
    %2543 = vmatpush1.msra.mxu0 0.0
    %2544 = vmatprep.subr.mxu0 0.0
    %2545 = vmatpush1.msra.mxu0 0.0
    %2546 = vmatprep.subr.mxu0 0.0
    %2547 = vmatpush1.msra.mxu0 0.0
    %2548 = vmatprep.subr.mxu0 0.0
    %2549 = vmatpush1.msra.mxu0 0.0
    %2550 = vmatprep.subr.mxu0 0.0
    %2551 = vmatpush1.msra.mxu0 0.0
    %2552 = vmatprep.subr.mxu0 0.0
    %2553 = vmatpush1.msra.mxu0 0.0
    %2554 = vmatprep.subr.mxu0 0.0
    %2555 = vmatpush1.msra.mxu0 0.0
    %2556 = vmatprep.subr.mxu0 0.0
    %2557 = vmatpush1.msra.mxu0 0.0
    %2558 = vmatprep.subr.mxu0 0.0
    %2559 = vmatpush1.msra.mxu0 0.0
    %2560 = vmatprep.subr.mxu0 0.0
    %2561 = vmatpush1.msra.mxu0 0.0
    %2562 = vmatprep.subr.mxu0 0.0
    %2563 = vmatpush1.msra.mxu0 0.0
    %2564 = vmatprep.subr.mxu0 0.0
    %2565 = vmatpush1.msra.mxu0 0.0
    %2566 = vmatprep.subr.mxu0 0.0
    %2567 = vmatpush1.msra.mxu0 0.0
    %2568 = vmatprep.subr.mxu0 0.0
    %2569 = vmatpush1.msra.mxu0 0.0
    %2570 = vmatprep.subr.mxu0 0.0
    %2571 = vmatpush1.msra.mxu0 0.0
    %2572 = vmatprep.mubr.f32.mxu0 0.0
    %2573 = vmatmul.mubr.f32.gmra.mrb[0].mxu0 %v2506
    %v2574 = vpop.f32.mrb[0].mxu0
    %v2575 = vadd.f32 0.0, %v2574
    %v2576 = vpop.f32.mrb[0].mxu0
    %2577 = vdwg.mxu0
    %2578 = vrot.lane.b32.xlu0 %v2073, 104
    %v2579 = vpop.permute.xlu0 %2578
    %2580 = vrot.lane.b32.xlu0 %v2073, 72
    %v2581 = vpop.permute.xlu0 %2580
    %v2582 = vsel %vm257, %v2579, 0
    %v2584 = vsel %vm257, %v2581, 0
    %2586 = vmatprep.subr.mxu0 0.0
    %2587 = vmatpush1.xpose.msra.mxu0 %v2584
    %2588 = vmatprep.subr.mxu0 0.0
    %2589 = vmatpush1.xpose.msra.mxu0 0.0
    %2590 = vmatprep.subr.mxu0 0.0
    %2591 = vmatpush1.xpose.msra.mxu0 0.0
    %2592 = vmatprep.subr.mxu0 0.0
    %2593 = vmatpush1.xpose.msra.mxu0 0.0
    %2594 = vmatprep.subr.mxu0 0.0
    %2595 = vmatpush1.xpose.msra.mxu0 0.0
    %2596 = vmatprep.subr.mxu0 0.0
    %2597 = vmatpush1.xpose.msra.mxu0 0.0
    %2598 = vmatprep.subr.mxu0 0.0
    %2599 = vmatpush1.xpose.msra.mxu0 0.0
    %2600 = vmatprep.subr.mxu0 0.0
    %2601 = vmatpush1.xpose.msra.mxu0 0.0
    %2602 = vmatprep.subr.mxu0 0.0
    %2603 = vmatpush1.xpose.msra.mxu0 0.0
    %2604 = vmatprep.subr.mxu0 0.0
    %2605 = vmatpush1.xpose.msra.mxu0 0.0
    %2606 = vmatprep.subr.mxu0 0.0
    %2607 = vmatpush1.xpose.msra.mxu0 0.0
    %2608 = vmatprep.subr.mxu0 0.0
    %2609 = vmatpush1.xpose.msra.mxu0 0.0
    %2610 = vmatprep.subr.mxu0 0.0
    %2611 = vmatpush1.xpose.msra.mxu0 0.0
    %2612 = vmatprep.subr.mxu0 0.0
    %2613 = vmatpush1.xpose.msra.mxu0 0.0
    %2614 = vmatprep.subr.mxu0 0.0
    %2615 = vmatpush1.xpose.msra.mxu0 0.0
    %2616 = vmatprep.subr.mxu0 0.0
    %2617 = vmatpush1.xpose.msra.mxu0 0.0
    %2618 = vmatprep.subr.mxu0 0.0
    %2619 = vmatpush1.xpose.msra.mxu0 0.0
    %2620 = vmatprep.subr.mxu0 0.0
    %2621 = vmatpush1.xpose.msra.mxu0 0.0
    %2622 = vmatprep.subr.mxu0 0.0
    %2623 = vmatpush1.xpose.msra.mxu0 0.0
    %2624 = vmatprep.subr.mxu0 0.0
    %2625 = vmatpush1.xpose.msra.mxu0 0.0
    %2626 = vmatprep.subr.mxu0 0.0
    %2627 = vmatpush1.xpose.msra.mxu0 0.0
    %2628 = vmatprep.subr.mxu0 0.0
    %2629 = vmatpush1.xpose.msra.mxu0 0.0
    %2630 = vmatprep.subr.mxu0 0.0
    %2631 = vmatpush1.xpose.msra.mxu0 0.0
    %2632 = vmatprep.subr.mxu0 0.0
    %2633 = vmatpush1.xpose.msra.mxu0 0.0
    %2634 = vmatprep.subr.mxu0 0.0
    %2635 = vmatpush1.xpose.msra.mxu0 0.0
    %2636 = vmatprep.subr.mxu0 0.0
    %2637 = vmatpush1.xpose.msra.mxu0 0.0
    %2638 = vmatprep.subr.mxu0 0.0
    %2639 = vmatpush1.xpose.msra.mxu0 0.0
    %2640 = vmatprep.subr.mxu0 0.0
    %2641 = vmatpush1.xpose.msra.mxu0 0.0
    %2642 = vmatprep.subr.mxu0 0.0
    %2643 = vmatpush1.xpose.msra.mxu0 0.0
    %2644 = vmatprep.subr.mxu0 0.0
    %2645 = vmatpush1.xpose.msra.mxu0 0.0
    %2646 = vmatprep.subr.mxu0 0.0
    %2647 = vmatpush1.xpose.msra.mxu0 0.0
    %2648 = vmatprep.subr.mxu0 0.0
    %2649 = vmatpush1.xpose.msra.mxu0 0.0
    %2650 = vmatprep.mubr.f32.mxu0 0.0
    %2651 = vmatmul.mubr.f32.gmra.mrb[0].mxu0 %v2582
    %v2652 = vpop.f32.mrb[0].mxu0
    %v2653 = vadd.f32 0.0, %v2652
    %v2654 = vpop.f32.mrb[0].mxu0
    %2655 = vdwg.mxu0
    %v2656 = vmul.f32 %v2653, 0.35355338
    %v2657 = vsel %vm257, %v2656, -inf
    %2658 = vmax.xlane.f32.xlu0 %v2657
    %v2659 = vpop.xlane.xlu0 %2658
    %v2660 = vsub.f32 %v2656, %v2659
    %v2661 = vmul.f32 %v2660, 1.442695
    %v2662 = vpow.pop %v2661
    %v2663 = vsel %vm257, %v2662, 0.0
    %2664 = vadd.xlane.f32.xlu0 %v2663
    %v2665 = vpop.xlane.xlu0 %2664
    %v2666 = vrcp.pop %v2665
    %v2667 = vmul.f32 %v2662, %v2666
    %2668 = vrot.lane.b32.xlu0 %v2073, 40
    %v2669 = vpop.permute.xlu0 %2668
    %v2672 = vsel %vm257, %v2667, 0
    %2674 = vmatprep.subr.mxu0 0.0
    %2675 = vmatpush1.msra.mxu0 %v2669
    %2676 = vmatprep.subr.mxu0 0.0
    %2677 = vmatpush1.msra.mxu0 0.0
    %2678 = vmatprep.subr.mxu0 0.0
    %2679 = vmatpush1.msra.mxu0 0.0
    %2680 = vmatprep.subr.mxu0 0.0
    %2681 = vmatpush1.msra.mxu0 0.0
    %2682 = vmatprep.subr.mxu0 0.0
    %2683 = vmatpush1.msra.mxu0 0.0
    %2684 = vmatprep.subr.mxu0 0.0
    %2685 = vmatpush1.msra.mxu0 0.0
    %2686 = vmatprep.subr.mxu0 0.0
    %2687 = vmatpush1.msra.mxu0 0.0
    %2688 = vmatprep.subr.mxu0 0.0
    %2689 = vmatpush1.msra.mxu0 0.0
    %2690 = vmatprep.subr.mxu0 0.0
    %2691 = vmatpush1.msra.mxu0 0.0
    %2692 = vmatprep.subr.mxu0 0.0
    %2693 = vmatpush1.msra.mxu0 0.0
    %2694 = vmatprep.subr.mxu0 0.0
    %2695 = vmatpush1.msra.mxu0 0.0
    %2696 = vmatprep.subr.mxu0 0.0
    %2697 = vmatpush1.msra.mxu0 0.0
    %2698 = vmatprep.subr.mxu0 0.0
    %2699 = vmatpush1.msra.mxu0 0.0
    %2700 = vmatprep.subr.mxu0 0.0
    %2701 = vmatpush1.msra.mxu0 0.0
    %2702 = vmatprep.subr.mxu0 0.0
    %2703 = vmatpush1.msra.mxu0 0.0
    %2704 = vmatprep.subr.mxu0 0.0
    %2705 = vmatpush1.msra.mxu0 0.0
    %2706 = vmatprep.subr.mxu0 0.0
    %2707 = vmatpush1.msra.mxu0 0.0
    %2708 = vmatprep.subr.mxu0 0.0
    %2709 = vmatpush1.msra.mxu0 0.0
    %2710 = vmatprep.subr.mxu0 0.0
    %2711 = vmatpush1.msra.mxu0 0.0
    %2712 = vmatprep.subr.mxu0 0.0
    %2713 = vmatpush1.msra.mxu0 0.0
    %2714 = vmatprep.subr.mxu0 0.0
    %2715 = vmatpush1.msra.mxu0 0.0
    %2716 = vmatprep.subr.mxu0 0.0
    %2717 = vmatpush1.msra.mxu0 0.0
    %2718 = vmatprep.subr.mxu0 0.0
    %2719 = vmatpush1.msra.mxu0 0.0
    %2720 = vmatprep.subr.mxu0 0.0
    %2721 = vmatpush1.msra.mxu0 0.0
    %2722 = vmatprep.subr.mxu0 0.0
    %2723 = vmatpush1.msra.mxu0 0.0
    %2724 = vmatprep.subr.mxu0 0.0
    %2725 = vmatpush1.msra.mxu0 0.0
    %2726 = vmatprep.subr.mxu0 0.0
    %2727 = vmatpush1.msra.mxu0 0.0
    %2728 = vmatprep.subr.mxu0 0.0
    %2729 = vmatpush1.msra.mxu0 0.0
    %2730 = vmatprep.subr.mxu0 0.0
    %2731 = vmatpush1.msra.mxu0 0.0
    %2732 = vmatprep.subr.mxu0 0.0
    %2733 = vmatpush1.msra.mxu0 0.0
    %2734 = vmatprep.subr.mxu0 0.0
    %2735 = vmatpush1.msra.mxu0 0.0
    %2736 = vmatprep.subr.mxu0 0.0
    %2737 = vmatpush1.msra.mxu0 0.0
    %2738 = vmatprep.mubr.f32.mxu0 0.0
    %2739 = vmatmul.mubr.f32.gmra.mrb[0].mxu0 %v2672
    %v2740 = vpop.f32.mrb[0].mxu0
    %v2741 = vadd.f32 0.0, %v2740
    %v2742 = vpop.f32.mrb[0].mxu0
    %2743 = vdwg.mxu0
    %2745 = vrot.lane.b32.xlu0 %v2409, 8
    %v2746 = vpop.permute.xlu0 %2745
    %2749 = vrot.lane.b32.xlu0 %v2575, 16
    %v2750 = vpop.permute.xlu0 %2749
    %2753 = vrot.lane.b32.xlu0 %v2741, 24
    %v2754 = vpop.permute.xlu0 %2753
    %v2756 = vsel %vm257, %v2243, %v2746
    %v2757 = vsel %vm931, %v2756, %v2750
    %v2758 = vsel %vm933, %v2757, %v2754
    %2760 = vrot.lane.b32.xlu0 %v2078, 96
    %v2761 = vpop.permute.xlu0 %2760
    %v2762 = vsel %vm257, %v2078, 0
    %v2764 = vsel %vm257, %v2761, 0
    %2766 = vmatprep.subr.mxu0 0.0
    %2767 = vmatpush1.xpose.msra.mxu0 %v2764
    %2768 = vmatprep.subr.mxu0 0.0
    %2769 = vmatpush1.xpose.msra.mxu0 0.0
    %2770 = vmatprep.subr.mxu0 0.0
    %2771 = vmatpush1.xpose.msra.mxu0 0.0
    %2772 = vmatprep.subr.mxu0 0.0
    %2773 = vmatpush1.xpose.msra.mxu0 0.0
    %2774 = vmatprep.subr.mxu0 0.0
    %2775 = vmatpush1.xpose.msra.mxu0 0.0
    %2776 = vmatprep.subr.mxu0 0.0
    %2777 = vmatpush1.xpose.msra.mxu0 0.0
    %2778 = vmatprep.subr.mxu0 0.0
    %2779 = vmatpush1.xpose.msra.mxu0 0.0
    %2780 = vmatprep.subr.mxu0 0.0
    %2781 = vmatpush1.xpose.msra.mxu0 0.0
    %2782 = vmatprep.subr.mxu0 0.0
    %2783 = vmatpush1.xpose.msra.mxu0 0.0
    %2784 = vmatprep.subr.mxu0 0.0
    %2785 = vmatpush1.xpose.msra.mxu0 0.0
    %2786 = vmatprep.subr.mxu0 0.0
    %2787 = vmatpush1.xpose.msra.mxu0 0.0
    %2788 = vmatprep.subr.mxu0 0.0
    %2789 = vmatpush1.xpose.msra.mxu0 0.0
    %2790 = vmatprep.subr.mxu0 0.0
    %2791 = vmatpush1.xpose.msra.mxu0 0.0
    %2792 = vmatprep.subr.mxu0 0.0
    %2793 = vmatpush1.xpose.msra.mxu0 0.0
    %2794 = vmatprep.subr.mxu0 0.0
    %2795 = vmatpush1.xpose.msra.mxu0 0.0
    %2796 = vmatprep.subr.mxu0 0.0
    %2797 = vmatpush1.xpose.msra.mxu0 0.0
    %2798 = vmatprep.subr.mxu0 0.0
    %2799 = vmatpush1.xpose.msra.mxu0 0.0
    %2800 = vmatprep.subr.mxu0 0.0
    %2801 = vmatpush1.xpose.msra.mxu0 0.0
    %2802 = vmatprep.subr.mxu0 0.0
    %2803 = vmatpush1.xpose.msra.mxu0 0.0
    %2804 = vmatprep.subr.mxu0 0.0
    %2805 = vmatpush1.xpose.msra.mxu0 0.0
    %2806 = vmatprep.subr.mxu0 0.0
    %2807 = vmatpush1.xpose.msra.mxu0 0.0
    %2808 = vmatprep.subr.mxu0 0.0
    %2809 = vmatpush1.xpose.msra.mxu0 0.0
    %2810 = vmatprep.subr.mxu0 0.0
    %2811 = vmatpush1.xpose.msra.mxu0 0.0
    %2812 = vmatprep.subr.mxu0 0.0
    %2813 = vmatpush1.xpose.msra.mxu0 0.0
    %2814 = vmatprep.subr.mxu0 0.0
    %2815 = vmatpush1.xpose.msra.mxu0 0.0
    %2816 = vmatprep.subr.mxu0 0.0
    %2817 = vmatpush1.xpose.msra.mxu0 0.0
    %2818 = vmatprep.subr.mxu0 0.0
    %2819 = vmatpush1.xpose.msra.mxu0 0.0
    %2820 = vmatprep.subr.mxu0 0.0
    %2821 = vmatpush1.xpose.msra.mxu0 0.0
    %2822 = vmatprep.subr.mxu0 0.0
    %2823 = vmatpush1.xpose.msra.mxu0 0.0
    %2824 = vmatprep.subr.mxu0 0.0
    %2825 = vmatpush1.xpose.msra.mxu0 0.0
    %2826 = vmatprep.subr.mxu0 0.0
    %2827 = vmatpush1.xpose.msra.mxu0 0.0
    %2828 = vmatprep.subr.mxu0 0.0
    %2829 = vmatpush1.xpose.msra.mxu0 0.0
    %2830 = vmatprep.mubr.f32.mxu0 0.0
    %2831 = vmatmul.mubr.f32.gmra.mrb[0].mxu0 %v2762
    %v2832 = vpop.f32.mrb[0].mxu0
    %v2833 = vadd.f32 0.0, %v2832
    %v2834 = vpop.f32.mrb[0].mxu0
    %2835 = vdwg.mxu0
    %v2836 = vmul.f32 %v2833, 0.35355338
    %v2837 = vsel %vm257, %v2836, -inf
    %2838 = vmax.xlane.f32.xlu0 %v2837
    %v2839 = vpop.xlane.xlu0 %2838
    %v2840 = vsub.f32 %v2836, %v2839
    %v2841 = vmul.f32 %v2840, 1.442695
    %v2842 = vpow.pop %v2841
    %v2843 = vsel %vm257, %v2842, 0.0
    %2844 = vadd.xlane.f32.xlu0 %v2843
    %v2845 = vpop.xlane.xlu0 %2844
    %v2846 = vrcp.pop %v2845
    %v2847 = vmul.f32 %v2842, %v2846
    %2848 = vrot.lane.b32.xlu0 %v2078, 64
    %v2849 = vpop.permute.xlu0 %2848
    %v2852 = vsel %vm257, %v2847, 0
    %2854 = vmatprep.subr.mxu0 0.0
    %2855 = vmatpush1.msra.mxu0 %v2849
    %2856 = vmatprep.subr.mxu0 0.0
    %2857 = vmatpush1.msra.mxu0 0.0
    %2858 = vmatprep.subr.mxu0 0.0
    %2859 = vmatpush1.msra.mxu0 0.0
    %2860 = vmatprep.subr.mxu0 0.0
    %2861 = vmatpush1.msra.mxu0 0.0
    %2862 = vmatprep.subr.mxu0 0.0
    %2863 = vmatpush1.msra.mxu0 0.0
    %2864 = vmatprep.subr.mxu0 0.0
    %2865 = vmatpush1.msra.mxu0 0.0
    %2866 = vmatprep.subr.mxu0 0.0
    %2867 = vmatpush1.msra.mxu0 0.0
    %2868 = vmatprep.subr.mxu0 0.0
    %2869 = vmatpush1.msra.mxu0 0.0
    %2870 = vmatprep.subr.mxu0 0.0
    %2871 = vmatpush1.msra.mxu0 0.0
    %2872 = vmatprep.subr.mxu0 0.0
    %2873 = vmatpush1.msra.mxu0 0.0
    %2874 = vmatprep.subr.mxu0 0.0
    %2875 = vmatpush1.msra.mxu0 0.0
    %2876 = vmatprep.subr.mxu0 0.0
    %2877 = vmatpush1.msra.mxu0 0.0
    %2878 = vmatprep.subr.mxu0 0.0
    %2879 = vmatpush1.msra.mxu0 0.0
    %2880 = vmatprep.subr.mxu0 0.0
    %2881 = vmatpush1.msra.mxu0 0.0
    %2882 = vmatprep.subr.mxu0 0.0
    %2883 = vmatpush1.msra.mxu0 0.0
    %2884 = vmatprep.subr.mxu0 0.0
    %2885 = vmatpush1.msra.mxu0 0.0
    %2886 = vmatprep.subr.mxu0 0.0
    %2887 = vmatpush1.msra.mxu0 0.0
    %2888 = vmatprep.subr.mxu0 0.0
    %2889 = vmatpush1.msra.mxu0 0.0
    %2890 = vmatprep.subr.mxu0 0.0
    %2891 = vmatpush1.msra.mxu0 0.0
    %2892 = vmatprep.subr.mxu0 0.0
    %2893 = vmatpush1.msra.mxu0 0.0
    %2894 = vmatprep.subr.mxu0 0.0
    %2895 = vmatpush1.msra.mxu0 0.0
    %2896 = vmatprep.subr.mxu0 0.0
    %2897 = vmatpush1.msra.mxu0 0.0
    %2898 = vmatprep.subr.mxu0 0.0
    %2899 = vmatpush1.msra.mxu0 0.0
    %2900 = vmatprep.subr.mxu0 0.0
    %2901 = vmatpush1.msra.mxu0 0.0
    %2902 = vmatprep.subr.mxu0 0.0
    %2903 = vmatpush1.msra.mxu0 0.0
    %2904 = vmatprep.subr.mxu0 0.0
    %2905 = vmatpush1.msra.mxu0 0.0
    %2906 = vmatprep.subr.mxu0 0.0
    %2907 = vmatpush1.msra.mxu0 0.0
    %2908 = vmatprep.subr.mxu0 0.0
    %2909 = vmatpush1.msra.mxu0 0.0
    %2910 = vmatprep.subr.mxu0 0.0
    %2911 = vmatpush1.msra.mxu0 0.0
    %2912 = vmatprep.subr.mxu0 0.0
    %2913 = vmatpush1.msra.mxu0 0.0
    %2914 = vmatprep.subr.mxu0 0.0
    %2915 = vmatpush1.msra.mxu0 0.0
    %2916 = vmatprep.subr.mxu0 0.0
    %2917 = vmatpush1.msra.mxu0 0.0
    %2918 = vmatprep.mubr.f32.mxu0 0.0
    %2919 = vmatmul.mubr.f32.gmra.mrb[0].mxu0 %v2852
    %v2920 = vpop.f32.mrb[0].mxu0
    %v2921 = vadd.f32 0.0, %v2920
    %v2922 = vpop.f32.mrb[0].mxu0
    %2923 = vdwg.mxu0
    %2924 = vrot.lane.b32.xlu0 %v2078, 120
    %v2925 = vpop.permute.xlu0 %2924
    %2926 = vrot.lane.b32.xlu0 %v2078, 88
    %v2927 = vpop.permute.xlu0 %2926
    %v2928 = vsel %vm257, %v2925, 0
    %v2930 = vsel %vm257, %v2927, 0
    %2932 = vmatprep.subr.mxu0 0.0
    %2933 = vmatpush1.xpose.msra.mxu0 %v2930
    %2934 = vmatprep.subr.mxu0 0.0
    %2935 = vmatpush1.xpose.msra.mxu0 0.0
    %2936 = vmatprep.subr.mxu0 0.0
    %2937 = vmatpush1.xpose.msra.mxu0 0.0
    %2938 = vmatprep.subr.mxu0 0.0
    %2939 = vmatpush1.xpose.msra.mxu0 0.0
    %2940 = vmatprep.subr.mxu0 0.0
    %2941 = vmatpush1.xpose.msra.mxu0 0.0
    %2942 = vmatprep.subr.mxu0 0.0
    %2943 = vmatpush1.xpose.msra.mxu0 0.0
    %2944 = vmatprep.subr.mxu0 0.0
    %2945 = vmatpush1.xpose.msra.mxu0 0.0
    %2946 = vmatprep.subr.mxu0 0.0
    %2947 = vmatpush1.xpose.msra.mxu0 0.0
    %2948 = vmatprep.subr.mxu0 0.0
    %2949 = vmatpush1.xpose.msra.mxu0 0.0
    %2950 = vmatprep.subr.mxu0 0.0
    %2951 = vmatpush1.xpose.msra.mxu0 0.0
    %2952 = vmatprep.subr.mxu0 0.0
    %2953 = vmatpush1.xpose.msra.mxu0 0.0
    %2954 = vmatprep.subr.mxu0 0.0
    %2955 = vmatpush1.xpose.msra.mxu0 0.0
    %2956 = vmatprep.subr.mxu0 0.0
    %2957 = vmatpush1.xpose.msra.mxu0 0.0
    %2958 = vmatprep.subr.mxu0 0.0
    %2959 = vmatpush1.xpose.msra.mxu0 0.0
    %2960 = vmatprep.subr.mxu0 0.0
    %2961 = vmatpush1.xpose.msra.mxu0 0.0
    %2962 = vmatprep.subr.mxu0 0.0
    %2963 = vmatpush1.xpose.msra.mxu0 0.0
    %2964 = vmatprep.subr.mxu0 0.0
    %2965 = vmatpush1.xpose.msra.mxu0 0.0
    %2966 = vmatprep.subr.mxu0 0.0
    %2967 = vmatpush1.xpose.msra.mxu0 0.0
    %2968 = vmatprep.subr.mxu0 0.0
    %2969 = vmatpush1.xpose.msra.mxu0 0.0
    %2970 = vmatprep.subr.mxu0 0.0
    %2971 = vmatpush1.xpose.msra.mxu0 0.0
    %2972 = vmatprep.subr.mxu0 0.0
    %2973 = vmatpush1.xpose.msra.mxu0 0.0
    %2974 = vmatprep.subr.mxu0 0.0
    %2975 = vmatpush1.xpose.msra.mxu0 0.0
    %2976 = vmatprep.subr.mxu0 0.0
    %2977 = vmatpush1.xpose.msra.mxu0 0.0
    %2978 = vmatprep.subr.mxu0 0.0
    %2979 = vmatpush1.xpose.msra.mxu0 0.0
    %2980 = vmatprep.subr.mxu0 0.0
    %2981 = vmatpush1.xpose.msra.mxu0 0.0
    %2982 = vmatprep.subr.mxu0 0.0
    %2983 = vmatpush1.xpose.msra.mxu0 0.0
    %2984 = vmatprep.subr.mxu0 0.0
    %2985 = vmatpush1.xpose.msra.mxu0 0.0
    %2986 = vmatprep.subr.mxu0 0.0
    %2987 = vmatpush1.xpose.msra.mxu0 0.0
    %2988 = vmatprep.subr.mxu0 0.0
    %2989 = vmatpush1.xpose.msra.mxu0 0.0
    %2990 = vmatprep.subr.mxu0 0.0
    %2991 = vmatpush1.xpose.msra.mxu0 0.0
    %2992 = vmatprep.subr.mxu0 0.0
    %2993 = vmatpush1.xpose.msra.mxu0 0.0
    %2994 = vmatprep.subr.mxu0 0.0
    %2995 = vmatpush1.xpose.msra.mxu0 0.0
    %2996 = vmatprep.mubr.f32.mxu0 0.0
    %2997 = vmatmul.mubr.f32.gmra.mrb[0].mxu0 %v2928
    %v2998 = vpop.f32.mrb[0].mxu0
    %v2999 = vadd.f32 0.0, %v2998
    %v3000 = vpop.f32.mrb[0].mxu0
    %3001 = vdwg.mxu0
    %v3002 = vmul.f32 %v2999, 0.35355338
    %v3003 = vsel %vm257, %v3002, -inf
    %3004 = vmax.xlane.f32.xlu0 %v3003
    %v3005 = vpop.xlane.xlu0 %3004
    %v3006 = vsub.f32 %v3002, %v3005
    %v3007 = vmul.f32 %v3006, 1.442695
    %v3008 = vpow.pop %v3007
    %v3009 = vsel %vm257, %v3008, 0.0
    %3010 = vadd.xlane.f32.xlu0 %v3009
    %v3011 = vpop.xlane.xlu0 %3010
    %v3012 = vrcp.pop %v3011
    %v3013 = vmul.f32 %v3008, %v3012
    %3014 = vrot.lane.b32.xlu0 %v2078, 56
    %v3015 = vpop.permute.xlu0 %3014
    %v3018 = vsel %vm257, %v3013, 0
    %3020 = vmatprep.subr.mxu0 0.0
    %3021 = vmatpush1.msra.mxu0 %v3015
    %3022 = vmatprep.subr.mxu0 0.0
    %3023 = vmatpush1.msra.mxu0 0.0
    %3024 = vmatprep.subr.mxu0 0.0
    %3025 = vmatpush1.msra.mxu0 0.0
    %3026 = vmatprep.subr.mxu0 0.0
    %3027 = vmatpush1.msra.mxu0 0.0
    %3028 = vmatprep.subr.mxu0 0.0
    %3029 = vmatpush1.msra.mxu0 0.0
    %3030 = vmatprep.subr.mxu0 0.0
    %3031 = vmatpush1.msra.mxu0 0.0
    %3032 = vmatprep.subr.mxu0 0.0
    %3033 = vmatpush1.msra.mxu0 0.0
    %3034 = vmatprep.subr.mxu0 0.0
    %3035 = vmatpush1.msra.mxu0 0.0
    %3036 = vmatprep.subr.mxu0 0.0
    %3037 = vmatpush1.msra.mxu0 0.0
    %3038 = vmatprep.subr.mxu0 0.0
    %3039 = vmatpush1.msra.mxu0 0.0
    %3040 = vmatprep.subr.mxu0 0.0
    %3041 = vmatpush1.msra.mxu0 0.0
    %3042 = vmatprep.subr.mxu0 0.0
    %3043 = vmatpush1.msra.mxu0 0.0
    %3044 = vmatprep.subr.mxu0 0.0
    %3045 = vmatpush1.msra.mxu0 0.0
    %3046 = vmatprep.subr.mxu0 0.0
    %3047 = vmatpush1.msra.mxu0 0.0
    %3048 = vmatprep.subr.mxu0 0.0
    %3049 = vmatpush1.msra.mxu0 0.0
    %3050 = vmatprep.subr.mxu0 0.0
    %3051 = vmatpush1.msra.mxu0 0.0
    %3052 = vmatprep.subr.mxu0 0.0
    %3053 = vmatpush1.msra.mxu0 0.0
    %3054 = vmatprep.subr.mxu0 0.0
    %3055 = vmatpush1.msra.mxu0 0.0
    %3056 = vmatprep.subr.mxu0 0.0
    %3057 = vmatpush1.msra.mxu0 0.0
    %3058 = vmatprep.subr.mxu0 0.0
    %3059 = vmatpush1.msra.mxu0 0.0
    %3060 = vmatprep.subr.mxu0 0.0
    %3061 = vmatpush1.msra.mxu0 0.0
    %3062 = vmatprep.subr.mxu0 0.0
    %3063 = vmatpush1.msra.mxu0 0.0
    %3064 = vmatprep.subr.mxu0 0.0
    %3065 = vmatpush1.msra.mxu0 0.0
    %3066 = vmatprep.subr.mxu0 0.0
    %3067 = vmatpush1.msra.mxu0 0.0
    %3068 = vmatprep.subr.mxu0 0.0
    %3069 = vmatpush1.msra.mxu0 0.0
    %3070 = vmatprep.subr.mxu0 0.0
    %3071 = vmatpush1.msra.mxu0 0.0
    %3072 = vmatprep.subr.mxu0 0.0
    %3073 = vmatpush1.msra.mxu0 0.0
    %3074 = vmatprep.subr.mxu0 0.0
    %3075 = vmatpush1.msra.mxu0 0.0
    %3076 = vmatprep.subr.mxu0 0.0
    %3077 = vmatpush1.msra.mxu0 0.0
    %3078 = vmatprep.subr.mxu0 0.0
    %3079 = vmatpush1.msra.mxu0 0.0
    %3080 = vmatprep.subr.mxu0 0.0
    %3081 = vmatpush1.msra.mxu0 0.0
    %3082 = vmatprep.subr.mxu0 0.0
    %3083 = vmatpush1.msra.mxu0 0.0
    %3084 = vmatprep.mubr.f32.mxu0 0.0
    %3085 = vmatmul.mubr.f32.gmra.mrb[0].mxu0 %v3018
    %v3086 = vpop.f32.mrb[0].mxu0
    %v3087 = vadd.f32 0.0, %v3086
    %v3088 = vpop.f32.mrb[0].mxu0
    %3089 = vdwg.mxu0
    %3090 = vrot.lane.b32.xlu0 %v2078, 112
    %v3091 = vpop.permute.xlu0 %3090
    %3092 = vrot.lane.b32.xlu0 %v2078, 80
    %v3093 = vpop.permute.xlu0 %3092
    %v3094 = vsel %vm257, %v3091, 0
    %v3096 = vsel %vm257, %v3093, 0
    %3098 = vmatprep.subr.mxu0 0.0
    %3099 = vmatpush1.xpose.msra.mxu0 %v3096
    %3100 = vmatprep.subr.mxu0 0.0
    %3101 = vmatpush1.xpose.msra.mxu0 0.0
    %3102 = vmatprep.subr.mxu0 0.0
    %3103 = vmatpush1.xpose.msra.mxu0 0.0
    %3104 = vmatprep.subr.mxu0 0.0
    %3105 = vmatpush1.xpose.msra.mxu0 0.0
    %3106 = vmatprep.subr.mxu0 0.0
    %3107 = vmatpush1.xpose.msra.mxu0 0.0
    %3108 = vmatprep.subr.mxu0 0.0
    %3109 = vmatpush1.xpose.msra.mxu0 0.0
    %3110 = vmatprep.subr.mxu0 0.0
    %3111 = vmatpush1.xpose.msra.mxu0 0.0
    %3112 = vmatprep.subr.mxu0 0.0
    %3113 = vmatpush1.xpose.msra.mxu0 0.0
    %3114 = vmatprep.subr.mxu0 0.0
    %3115 = vmatpush1.xpose.msra.mxu0 0.0
    %3116 = vmatprep.subr.mxu0 0.0
    %3117 = vmatpush1.xpose.msra.mxu0 0.0
    %3118 = vmatprep.subr.mxu0 0.0
    %3119 = vmatpush1.xpose.msra.mxu0 0.0
    %3120 = vmatprep.subr.mxu0 0.0
    %3121 = vmatpush1.xpose.msra.mxu0 0.0
    %3122 = vmatprep.subr.mxu0 0.0
    %3123 = vmatpush1.xpose.msra.mxu0 0.0
    %3124 = vmatprep.subr.mxu0 0.0
    %3125 = vmatpush1.xpose.msra.mxu0 0.0
    %3126 = vmatprep.subr.mxu0 0.0
    %3127 = vmatpush1.xpose.msra.mxu0 0.0
    %3128 = vmatprep.subr.mxu0 0.0
    %3129 = vmatpush1.xpose.msra.mxu0 0.0
    %3130 = vmatprep.subr.mxu0 0.0
    %3131 = vmatpush1.xpose.msra.mxu0 0.0
    %3132 = vmatprep.subr.mxu0 0.0
    %3133 = vmatpush1.xpose.msra.mxu0 0.0
    %3134 = vmatprep.subr.mxu0 0.0
    %3135 = vmatpush1.xpose.msra.mxu0 0.0
    %3136 = vmatprep.subr.mxu0 0.0
    %3137 = vmatpush1.xpose.msra.mxu0 0.0
    %3138 = vmatprep.subr.mxu0 0.0
    %3139 = vmatpush1.xpose.msra.mxu0 0.0
    %3140 = vmatprep.subr.mxu0 0.0
    %3141 = vmatpush1.xpose.msra.mxu0 0.0
    %3142 = vmatprep.subr.mxu0 0.0
    %3143 = vmatpush1.xpose.msra.mxu0 0.0
    %3144 = vmatprep.subr.mxu0 0.0
    %3145 = vmatpush1.xpose.msra.mxu0 0.0
    %3146 = vmatprep.subr.mxu0 0.0
    %3147 = vmatpush1.xpose.msra.mxu0 0.0
    %3148 = vmatprep.subr.mxu0 0.0
    %3149 = vmatpush1.xpose.msra.mxu0 0.0
    %3150 = vmatprep.subr.mxu0 0.0
    %3151 = vmatpush1.xpose.msra.mxu0 0.0
    %3152 = vmatprep.subr.mxu0 0.0
    %3153 = vmatpush1.xpose.msra.mxu0 0.0
    %3154 = vmatprep.subr.mxu0 0.0
    %3155 = vmatpush1.xpose.msra.mxu0 0.0
    %3156 = vmatprep.subr.mxu0 0.0
    %3157 = vmatpush1.xpose.msra.mxu0 0.0
    %3158 = vmatprep.subr.mxu0 0.0
    %3159 = vmatpush1.xpose.msra.mxu0 0.0
    %3160 = vmatprep.subr.mxu0 0.0
    %3161 = vmatpush1.xpose.msra.mxu0 0.0
    %3162 = vmatprep.mubr.f32.mxu0 0.0
    %3163 = vmatmul.mubr.f32.gmra.mrb[0].mxu0 %v3094
    %v3164 = vpop.f32.mrb[0].mxu0
    %v3165 = vadd.f32 0.0, %v3164
    %v3166 = vpop.f32.mrb[0].mxu0
    %3167 = vdwg.mxu0
    %v3168 = vmul.f32 %v3165, 0.35355338
    %v3169 = vsel %vm257, %v3168, -inf
    %3170 = vmax.xlane.f32.xlu0 %v3169
    %v3171 = vpop.xlane.xlu0 %3170
    %v3172 = vsub.f32 %v3168, %v3171
    %v3173 = vmul.f32 %v3172, 1.442695
    %v3174 = vpow.pop %v3173
    %v3175 = vsel %vm257, %v3174, 0.0
    %3176 = vadd.xlane.f32.xlu0 %v3175
    %v3177 = vpop.xlane.xlu0 %3176
    %v3178 = vrcp.pop %v3177
    %v3179 = vmul.f32 %v3174, %v3178
    %3180 = vrot.lane.b32.xlu0 %v2078, 48
    %v3181 = vpop.permute.xlu0 %3180
    %v3184 = vsel %vm257, %v3179, 0
    %3186 = vmatprep.subr.mxu0 0.0
    %3187 = vmatpush1.msra.mxu0 %v3181
    %3188 = vmatprep.subr.mxu0 0.0
    %3189 = vmatpush1.msra.mxu0 0.0
    %3190 = vmatprep.subr.mxu0 0.0
    %3191 = vmatpush1.msra.mxu0 0.0
    %3192 = vmatprep.subr.mxu0 0.0
    %3193 = vmatpush1.msra.mxu0 0.0
    %3194 = vmatprep.subr.mxu0 0.0
    %3195 = vmatpush1.msra.mxu0 0.0
    %3196 = vmatprep.subr.mxu0 0.0
    %3197 = vmatpush1.msra.mxu0 0.0
    %3198 = vmatprep.subr.mxu0 0.0
    %3199 = vmatpush1.msra.mxu0 0.0
    %3200 = vmatprep.subr.mxu0 0.0
    %3201 = vmatpush1.msra.mxu0 0.0
    %3202 = vmatprep.subr.mxu0 0.0
    %3203 = vmatpush1.msra.mxu0 0.0
    %3204 = vmatprep.subr.mxu0 0.0
    %3205 = vmatpush1.msra.mxu0 0.0
    %3206 = vmatprep.subr.mxu0 0.0
    %3207 = vmatpush1.msra.mxu0 0.0
    %3208 = vmatprep.subr.mxu0 0.0
    %3209 = vmatpush1.msra.mxu0 0.0
    %3210 = vmatprep.subr.mxu0 0.0
    %3211 = vmatpush1.msra.mxu0 0.0
    %3212 = vmatprep.subr.mxu0 0.0
    %3213 = vmatpush1.msra.mxu0 0.0
    %3214 = vmatprep.subr.mxu0 0.0
    %3215 = vmatpush1.msra.mxu0 0.0
    %3216 = vmatprep.subr.mxu0 0.0
    %3217 = vmatpush1.msra.mxu0 0.0
    %3218 = vmatprep.subr.mxu0 0.0
    %3219 = vmatpush1.msra.mxu0 0.0
    %3220 = vmatprep.subr.mxu0 0.0
    %3221 = vmatpush1.msra.mxu0 0.0
    %3222 = vmatprep.subr.mxu0 0.0
    %3223 = vmatpush1.msra.mxu0 0.0
    %3224 = vmatprep.subr.mxu0 0.0
    %3225 = vmatpush1.msra.mxu0 0.0
    %3226 = vmatprep.subr.mxu0 0.0
    %3227 = vmatpush1.msra.mxu0 0.0
    %3228 = vmatprep.subr.mxu0 0.0
    %3229 = vmatpush1.msra.mxu0 0.0
    %3230 = vmatprep.subr.mxu0 0.0
    %3231 = vmatpush1.msra.mxu0 0.0
    %3232 = vmatprep.subr.mxu0 0.0
    %3233 = vmatpush1.msra.mxu0 0.0
    %3234 = vmatprep.subr.mxu0 0.0
    %3235 = vmatpush1.msra.mxu0 0.0
    %3236 = vmatprep.subr.mxu0 0.0
    %3237 = vmatpush1.msra.mxu0 0.0
    %3238 = vmatprep.subr.mxu0 0.0
    %3239 = vmatpush1.msra.mxu0 0.0
    %3240 = vmatprep.subr.mxu0 0.0
    %3241 = vmatpush1.msra.mxu0 0.0
    %3242 = vmatprep.subr.mxu0 0.0
    %3243 = vmatpush1.msra.mxu0 0.0
    %3244 = vmatprep.subr.mxu0 0.0
    %3245 = vmatpush1.msra.mxu0 0.0
    %3246 = vmatprep.subr.mxu0 0.0
    %3247 = vmatpush1.msra.mxu0 0.0
    %3248 = vmatprep.subr.mxu0 0.0
    %3249 = vmatpush1.msra.mxu0 0.0
    %3250 = vmatprep.mubr.f32.mxu0 0.0
    %3251 = vmatmul.mubr.f32.gmra.mrb[0].mxu0 %v3184
    %v3252 = vpop.f32.mrb[0].mxu0
    %v3253 = vadd.f32 0.0, %v3252
    %v3254 = vpop.f32.mrb[0].mxu0
    %3255 = vdwg.mxu0
    %3256 = vrot.lane.b32.xlu0 %v2078, 104
    %v3257 = vpop.permute.xlu0 %3256
    %3258 = vrot.lane.b32.xlu0 %v2078, 72
    %v3259 = vpop.permute.xlu0 %3258
    %v3260 = vsel %vm257, %v3257, 0
    %v3262 = vsel %vm257, %v3259, 0
    %3264 = vmatprep.subr.mxu0 0.0
    %3265 = vmatpush1.xpose.msra.mxu0 %v3262
    %3266 = vmatprep.subr.mxu0 0.0
    %3267 = vmatpush1.xpose.msra.mxu0 0.0
    %3268 = vmatprep.subr.mxu0 0.0
    %3269 = vmatpush1.xpose.msra.mxu0 0.0
    %3270 = vmatprep.subr.mxu0 0.0
    %3271 = vmatpush1.xpose.msra.mxu0 0.0
    %3272 = vmatprep.subr.mxu0 0.0
    %3273 = vmatpush1.xpose.msra.mxu0 0.0
    %3274 = vmatprep.subr.mxu0 0.0
    %3275 = vmatpush1.xpose.msra.mxu0 0.0
    %3276 = vmatprep.subr.mxu0 0.0
    %3277 = vmatpush1.xpose.msra.mxu0 0.0
    %3278 = vmatprep.subr.mxu0 0.0
    %3279 = vmatpush1.xpose.msra.mxu0 0.0
    %3280 = vmatprep.subr.mxu0 0.0
    %3281 = vmatpush1.xpose.msra.mxu0 0.0
    %3282 = vmatprep.subr.mxu0 0.0
    %3283 = vmatpush1.xpose.msra.mxu0 0.0
    %3284 = vmatprep.subr.mxu0 0.0
    %3285 = vmatpush1.xpose.msra.mxu0 0.0
    %3286 = vmatprep.subr.mxu0 0.0
    %3287 = vmatpush1.xpose.msra.mxu0 0.0
    %3288 = vmatprep.subr.mxu0 0.0
    %3289 = vmatpush1.xpose.msra.mxu0 0.0
    %3290 = vmatprep.subr.mxu0 0.0
    %3291 = vmatpush1.xpose.msra.mxu0 0.0
    %3292 = vmatprep.subr.mxu0 0.0
    %3293 = vmatpush1.xpose.msra.mxu0 0.0
    %3294 = vmatprep.subr.mxu0 0.0
    %3295 = vmatpush1.xpose.msra.mxu0 0.0
    %3296 = vmatprep.subr.mxu0 0.0
    %3297 = vmatpush1.xpose.msra.mxu0 0.0
    %3298 = vmatprep.subr.mxu0 0.0
    %3299 = vmatpush1.xpose.msra.mxu0 0.0
    %3300 = vmatprep.subr.mxu0 0.0
    %3301 = vmatpush1.xpose.msra.mxu0 0.0
    %3302 = vmatprep.subr.mxu0 0.0
    %3303 = vmatpush1.xpose.msra.mxu0 0.0
    %3304 = vmatprep.subr.mxu0 0.0
    %3305 = vmatpush1.xpose.msra.mxu0 0.0
    %3306 = vmatprep.subr.mxu0 0.0
    %3307 = vmatpush1.xpose.msra.mxu0 0.0
    %3308 = vmatprep.subr.mxu0 0.0
    %3309 = vmatpush1.xpose.msra.mxu0 0.0
    %3310 = vmatprep.subr.mxu0 0.0
    %3311 = vmatpush1.xpose.msra.mxu0 0.0
    %3312 = vmatprep.subr.mxu0 0.0
    %3313 = vmatpush1.xpose.msra.mxu0 0.0
    %3314 = vmatprep.subr.mxu0 0.0
    %3315 = vmatpush1.xpose.msra.mxu0 0.0
    %3316 = vmatprep.subr.mxu0 0.0
    %3317 = vmatpush1.xpose.msra.mxu0 0.0
    %3318 = vmatprep.subr.mxu0 0.0
    %3319 = vmatpush1.xpose.msra.mxu0 0.0
    %3320 = vmatprep.subr.mxu0 0.0
    %3321 = vmatpush1.xpose.msra.mxu0 0.0
    %3322 = vmatprep.subr.mxu0 0.0
    %3323 = vmatpush1.xpose.msra.mxu0 0.0
    %3324 = vmatprep.subr.mxu0 0.0
    %3325 = vmatpush1.xpose.msra.mxu0 0.0
    %3326 = vmatprep.subr.mxu0 0.0
    %3327 = vmatpush1.xpose.msra.mxu0 0.0
    %3328 = vmatprep.mubr.f32.mxu0 0.0
    %3329 = vmatmul.mubr.f32.gmra.mrb[0].mxu0 %v3260
    %v3330 = vpop.f32.mrb[0].mxu0
    %v3331 = vadd.f32 0.0, %v3330
    %v3332 = vpop.f32.mrb[0].mxu0
    %3333 = vdwg.mxu0
    %v3334 = vmul.f32 %v3331, 0.35355338
    %v3335 = vsel %vm257, %v3334, -inf
    %3336 = vmax.xlane.f32.xlu0 %v3335
    %v3337 = vpop.xlane.xlu0 %3336
    %v3338 = vsub.f32 %v3334, %v3337
    %v3339 = vmul.f32 %v3338, 1.442695
    %v3340 = vpow.pop %v3339
    %v3341 = vsel %vm257, %v3340, 0.0
    %3342 = vadd.xlane.f32.xlu0 %v3341
    %v3343 = vpop.xlane.xlu0 %3342
    %v3344 = vrcp.pop %v3343
    %v3345 = vmul.f32 %v3340, %v3344
    %3346 = vrot.lane.b32.xlu0 %v2078, 40
    %v3347 = vpop.permute.xlu0 %3346
    %v3350 = vsel %vm257, %v3345, 0
    %3352 = vmatprep.subr.mxu0 0.0
    %3353 = vmatpush1.msra.mxu0 %v3347
    %3354 = vmatprep.subr.mxu0 0.0
    %3355 = vmatpush1.msra.mxu0 0.0
    %3356 = vmatprep.subr.mxu0 0.0
    %3357 = vmatpush1.msra.mxu0 0.0
    %3358 = vmatprep.subr.mxu0 0.0
    %3359 = vmatpush1.msra.mxu0 0.0
    %3360 = vmatprep.subr.mxu0 0.0
    %3361 = vmatpush1.msra.mxu0 0.0
    %3362 = vmatprep.subr.mxu0 0.0
    %3363 = vmatpush1.msra.mxu0 0.0
    %3364 = vmatprep.subr.mxu0 0.0
    %3365 = vmatpush1.msra.mxu0 0.0
    %3366 = vmatprep.subr.mxu0 0.0
    %3367 = vmatpush1.msra.mxu0 0.0
    %3368 = vmatprep.subr.mxu0 0.0
    %3369 = vmatpush1.msra.mxu0 0.0
    %3370 = vmatprep.subr.mxu0 0.0
    %3371 = vmatpush1.msra.mxu0 0.0
    %3372 = vmatprep.subr.mxu0 0.0
    %3373 = vmatpush1.msra.mxu0 0.0
    %3374 = vmatprep.subr.mxu0 0.0
    %3375 = vmatpush1.msra.mxu0 0.0
    %3376 = vmatprep.subr.mxu0 0.0
    %3377 = vmatpush1.msra.mxu0 0.0
    %3378 = vmatprep.subr.mxu0 0.0
    %3379 = vmatpush1.msra.mxu0 0.0
    %3380 = vmatprep.subr.mxu0 0.0
    %3381 = vmatpush1.msra.mxu0 0.0
    %3382 = vmatprep.subr.mxu0 0.0
    %3383 = vmatpush1.msra.mxu0 0.0
    %3384 = vmatprep.subr.mxu0 0.0
    %3385 = vmatpush1.msra.mxu0 0.0
    %3386 = vmatprep.subr.mxu0 0.0
    %3387 = vmatpush1.msra.mxu0 0.0
    %3388 = vmatprep.subr.mxu0 0.0
    %3389 = vmatpush1.msra.mxu0 0.0
    %3390 = vmatprep.subr.mxu0 0.0
    %3391 = vmatpush1.msra.mxu0 0.0
    %3392 = vmatprep.subr.mxu0 0.0
    %3393 = vmatpush1.msra.mxu0 0.0
    %3394 = vmatprep.subr.mxu0 0.0
    %3395 = vmatpush1.msra.mxu0 0.0
    %3396 = vmatprep.subr.mxu0 0.0
    %3397 = vmatpush1.msra.mxu0 0.0
    %3398 = vmatprep.subr.mxu0 0.0
    %3399 = vmatpush1.msra.mxu0 0.0
    %3400 = vmatprep.subr.mxu0 0.0
    %3401 = vmatpush1.msra.mxu0 0.0
    %3402 = vmatprep.subr.mxu0 0.0
    %3403 = vmatpush1.msra.mxu0 0.0
    %3404 = vmatprep.subr.mxu0 0.0
    %3405 = vmatpush1.msra.mxu0 0.0
    %3406 = vmatprep.subr.mxu0 0.0
    %3407 = vmatpush1.msra.mxu0 0.0
    %3408 = vmatprep.subr.mxu0 0.0
    %3409 = vmatpush1.msra.mxu0 0.0
    %3410 = vmatprep.subr.mxu0 0.0
    %3411 = vmatpush1.msra.mxu0 0.0
    %3412 = vmatprep.subr.mxu0 0.0
    %3413 = vmatpush1.msra.mxu0 0.0
    %3414 = vmatprep.subr.mxu0 0.0
    %3415 = vmatpush1.msra.mxu0 0.0
    %3416 = vmatprep.mubr.f32.mxu0 0.0
    %3417 = vmatmul.mubr.f32.gmra.mrb[0].mxu0 %v3350
    %v3418 = vpop.f32.mrb[0].mxu0
    %v3419 = vadd.f32 0.0, %v3418
    %v3420 = vpop.f32.mrb[0].mxu0
    %3421 = vdwg.mxu0
    %3423 = vrot.lane.b32.xlu0 %v3087, 8
    %v3424 = vpop.permute.xlu0 %3423
    %3427 = vrot.lane.b32.xlu0 %v3253, 16
    %v3428 = vpop.permute.xlu0 %3427
    %3431 = vrot.lane.b32.xlu0 %v3419, 24
    %v3432 = vpop.permute.xlu0 %3431
    %v3434 = vsel %vm257, %v2921, %v3424
    %v3435 = vsel %vm931, %v3434, %v3428
    %v3436 = vsel %vm933, %v3435, %v3432
    %3441 = vrot.lane.b32.xlu0 %v1952, 32
    %v3442 = vpop.permute.xlu0 %3441
    %3443 = vrot.lane.b32.xlu0 %v1953, 32
    %v3444 = vpop.permute.xlu0 %3443
    %3445 = vrot.lane.b32.xlu0 %v1954, 32
    %v3446 = vpop.permute.xlu0 %3445
    %3447 = vrot.lane.b32.xlu0 %v1955, 32
    %v3448 = vpop.permute.xlu0 %3447
    %v3454 = vsel %vm129, %v2758, 0
    %v3457 = vsel %vm129, %v3436, 0
    %3459 = vmatprep.subr.mxu0 0.0
    %3460 = vmatpush1.msra.mxu0 %v3442
    %3461 = vmatprep.subr.mxu0 0.0
    %3462 = vmatpush1.msra.mxu0 %v3444
    %3463 = vmatprep.subr.mxu0 0.0
    %3464 = vmatpush1.msra.mxu0 %v3446
    %3465 = vmatprep.subr.mxu0 0.0
    %3466 = vmatpush1.msra.mxu0 %v3448
    %3467 = vmatprep.subr.mxu0 0.0
    %3468 = vmatpush1.msra.mxu0 0.0
    %3469 = vmatprep.subr.mxu0 0.0
    %3470 = vmatpush1.msra.mxu0 0.0
    %3471 = vmatprep.subr.mxu0 0.0
    %3472 = vmatpush1.msra.mxu0 0.0
    %3473 = vmatprep.subr.mxu0 0.0
    %3474 = vmatpush1.msra.mxu0 0.0
    %3475 = vmatprep.subr.mxu0 0.0
    %3476 = vmatpush1.msra.mxu0 0.0
    %3477 = vmatprep.subr.mxu0 0.0
    %3478 = vmatpush1.msra.mxu0 0.0
    %3479 = vmatprep.subr.mxu0 0.0
    %3480 = vmatpush1.msra.mxu0 0.0
    %3481 = vmatprep.subr.mxu0 0.0
    %3482 = vmatpush1.msra.mxu0 0.0
    %3483 = vmatprep.subr.mxu0 0.0
    %3484 = vmatpush1.msra.mxu0 0.0
    %3485 = vmatprep.subr.mxu0 0.0
    %3486 = vmatpush1.msra.mxu0 0.0
    %3487 = vmatprep.subr.mxu0 0.0
    %3488 = vmatpush1.msra.mxu0 0.0
    %3489 = vmatprep.subr.mxu0 0.0
    %3490 = vmatpush1.msra.mxu0 0.0
    %3491 = vmatprep.subr.mxu0 0.0
    %3492 = vmatpush1.msra.mxu0 0.0
    %3493 = vmatprep.subr.mxu0 0.0
    %3494 = vmatpush1.msra.mxu0 0.0
    %3495 = vmatprep.subr.mxu0 0.0
    %3496 = vmatpush1.msra.mxu0 0.0
    %3497 = vmatprep.subr.mxu0 0.0
    %3498 = vmatpush1.msra.mxu0 0.0
    %3499 = vmatprep.subr.mxu0 0.0
    %3500 = vmatpush1.msra.mxu0 0.0
    %3501 = vmatprep.subr.mxu0 0.0
    %3502 = vmatpush1.msra.mxu0 0.0
    %3503 = vmatprep.subr.mxu0 0.0
    %3504 = vmatpush1.msra.mxu0 0.0
    %3505 = vmatprep.subr.mxu0 0.0
    %3506 = vmatpush1.msra.mxu0 0.0
    %3507 = vmatprep.subr.mxu0 0.0
    %3508 = vmatpush1.msra.mxu0 0.0
    %3509 = vmatprep.subr.mxu0 0.0
    %3510 = vmatpush1.msra.mxu0 0.0
    %3511 = vmatprep.subr.mxu0 0.0
    %3512 = vmatpush1.msra.mxu0 0.0
    %3513 = vmatprep.subr.mxu0 0.0
    %3514 = vmatpush1.msra.mxu0 0.0
    %3515 = vmatprep.subr.mxu0 0.0
    %3516 = vmatpush1.msra.mxu0 0.0
    %3517 = vmatprep.subr.mxu0 0.0
    %3518 = vmatpush1.msra.mxu0 0.0
    %3519 = vmatprep.subr.mxu0 0.0
    %3520 = vmatpush1.msra.mxu0 0.0
    %3521 = vmatprep.subr.mxu0 0.0
    %3522 = vmatpush1.msra.mxu0 0.0
    %3523 = vmatprep.mubr.f32.mxu0 0.0
    %3524 = vmatmul.mubr.f32.gmra.mrb[0].mxu0 %v3454
    %v3525 = vpop.f32.mrb[0].mxu0
    %v3526 = vadd.f32 0.0, %v3525
    %v3527 = vpop.f32.mrb[0].mxu0
    %3528 = vmatprep.mubr.f32.mxu0 0.0
    %3529 = vmatmul.mubr.f32.gmra.mrb[0].mxu0 %v3457
    %v3530 = vpop.f32.mrb[0].mxu0
    %v3531 = vadd.f32 0.0, %v3530
    %v3532 = vpop.f32.mrb[0].mxu0
    %3533 = vdwg.mxu0
    %v3534 = vadd.f32 %v1949, %v3526
    %v3535 = vadd.f32 %v1950, %v3531
    %3537 = vrot.lane.b32.xlu0 %v1999, 32
    %v3538 = vpop.permute.xlu0 %3537
    %v3540 = vadd.f32 %v3534, %v3538
    %v3541 = vadd.f32 %v3535, %v3538
    %v3542 = vsel %vm129, %v3540, 0.0
    %3543 = vadd.xlane.f32.xlu0 %v3542
    %v3544 = vpop.xlane.xlu0 %3543
    %v3545 = vsel %vm129, %v3541, 0.0
    %3546 = vadd.xlane.f32.xlu0 %v3545
    %v3547 = vpop.xlane.xlu0 %3546
    %v3548 = vmul.f32 %v3544, %v136
    %v3549 = vmul.f32 %v3547, %v136
    %v3550 = vsub.f32 %v3540, %v3548
    %v3551 = vsub.f32 %v3541, %v3549
    %v3552 = vmul.f32 %v3550, %v3550
    %v3553 = vmul.f32 %v3551, %v3551
    %v3554 = vsel %vm129, %v3552, 0.0
    %3555 = vadd.xlane.f32.xlu0 %v3554
    %v3556 = vpop.xlane.xlu0 %3555
    %v3557 = vsel %vm129, %v3553, 0.0
    %3558 = vadd.xlane.f32.xlu0 %v3557
    %v3559 = vpop.xlane.xlu0 %3558
    %v3560 = vmul.f32 %v3556, %v136
    %v3561 = vmul.f32 %v3559, %v136
    %v3562 = vadd.f32 %v3560, 1e-05
    %v3563 = vadd.f32 %v3561, 1e-05
    %v3564 = vrsqrt.pop %v3562
    %v3565 = vrsqrt.pop %v3563
    %v3566 = vmul.f32 %v3550, %v3564
    %v3567 = vmul.f32 %v3551, %v3565
    %3568 = vrot.lane.b32.xlu0 %v1987, 64
    %v3569 = vpop.permute.xlu0 %3568
    %v3571 = vmul.f32 %v3566, %v3569
    %v3572 = vmul.f32 %v3567, %v3569
    %3573 = vrot.lane.b32.xlu0 %v1987, 32
    %v3574 = vpop.permute.xlu0 %3573
    %v3576 = vadd.f32 %v3571, %v3574
    %v3577 = vadd.f32 %v3572, %v3574
    %s3578 = scalar_lea.vmem %s5, 32
    %v3579 = vld [vmem:[%s3578] sm:$0xff]
    %v3580 = vld [vmem:[%s3578 + $0x8] sm:$0xff]
    %v3581 = vld [vmem:[%s3578 + $0x10] sm:$0xff]
    %v3582 = vld [vmem:[%s3578 + $0x18] sm:$0xff]
    %v3583 = vlaneseq
    %v3584 = vshrl.u32 %v3583, 7
    %v3585 = vsub.s32 2, %v3584
    %v3586 = vrot.slane %v1957, %v3585
    %v3588 = vsel %vm129, %v3576, 0
    %v3591 = vsel %vm129, %v3577, 0
    %3593 = vmatprep.subr.mxu0 0.0
    %3594 = vmatpush1.msra.mxu0 %v3579
    %3595 = vmatprep.subr.mxu0 0.0
    %3596 = vmatpush1.msra.mxu0 %v3580
    %3597 = vmatprep.subr.mxu0 0.0
    %3598 = vmatpush1.msra.mxu0 %v3581
    %3599 = vmatprep.subr.mxu0 0.0
    %3600 = vmatpush1.msra.mxu0 %v3582
    %3601 = vmatprep.subr.mxu0 0.0
    %3602 = vmatpush1.msra.mxu0 0.0
    %3603 = vmatprep.subr.mxu0 0.0
    %3604 = vmatpush1.msra.mxu0 0.0
    %3605 = vmatprep.subr.mxu0 0.0
    %3606 = vmatpush1.msra.mxu0 0.0
    %3607 = vmatprep.subr.mxu0 0.0
    %3608 = vmatpush1.msra.mxu0 0.0
    %3609 = vmatprep.subr.mxu0 0.0
    %3610 = vmatpush1.msra.mxu0 0.0
    %3611 = vmatprep.subr.mxu0 0.0
    %3612 = vmatpush1.msra.mxu0 0.0
    %3613 = vmatprep.subr.mxu0 0.0
    %3614 = vmatpush1.msra.mxu0 0.0
    %3615 = vmatprep.subr.mxu0 0.0
    %3616 = vmatpush1.msra.mxu0 0.0
    %3617 = vmatprep.subr.mxu0 0.0
    %3618 = vmatpush1.msra.mxu0 0.0
    %3619 = vmatprep.subr.mxu0 0.0
    %3620 = vmatpush1.msra.mxu0 0.0
    %3621 = vmatprep.subr.mxu0 0.0
    %3622 = vmatpush1.msra.mxu0 0.0
    %3623 = vmatprep.subr.mxu0 0.0
    %3624 = vmatpush1.msra.mxu0 0.0
    %3625 = vmatprep.subr.mxu0 0.0
    %3626 = vmatpush1.msra.mxu0 0.0
    %3627 = vmatprep.subr.mxu0 0.0
    %3628 = vmatpush1.msra.mxu0 0.0
    %3629 = vmatprep.subr.mxu0 0.0
    %3630 = vmatpush1.msra.mxu0 0.0
    %3631 = vmatprep.subr.mxu0 0.0
    %3632 = vmatpush1.msra.mxu0 0.0
    %3633 = vmatprep.subr.mxu0 0.0
    %3634 = vmatpush1.msra.mxu0 0.0
    %3635 = vmatprep.subr.mxu0 0.0
    %3636 = vmatpush1.msra.mxu0 0.0
    %3637 = vmatprep.subr.mxu0 0.0
    %3638 = vmatpush1.msra.mxu0 0.0
    %3639 = vmatprep.subr.mxu0 0.0
    %3640 = vmatpush1.msra.mxu0 0.0
    %3641 = vmatprep.subr.mxu0 0.0
    %3642 = vmatpush1.msra.mxu0 0.0
    %3643 = vmatprep.subr.mxu0 0.0
    %3644 = vmatpush1.msra.mxu0 0.0
    %3645 = vmatprep.subr.mxu0 0.0
    %3646 = vmatpush1.msra.mxu0 0.0
    %3647 = vmatprep.subr.mxu0 0.0
    %3648 = vmatpush1.msra.mxu0 0.0
    %3649 = vmatprep.subr.mxu0 0.0
    %3650 = vmatpush1.msra.mxu0 0.0
    %3651 = vmatprep.subr.mxu0 0.0
    %3652 = vmatpush1.msra.mxu0 0.0
    %3653 = vmatprep.subr.mxu0 0.0
    %3654 = vmatpush1.msra.mxu0 0.0
    %3655 = vmatprep.subr.mxu0 0.0
    %3656 = vmatpush1.msra.mxu0 0.0
    %3657 = vmatprep.mubr.f32.mxu0 0.0
    %3658 = vmatmul.mubr.f32.gmra.mrb[0].mxu0 %v3588
    %v3659 = vpop.f32.mrb[0].mxu0
    %v3660 = vadd.f32 %v3586, %v3659
    %v3661 = vpop.f32.mrb[0].mxu0
    %3662 = vmatprep.mubr.f32.mxu0 0.0
    %3663 = vmatmul.mubr.f32.gmra.mrb[0].mxu0 %v3591
    %v3664 = vpop.f32.mrb[0].mxu0
    %v3665 = vadd.f32 %v3586, %v3664
    %v3666 = vpop.f32.mrb[0].mxu0
    %3667 = vdwg.mxu0
    %v3668 = vmul.f32 %v3660, 0.5
    %v3669 = vmul.f32 %v3665, 0.5
    %v3670 = vmul.f32 %v3660, 0.70710677
    %v3671 = vmul.f32 %v3665, 0.70710677
    %v3672 = verf.f32.pop %v3670
    %v3673 = verf.f32.pop %v3671
    %v3674 = vadd.f32 %v3672, 1.0
    %v3675 = vadd.f32 %v3673, 1.0
    %v3676 = vmul.f32 %v3668, %v3674
    %v3677 = vmul.f32 %v3669, %v3675
    %s3678 = scalar_lea.vmem %s6, 64
    %v3679 = vld [vmem:[%s3678] sm:$0xff]
    %v3680 = vld [vmem:[%s3678 + $0x8] sm:$0xff]
    %v3681 = vld [vmem:[%s3678 + $0x10] sm:$0xff]
    %v3682 = vld [vmem:[%s3678 + $0x18] sm:$0xff]
    %v3683 = vld [vmem:[%s3678 + $0x20] sm:$0xff]
    %v3684 = vld [vmem:[%s3678 + $0x28] sm:$0xff]
    %v3685 = vld [vmem:[%s3678 + $0x30] sm:$0xff]
    %v3686 = vld [vmem:[%s3678 + $0x38] sm:$0xff]
    %v3688 = vsel %vm1861, %v3676, 0
    %v3691 = vsel %vm1861, %v3677, 0
    %3693 = vmatprep.subr.mxu0 0.0
    %3694 = vmatpush1.msra.mxu0 %v3679
    %3695 = vmatprep.subr.mxu0 0.0
    %3696 = vmatpush1.msra.mxu0 %v3680
    %3697 = vmatprep.subr.mxu0 0.0
    %3698 = vmatpush1.msra.mxu0 %v3681
    %3699 = vmatprep.subr.mxu0 0.0
    %3700 = vmatpush1.msra.mxu0 %v3682
    %3701 = vmatprep.subr.mxu0 0.0
    %3702 = vmatpush1.msra.mxu0 %v3683
    %3703 = vmatprep.subr.mxu0 0.0
    %3704 = vmatpush1.msra.mxu0 %v3684
    %3705 = vmatprep.subr.mxu0 0.0
    %3706 = vmatpush1.msra.mxu0 %v3685
    %3707 = vmatprep.subr.mxu0 0.0
    %3708 = vmatpush1.msra.mxu0 %v3686
    %3709 = vmatprep.subr.mxu0 0.0
    %3710 = vmatpush1.msra.mxu0 0.0
    %3711 = vmatprep.subr.mxu0 0.0
    %3712 = vmatpush1.msra.mxu0 0.0
    %3713 = vmatprep.subr.mxu0 0.0
    %3714 = vmatpush1.msra.mxu0 0.0
    %3715 = vmatprep.subr.mxu0 0.0
    %3716 = vmatpush1.msra.mxu0 0.0
    %3717 = vmatprep.subr.mxu0 0.0
    %3718 = vmatpush1.msra.mxu0 0.0
    %3719 = vmatprep.subr.mxu0 0.0
    %3720 = vmatpush1.msra.mxu0 0.0
    %3721 = vmatprep.subr.mxu0 0.0
    %3722 = vmatpush1.msra.mxu0 0.0
    %3723 = vmatprep.subr.mxu0 0.0
    %3724 = vmatpush1.msra.mxu0 0.0
    %3725 = vmatprep.subr.mxu0 0.0
    %3726 = vmatpush1.msra.mxu0 0.0
    %3727 = vmatprep.subr.mxu0 0.0
    %3728 = vmatpush1.msra.mxu0 0.0
    %3729 = vmatprep.subr.mxu0 0.0
    %3730 = vmatpush1.msra.mxu0 0.0
    %3731 = vmatprep.subr.mxu0 0.0
    %3732 = vmatpush1.msra.mxu0 0.0
    %3733 = vmatprep.subr.mxu0 0.0
    %3734 = vmatpush1.msra.mxu0 0.0
    %3735 = vmatprep.subr.mxu0 0.0
    %3736 = vmatpush1.msra.mxu0 0.0
    %3737 = vmatprep.subr.mxu0 0.0
    %3738 = vmatpush1.msra.mxu0 0.0
    %3739 = vmatprep.subr.mxu0 0.0
    %3740 = vmatpush1.msra.mxu0 0.0
    %3741 = vmatprep.subr.mxu0 0.0
    %3742 = vmatpush1.msra.mxu0 0.0
    %3743 = vmatprep.subr.mxu0 0.0
    %3744 = vmatpush1.msra.mxu0 0.0
    %3745 = vmatprep.subr.mxu0 0.0
    %3746 = vmatpush1.msra.mxu0 0.0
    %3747 = vmatprep.subr.mxu0 0.0
    %3748 = vmatpush1.msra.mxu0 0.0
    %3749 = vmatprep.subr.mxu0 0.0
    %3750 = vmatpush1.msra.mxu0 0.0
    %3751 = vmatprep.subr.mxu0 0.0
    %3752 = vmatpush1.msra.mxu0 0.0
    %3753 = vmatprep.subr.mxu0 0.0
    %3754 = vmatpush1.msra.mxu0 0.0
    %3755 = vmatprep.subr.mxu0 0.0
    %3756 = vmatpush1.msra.mxu0 0.0
    %3757 = vmatprep.mubr.f32.mxu0 0.0
    %3758 = vmatmul.mubr.f32.gmra.mrb[0].mxu0 %v3688
    %v3759 = vpop.f32.mrb[0].mxu0
    %v3760 = vadd.f32 0.0, %v3759
    %v3761 = vpop.f32.mrb[0].mxu0
    %3762 = vmatprep.mubr.f32.mxu0 0.0
    %3763 = vmatmul.mubr.f32.gmra.mrb[0].mxu0 %v3691
    %v3764 = vpop.f32.mrb[0].mxu0
    %v3765 = vadd.f32 0.0, %v3764
    %v3766 = vpop.f32.mrb[0].mxu0
    %3767 = vdwg.mxu0
    %v3768 = vadd.f32 %v3540, %v3760
    %v3769 = vadd.f32 %v3541, %v3765
    %3771 = vrot.lane.b32.xlu0 %v3586, 64
    %v3772 = vpop.permute.xlu0 %3771
    %v3774 = vadd.f32 %v3768, %v3772
    %v3775 = vadd.f32 %v3769, %v3772
    %vm3776 = vcmask 253952
    %3777 = vst.msk [vmem:[#allocation2] sm:$0x1] %vm3776, %v3774
    %v3780 = vunpack.c.l.s4 1983009808
    %v3781 = vunpack.c.0.s8 %v3780
    %v3782 = vlaneseq
    %v3783 = vshrl.u32 %v3782, 7
    %v3784 = vsub.s32 %v3781, %v3783
    %v3785 = vrot.slane %v3774, %v3784
    %v3786 = vrot.slane %v3785, 7
    %v3787 = vrot.slane %v3786, 2
    %3788 = vrot.lane.b32.xlu0 %v3787, 32
    %v3789 = vpop.permute.xlu0 %3788
    %vm3791 = vcmask 516352
    %3792 = vst.msk [vmem:[#allocation2] sm:$0x1] %vm3791, %v3789
    %v3793 = vcombine.high %v3785, %v3785
    %3794 = vrot.lane.b32.xlu0 %v3793, 64
    %v3795 = vpop.permute.xlu0 %3794
    %vm3797 = vcmask 778752
    %3798 = vst.msk [vmem:[#allocation2] sm:$0x1] %vm3797, %v3795
    %v3799 = vrot.slane %v3793, 7
    %v3800 = vrot.slane %v3799, 2
    %3801 = vrot.lane.b32.xlu0 %v3800, 96
    %v3802 = vpop.permute.xlu0 %3801
    %vm3804 = vcmask 1041152
    %3805 = vst.msk [vmem:[#allocation2] sm:$0x1] %vm3804, %v3802
    %v3806 = vcombine.high %v3774, %v3774
    %v3808 = vunpack.c.l.s4 1983009808
    %v3809 = vunpack.c.0.s8 %v3808
    %v3810 = vlaneseq
    %v3811 = vshrl.u32 %v3810, 7
    %v3812 = vsub.s32 %v3809, %v3811
    %v3813 = vrot.slane %v3806, %v3812
    %3815 = vst.msk [vmem:[#allocation2 + $0x2] sm:$0x1] %vm3776, %v3813
    %v3816 = vrot.slane %v3813, 7
    %v3817 = vrot.slane %v3816, 2
    %3818 = vrot.lane.b32.xlu0 %v3817, 32
    %v3819 = vpop.permute.xlu0 %3818
    %3821 = vst.msk [vmem:[#allocation2 + $0x2] sm:$0x1] %vm3791, %v3819
    %v3822 = vcombine.high %v3813, %v3813
    %3823 = vrot.lane.b32.xlu0 %v3822, 64
    %v3824 = vpop.permute.xlu0 %3823
    %3826 = vst.msk [vmem:[#allocation2 + $0x2] sm:$0x1] %vm3797, %v3824
    %v3827 = vrot.slane %v3822, 7
    %v3828 = vrot.slane %v3827, 2
    %3829 = vrot.lane.b32.xlu0 %v3828, 96
    %v3830 = vpop.permute.xlu0 %3829
    %3832 = vst.msk [vmem:[#allocation2 + $0x2] sm:$0x1] %vm3804, %v3830
    %3833 = vst.msk [vmem:[#allocation2 + $0x1] sm:$0x1] %vm3776, %v3775
    %v3836 = vunpack.c.l.s4 1983009808
    %v3837 = vunpack.c.0.s8 %v3836
    %v3838 = vlaneseq
    %v3839 = vshrl.u32 %v3838, 7
    %v3840 = vsub.s32 %v3837, %v3839
    %v3841 = vrot.slane %v3775, %v3840
    %v3842 = vrot.slane %v3841, 7
    %v3843 = vrot.slane %v3842, 2
    %3844 = vrot.lane.b32.xlu0 %v3843, 32
    %v3845 = vpop.permute.xlu0 %3844
    %3847 = vst.msk [vmem:[#allocation2 + $0x1] sm:$0x1] %vm3791, %v3845
    %v3848 = vcombine.high %v3841, %v3841
    %3849 = vrot.lane.b32.xlu0 %v3848, 64
    %v3850 = vpop.permute.xlu0 %3849
    %3852 = vst.msk [vmem:[#allocation2 + $0x1] sm:$0x1] %vm3797, %v3850
    %v3853 = vrot.slane %v3848, 7
    %v3854 = vrot.slane %v3853, 2
    %3855 = vrot.lane.b32.xlu0 %v3854, 96
    %v3856 = vpop.permute.xlu0 %3855
    %3858 = vst.msk [vmem:[#allocation2 + $0x1] sm:$0x1] %vm3804, %v3856
    %v3859 = vcombine.high %v3775, %v3775
    %v3861 = vunpack.c.l.s4 1983009808
    %v3862 = vunpack.c.0.s8 %v3861
    %v3863 = vlaneseq
    %v3864 = vshrl.u32 %v3863, 7
    %v3865 = vsub.s32 %v3862, %v3864
    %v3866 = vrot.slane %v3859, %v3865
    %3868 = vst.msk [vmem:[#allocation2 + $0x3] sm:$0x1] %vm3776, %v3866
    %v3869 = vrot.slane %v3866, 7
    %v3870 = vrot.slane %v3869, 2
    %3871 = vrot.lane.b32.xlu0 %v3870, 32
    %v3872 = vpop.permute.xlu0 %3871
    %3874 = vst.msk [vmem:[#allocation2 + $0x3] sm:$0x1] %vm3791, %v3872
    %v3875 = vcombine.high %v3866, %v3866
    %3876 = vrot.lane.b32.xlu0 %v3875, 64
    %v3877 = vpop.permute.xlu0 %3876
    %3879 = vst.msk [vmem:[#allocation2 + $0x3] sm:$0x1] %vm3797, %v3877
    %v3880 = vrot.slane %v3875, 7
    %v3881 = vrot.slane %v3880, 2
    %3882 = vrot.lane.b32.xlu0 %v3881, 96
    %v3883 = vpop.permute.xlu0 %3882
    %3885 = vst.msk [vmem:[#allocation2 + $0x3] sm:$0x1] %vm3804, %v3883
    %v3886 = vld [vmem:[#allocation2] sm:$0xf]
    %v3887 = vld [vmem:[%s7] sm:$0xff]
    %v3888 = vld [vmem:[%s7 + $0x8] sm:$0xff]
    %v3889 = vld [vmem:[%s7 + $0x10] sm:$0xff]
    %v3890 = vld [vmem:[%s7 + $0x18] sm:$0xff]
    %v3891 = vld [vmem:[%s7 + $0x20] sm:$0xff]
    %v3892 = vld [vmem:[%s7 + $0x28] sm:$0xff]
    %v3893 = vld [vmem:[%s7 + $0x30] sm:$0xff]
    %v3894 = vld [vmem:[%s7 + $0x38] sm:$0xff]
    %v3895 = vld [vmem:[%s7 + $0x40] sm:$0xff]
    %v3896 = vld [vmem:[%s7 + $0x48] sm:$0xff]
    %v3897 = vld [vmem:[%s7 + $0x50] sm:$0xff]
    %v3898 = vld [vmem:[%s7 + $0x58] sm:$0xff]
    %v3899 = vld [vmem:[%s7 + $0x60] sm:$0xff]
    %v3900 = vld [vmem:[%s7 + $0x68] sm:$0xff]
    %v3901 = vld [vmem:[%s7 + $0x70] sm:$0xff]
    %v3902 = vld [vmem:[%s7 + $0x78] sm:$0xff]
    %v3903 = vld [vmem:[%s7 + $0x80] sm:$0xff]
    %v3904 = vld [vmem:[%s7 + $0x88] sm:$0xff]
    %v3905 = vld [vmem:[%s7 + $0x90] sm:$0xff]
    %v3906 = vld [vmem:[%s7 + $0x98] sm:$0xff]
    %v3907 = vld [vmem:[%s7 + $0xa0] sm:$0xff]
    %v3908 = vld [vmem:[%s7 + $0xa8] sm:$0xff]
    %v3909 = vld [vmem:[%s7 + $0xb0] sm:$0xff]
    %v3910 = vld [vmem:[%s7 + $0xb8] sm:$0xff]
    %v3911 = vld [vmem:[%s7 + $0xc0] sm:$0xff]
    %v3912 = vld [vmem:[%s7 + $0xc8] sm:$0xff]
    %v3913 = vld [vmem:[%s7 + $0xd0] sm:$0xff]
    %v3914 = vld [vmem:[%s7 + $0xd8] sm:$0xff]
    %v3915 = vld [vmem:[%s7 + $0xe0] sm:$0xff]
    %v3916 = vld [vmem:[%s7 + $0xe8] sm:$0xff]
    %v3917 = vld [vmem:[%s7 + $0xf0] sm:$0xff]
    %v3918 = vld [vmem:[%s7 + $0xf8] sm:$0xff]
    %v3919 = vld [vmem:[%s8] sm:$0x1]
    %v3921 = vlaneseq
    %v3922 = vshrl.u32 %v3921, 7
    %v3923 = vsub.s32 0, %v3922
    %v3924 = vrot.slane %v3919, %v3923
    %v3928 = vunpack.c.l.s4 1983009808
    %v3929 = vunpack.c.0.s8 %v3928
    %v3930 = vlaneseq
    %v3931 = vshrl.u32 %v3930, 7
    %v3932 = vsub.s32 %v3929, %v3931
    %v3933 = vrot.slane %v3886, %v3932
    %v3934 = vcombine.high %v3933, %v3933
    %3937 = vmatprep.subr.mxu0 0.0
    %3938 = vmatpush1.msra.mxu0 %v3887
    %3939 = vmatprep.subr.mxu0 0.0
    %3940 = vmatpush1.msra.mxu0 %v3888
    %3941 = vmatprep.subr.mxu0 0.0
    %3942 = vmatpush1.msra.mxu0 %v3889
    %3943 = vmatprep.subr.mxu0 0.0
    %3944 = vmatpush1.msra.mxu0 %v3890
    %3945 = vmatprep.subr.mxu0 0.0
    %3946 = vmatpush1.msra.mxu0 %v3891
    %3947 = vmatprep.subr.mxu0 0.0
    %3948 = vmatpush1.msra.mxu0 %v3892
    %3949 = vmatprep.subr.mxu0 0.0
    %3950 = vmatpush1.msra.mxu0 %v3893
    %3951 = vmatprep.subr.mxu0 0.0
    %3952 = vmatpush1.msra.mxu0 %v3894
    %3953 = vmatprep.subr.mxu0 0.0
    %3954 = vmatpush1.msra.mxu0 %v3895
    %3955 = vmatprep.subr.mxu0 0.0
    %3956 = vmatpush1.msra.mxu0 %v3896
    %3957 = vmatprep.subr.mxu0 0.0
    %3958 = vmatpush1.msra.mxu0 %v3897
    %3959 = vmatprep.subr.mxu0 0.0
    %3960 = vmatpush1.msra.mxu0 %v3898
    %3961 = vmatprep.subr.mxu0 0.0
    %3962 = vmatpush1.msra.mxu0 %v3899
    %3963 = vmatprep.subr.mxu0 0.0
    %3964 = vmatpush1.msra.mxu0 %v3900
    %3965 = vmatprep.subr.mxu0 0.0
    %3966 = vmatpush1.msra.mxu0 %v3901
    %3967 = vmatprep.subr.mxu0 0.0
    %3968 = vmatpush1.msra.mxu0 %v3902
    %3969 = vmatprep.subr.mxu0 0.0
    %3970 = vmatpush1.msra.mxu0 %v3903
    %3971 = vmatprep.subr.mxu0 0.0
    %3972 = vmatpush1.msra.mxu0 %v3904
    %3973 = vmatprep.subr.mxu0 0.0
    %3974 = vmatpush1.msra.mxu0 %v3905
    %3975 = vmatprep.subr.mxu0 0.0
    %3976 = vmatpush1.msra.mxu0 %v3906
    %3977 = vmatprep.subr.mxu0 0.0
    %3978 = vmatpush1.msra.mxu0 %v3907
    %3979 = vmatprep.subr.mxu0 0.0
    %3980 = vmatpush1.msra.mxu0 %v3908
    %3981 = vmatprep.subr.mxu0 0.0
    %3982 = vmatpush1.msra.mxu0 %v3909
    %3983 = vmatprep.subr.mxu0 0.0
    %3984 = vmatpush1.msra.mxu0 %v3910
    %3985 = vmatprep.subr.mxu0 0.0
    %3986 = vmatpush1.msra.mxu0 %v3911
    %3987 = vmatprep.subr.mxu0 0.0
    %3988 = vmatpush1.msra.mxu0 %v3912
    %3989 = vmatprep.subr.mxu0 0.0
    %3990 = vmatpush1.msra.mxu0 %v3913
    %3991 = vmatprep.subr.mxu0 0.0
    %3992 = vmatpush1.msra.mxu0 %v3914
    %3993 = vmatprep.subr.mxu0 0.0
    %3994 = vmatpush1.msra.mxu0 %v3915
    %3995 = vmatprep.subr.mxu0 0.0
    %3996 = vmatpush1.msra.mxu0 %v3916
    %3997 = vmatprep.subr.mxu0 0.0
    %3998 = vmatpush1.msra.mxu0 %v3917
    %3999 = vmatprep.subr.mxu0 0.0
    %4000 = vmatpush1.msra.mxu0 %v3918
    %4001 = vmatprep.mubr.f32.mxu0 %v3934
    %4002 = vmatmul.mubr.f32.gmra.mrb[0].mxu0 %v3933
    %v4003 = vpop.f32.mrb[0].mxu0
    %v4004 = vadd.f32 %v3924, %v4003
    %v4005 = vpop.f32.mrb[0].mxu0
    %4006 = vdwg.mxu0
    %vm4007 = vcmask 123904
    %4008 = vst.msk [vmem:[#allocation3] sm:$0x3] %vm4007, %v4004
    // Predicated region
    $region38: #{tpu_custom_call.1} parent=1 // pred_check
      _
    $region39: #{tpu_custom_call.1} parent=1 // pred_check_branch
      %4010 = sbr.rel (0) target = $region41
    $region40: #{tpu_custom_call.1} parent=1 // pred_region
      %s4012 = ssub.s32 32, 32
      %4013 = vsyncadd [#allocation4], %s4012
      %s4015 = sshll.u32 [#allocation3], 4
      %s4016 = int_to_ptr.vmem [resolvable:$true] %s4015
      %4018 = dma.vmem_to_hbm [thread:$0]  %s4016, 32, %s9, [#allocation4]
    $region41: #{tpu_custom_call.1} parent=1 // pred_fallthru
      _
    // Predicated region
    $region42: #{tpu_custom_call.1} parent=1 // pred_check
      _
    $region43: #{tpu_custom_call.1} parent=1 // pred_check_branch
      %4020 = sbr.rel (0) target = $region45
    $region44: #{tpu_custom_call.1} parent=1 // pred_region
      %4021 = dma.done [#allocation4], 32
    $region45: #{tpu_custom_call.1} parent=1 // pred_fallthru
      _
    %4022 = vsyncpa [#allocation4], 1

</llo_original>
